<compile_context>
chip_gen: v7x
topology: tpu7x:2x2x1
jax: 0.10.0
libtpu: 0.0.40
codegen_flags: <defaults>
</compile_context>

<pallas_src>
import jax
import jax.numpy as jnp
from jax.experimental import pallas as pl
from jax.experimental.pallas import tpu as pltpu


# -----------------------------------------------------------------------------
# VMEM byte budget / tile selection
# -----------------------------------------------------------------------------
_PALLAS_MIN_SLAB_BYTES = 1 << 20  # below this, plain jnp beats a pallas_call


def _round_up(x, q):
    return ((x + q - 1) // q) * q


def _budget_config():
    """(combined-input tile budget, vmem_limit_bytes, lane parallel groups) per chip."""
    try:
        vmem_bytes = pltpu.get_tpu_info().vmem_capacity_bytes
    except Exception:
        vmem_bytes = 64 * 1024 * 1024  # conservative fallback (v7x-sized)
    if vmem_bytes >= 128 * 1024 * 1024:
        # v5e / v6e: 128 MiB physical VMEM, single TensorCore.
        # 16 MiB combined input tile -> 32 MiB double-buffered, within the 64 MiB limit.
        return 16 * 1024 * 1024, 64 * 1024 * 1024, 1
    # v7x: 64 MiB physical / 32 MiB scoped VMEM, two TensorCores per chip.
    # 8 MiB combined input tile -> 16 MiB double-buffered.
    return 8 * 1024 * 1024, 32 * 1024 * 1024, 2


def _choose_tiles(M, N, per_elem_bytes, tile_budget_bytes):
    """Byte-budgeted (row_tile, lane_tile).

    Grows the lane tile first (lane-dense DMAs/stores), then the row tile, until the
    combined (output + target) tile reaches the budget.  row_tile is either the full M
    or a multiple of 8; lane_tile is either the full N or a multiple of 128, so every
    BlockSpec satisfies the (8,128) constraint.
    """
    max_elems = max(tile_budget_bytes // per_elem_bytes, 8 * 128)
    min_rows = M if M < 8 else 8
    lane_cap = max((max_elems // min_rows) // 128 * 128, 128)
    lane_tile = N if lane_cap >= N else lane_cap
    row_cap = max_elems // lane_tile
    if row_cap >= M or M <= 8:
        row_tile = M
    else:
        row_tile = max((row_cap // 8) * 8, 8)
    return row_tile, lane_tile


# -----------------------------------------------------------------------------
# Kernel: masked negative-BCE partial sums, tiled over (rows, lane_group, lane_step)
# -----------------------------------------------------------------------------
def _make_bce_kernel(row_tile, lane_tile, grid_ji, M, N,
                     needs_row_mask, needs_col_mask):
    """Build the kernel computing per-block partial sums of masked negative BCE."""

    def kernel(o_ref, t_ref, m_ref, psum_ref):
        ji = pl.program_id(2)  # innermost (reduction) lane axis

        @pl.when(ji == 0)
        def _():
            psum_ref[...] = jnp.zeros_like(psum_ref)

        # Inputs arrive in their native (possibly bf16) dtype; cast in-kernel.
        o = o_ref[...].astype(jnp.float32)
        t = t_ref[...].astype(jnp.float32)
        m = m_ref[...].astype(jnp.float32)  # (row_tile, 1)

        # PyTorch nn.BCELoss clamps the log terms at -100.  Accumulate the *negative*
        # BCE, t*(log_o - log_1mo) + log_1mo (algebraically identical, fewer VPU ops per
        # element); the sign is folded into the wrapper's final scalar scale.
        log_o = jnp.maximum(jnp.log(o), -100.0)
        log_1mo = jnp.maximum(jnp.log(1.0 - o), -100.0)
        nll = t * (log_o - log_1mo) + log_1mo
        # TODO(synk): for strictly-binary targets jnp.where(t > 0.5, log_o, log_1mo)
        # saves one more VPU op/elem; not applied so soft targets stay exact.

        if needs_col_mask:  # static: only when lane_tile does not divide N
            jo = pl.program_id(1)
            col0 = (jo * grid_ji + ji) * lane_tile
            col = col0 + jax.lax.broadcasted_iota(jnp.int32, nll.shape, 1)
            nll = jnp.where(col < N, nll, 0.0)

        # Reduce over lanes first (XLU), then apply the mask per row (M mults, not M*N).
        row_sum = jnp.sum(nll, axis=1, keepdims=True)  # (row_tile, 1)

        if needs_row_mask:  # static: only when row_tile does not divide M
            i = pl.program_id(0)
            row = i * row_tile + jax.lax.broadcasted_iota(jnp.int32, row_sum.shape, 0)
            valid = row < M
            row_sum = jnp.where(valid, row_sum, 0.0)
            m = jnp.where(valid, m, 0.0)

        psum_ref[...] += jnp.sum(row_sum * m)

    return kernel


def _masked_bce_sum_pallas(out2d, tgt2d, mask_col):
    """Padding-masked BCE sum over one scale's (M, N) slab via a tiled Pallas kernel."""
    M, N = out2d.shape
    tile_budget, vmem_limit, lane_groups = _budget_config()
    per_elem = out2d.dtype.itemsize + tgt2d.dtype.itemsize
    row_tile, lane_tile = _choose_tiles(M, N, per_elem, tile_budget)

    grid_m = pl.cdiv(M, row_tile)
    grid_n = pl.cdiv(N, lane_tile)

    # v7x: when the row axis degenerates to a single block (typical small B*T'),
    # split the lane axis into two independent "parallel" accumulation groups so the
    # second TensorCore has work.  Neutral on single-TC v5e/v6e (lane_groups == 1).
    grid_jo = 1
    if lane_groups >= 2 and grid_m == 1:
        if grid_n == 1 and N >= 256:
            lane_tile = _round_up((N + 1) // 2, 128)
            grid_n = pl.cdiv(N, lane_tile)
        if grid_n % 2 == 0:
            grid_jo = 2
    grid_ji = grid_n // grid_jo

    needs_row_mask = (M % row_tile) != 0
    needs_col_mask = (N % lane_tile) != 0

    kernel = _make_bce_kernel(row_tile, lane_tile, grid_ji, M, N,
                              needs_row_mask, needs_col_mask)

    psum_bytes = grid_m * grid_jo * 8 * 128 * 4
    cost = pl.CostEstimate(
        flops=8 * M * N,
        transcendentals=2 * M * N,
        bytes_accessed=M * N * per_elem + M * mask_col.dtype.itemsize + psum_bytes)

    psum = pl.pallas_call(
        kernel,
        out_shape=jax.ShapeDtypeStruct((grid_m, grid_jo, 8, 128), jnp.float32),
        grid_spec=pltpu.PrefetchScalarGridSpec(
            num_scalar_prefetch=0,
            grid=(grid_m, grid_jo, grid_ji),
            in_specs=[
                pl.BlockSpec((row_tile, lane_tile),
                             lambda i, jo, ji: (i, jo * grid_ji + ji)),
                pl.BlockSpec((row_tile, lane_tile),
                             lambda i, jo, ji: (i, jo * grid_ji + ji)),
                # Mask rides the same pipeline, tiled on the row axis only.
                pl.BlockSpec((row_tile, 1), lambda i, jo, ji: (i, 0)),
            ],
            # Lane-dense (8,128) partial-sum blocks; the block index is constant only
            # across the innermost ("arbitrary") axis -> VMEM-resident accumulator.
            out_specs=pl.BlockSpec((1, 1, 8, 128), lambda i, jo, ji: (i, jo, 0, 0)),
        ),
        compiler_params=pltpu.CompilerParams(
            dimension_semantics=("parallel", "parallel", "arbitrary"),
            vmem_limit_bytes=vmem_limit,
        ),
        cost_estimate=cost,
    )(out2d, tgt2d, mask_col)

    # Every element of an (8,128) block holds the same partial sum of the negative BCE.
    return -jnp.sum(psum[:, :, 0, 0])


def _masked_bce_sum_jnp(out2d, tgt2d, mask_col):
    """Plain-XLA path for tiny slabs where per-call Pallas overhead dominates."""
    o = out2d.astype(jnp.float32)
    t = tgt2d.astype(jnp.float32)
    log_o = jnp.maximum(jnp.log(o), -100.0)
    log_1mo = jnp.maximum(jnp.log(1.0 - o), -100.0)
    nll = t * (log_o - log_1mo) + log_1mo
    row_sum = jnp.sum(nll, axis=1, keepdims=True)
    return -jnp.sum(row_sum * mask_col.astype(jnp.float32))


# -----------------------------------------------------------------------------
# Forward pass
# -----------------------------------------------------------------------------
def scale_wise_loss(outputs, targets, padding_masks, scale_loss_weights, scales,
                    loss_calculation_scales=None, scale_loss_flag=True):
    """JAX/Pallas equivalent of ScaleWiseLoss.forward.

    outputs / targets : lists of (B, T', C, H, W) arrays (T' = T-1), any float dtype
    padding_masks     : (B, T) float
    scale_loss_weights: (num_scales,) float32
    """
    loss_calculation_scales = (loss_calculation_scales
                               if loss_calculation_scales else scales)
    scale_loss_dict = {}
    total_loss = jnp.float32(0.0)

    pad = padding_masks[:, 1:]  # (B, T')
    B, Tp = pad.shape
    mask_col = pad.reshape(B * Tp, 1)

    # mask_sum is identical for every scale -> compute it exactly once (tiny reduction).
    # (mask_sum == 0 divides by zero, matching the PyTorch reference semantics.)
    mask_sum = jnp.sum(pad.astype(jnp.float32))

    for scale_idx, scale in enumerate(scales):
        if scale not in loss_calculation_scales:
            continue
        output = outputs[scale_idx]
        target = targets[scale_idx]
        assert output.shape == target.shape
        b, tp, C, H, W = output.shape
        assert (b, tp) == (B, Tp)

        # Row-major reshape is free (no HBM copy); keep native dtypes.  Callers should
        # feed binary targets as bf16 *upstream* rather than casting here (a wrapper
        # cast would add an extra full HBM pass).
        out2d = output.reshape(B * Tp, C * H * W)
        tgt2d = target.reshape(B * Tp, C * H * W)

        slab_bytes = out2d.size * (out2d.dtype.itemsize + tgt2d.dtype.itemsize)
        if slab_bytes >= _PALLAS_MIN_SLAB_BYTES:
            bce_sum = _masked_bce_sum_pallas(out2d, tgt2d, mask_col)
        else:
            bce_sum = _masked_bce_sum_jnp(out2d, tgt2d, mask_col)

        scale_loss = bce_sum / float(H * W) / mask_sum
        weighted = (scale_loss_weights[scale_idx] * scale_loss
                    if scale_loss_flag else scale_loss)
        scale_loss_dict[scale] = weighted
        total_loss = total_loss + weighted

    return total_loss, scale_loss_dict


# -----------------------------------------------------------------------------
# Pure-JAX reference (matches the PyTorch forward) for validation
# -----------------------------------------------------------------------------
def _reference(outputs, targets, padding_masks, weights, scales):
    pad = padding_masks[:, 1:].astype(jnp.float32)
    total = jnp.float32(0.0)
    per_scale = {}
    for i, s in enumerate(scales):
        o = outputs[i].astype(jnp.float32)
        t = targets[i].astype(jnp.float32)
        log_o = jnp.maximum(jnp.log(o), -100.0)
        log_1mo = jnp.maximum(jnp.log(1.0 - o), -100.0)
        bce = -(t * log_o + (1.0 - t) * log_1mo)
        m = pad[:, :, None, None, None]
        loss = (bce * m).sum() / float(o.shape[3] * o.shape[4]) / m.sum()
        w = weights[i] * loss
        per_scale[s] = w
        total = total + w
    return total, per_scale


if __name__ == "__main__":
    key = jax.random.PRNGKey(0)
    scales = [0, 1, 2]
    B, T = 2, 8
    Tp = T - 1  # outputs/targets carry T-1 timesteps (mask uses padding_masks[:, 1:])
    spatial = {0: 128, 1: 32, 2: 16}
    channels = {0: 2, 1: 1, 2: 1}
    # Scale 0: M = 14, N = 2*128*128 = 32768 (~1.75 MiB slab) -> exercises the Pallas
    # path; scales 1/2 are tiny and route through the plain-jnp path.

    # scale_loss_weights: learn_weights=False / no custom weights -> ones
    scale_loss_weights = jnp.ones((len(scales),), dtype=jnp.float32)

    outputs, targets = [], []
    for s in scales:
        H = W = spatial[s]
        C = channels[s]
        key, k1, k2 = jax.random.split(key, 3)
        # Model outputs are probabilities in (0, 1) (BCELoss input), kept in bf16 to
        # exercise the native-dtype / in-kernel-cast path; binary targets are produced
        # as bf16 (exact for 0/1) so the target HBM stream is 2 B/elem.
        out = jax.nn.sigmoid(
            jax.random.normal(k1, (B, Tp, C, H, W), jnp.float32)).astype(jnp.bfloat16)
        tgt = (jax.random.uniform(k2, (B, Tp, C, H, W)) > 0.5).astype(jnp.bfloat16)
        outputs.append(out)
        targets.append(tgt)

    key, km = jax.random.split(key)
    padding_masks = (jax.random.uniform(km, (B, T)) > 0.3).astype(jnp.float32)
    # guarantee mask_sum > 0
    padding_masks = padding_masks.at[:, 1].set(1.0)

    total_loss, scale_loss_dict = scale_wise_loss(
        outputs, targets, padding_masks, scale_loss_weights, scales)
    total_loss = jax.block_until_ready(total_loss)

    ref_total, ref_dict = _reference(outputs, targets, padding_masks,
                                     scale_loss_weights, scales)
    assert jnp.allclose(total_loss, ref_total, rtol=5e-5, atol=1e-5), (
        total_loss, ref_total)
    for s in scales:
        assert jnp.allclose(scale_loss_dict[s], ref_dict[s], rtol=5e-5, atol=1e-5), (
            s, scale_loss_dict[s], ref_dict[s])

    print("KERNEL_OK")
</pallas_src>

<mosaic_0001>
module attributes {stable_mosaic.version = 11 : i64} {
  func.func @kernel(%arg0: i32, %arg1: i32, %arg2: i32, %arg3: memref<14x16384xbf16, #tpu.memory_space<vmem>>, %arg4: memref<14x16384xbf16, #tpu.memory_space<vmem>>, %arg5: memref<14x1xf32, #tpu.memory_space<vmem>>, %arg6: memref<1x1x8x128xf32, #tpu.memory_space<vmem>>) attributes {dimension_semantics = [#tpu.dimension_semantics<parallel>, #tpu.dimension_semantics<parallel>, #tpu.dimension_semantics<arbitrary>], iteration_bounds = array<i64: 1, 2, 1>, scalar_prefetch = 0 : i64, scratch_operands = 0 : i64, tpu.core_type = #tpu.core_type<tc>, window_params = [{transform_indices = @transform_0, window_bounds = array<i64: 14, 16384>}, {transform_indices = @transform_1, window_bounds = array<i64: 14, 16384>}, {transform_indices = @transform_2, window_bounds = array<i64: 14, 1>}, {transform_indices = @transform_3, window_bounds = array<i64: 1, 1, 8, 128>}]} {
    %c0_i32 = arith.constant 0 : i32
    %0 = arith.cmpi eq, %arg2, %c0_i32 : i32
    %1 = arith.extui %0 : i1 to i32
    %c0_i32_0 = arith.constant 0 : i32
    %2 = arith.cmpi ne, %1, %c0_i32_0 : i32
    scf.if %2 {
      %cst_18 = arith.constant 0.000000e+00 : f32
      %30 = vector.broadcast %cst_18 : f32 to vector<1x1x8x128xf32>
      %c0_19 = arith.constant 0 : index
      %c0_20 = arith.constant 0 : index
      %c0_21 = arith.constant 0 : index
      %c0_22 = arith.constant 0 : index
      %31 = vector.load %arg6[%c0_19, %c0_20, %c0_21, %c0_22] : memref<1x1x8x128xf32, #tpu.memory_space<vmem>>, vector<1x1x8x128xf32>
      tpu.vector_store %arg6[%c0_19, %c0_20, %c0_21, %c0_22], %30 {strides = array<i32>} : memref<1x1x8x128xf32, #tpu.memory_space<vmem>>, vector<1x1x8x128xf32>,
    } else {
    }
    %c0 = arith.constant 0 : index
    %c0_1 = arith.constant 0 : index
    %3 = vector.load %arg3[%c0, %c0_1] : memref<14x16384xbf16, #tpu.memory_space<vmem>>, vector<14x16384xbf16>
    %4 = arith.extf %3 : vector<14x16384xbf16> to vector<14x16384xf32>
    %c0_2 = arith.constant 0 : index
    %c0_3 = arith.constant 0 : index
    %5 = vector.load %arg4[%c0_2, %c0_3] : memref<14x16384xbf16, #tpu.memory_space<vmem>>, vector<14x16384xbf16>
    %6 = arith.extf %5 : vector<14x16384xbf16> to vector<14x16384xf32>
    %c0_4 = arith.constant 0 : index
    %c0_5 = arith.constant 0 : index
    %7 = vector.load %arg5[%c0_4, %c0_5] : memref<14x1xf32, #tpu.memory_space<vmem>>, vector<14x1xf32>
    %8 = math.log %4 : vector<14x16384xf32>
    %cst = arith.constant -1.000000e+02 : f32
    %9 = vector.broadcast %cst : f32 to vector<14x16384xf32>
    %10 = arith.maximumf %8, %9 : vector<14x16384xf32>
    %cst_6 = arith.constant 1.000000e+00 : f32
    %11 = vector.broadcast %cst_6 : f32 to vector<14x16384xf32>
    %12 = arith.subf %11, %4 : vector<14x16384xf32>
    %13 = math.log %12 : vector<14x16384xf32>
    %cst_7 = arith.constant -1.000000e+02 : f32
    %14 = vector.broadcast %cst_7 : f32 to vector<14x16384xf32>
    %15 = arith.maximumf %13, %14 : vector<14x16384xf32>
    %16 = arith.subf %10, %15 : vector<14x16384xf32>
    %17 = arith.mulf %6, %16 : vector<14x16384xf32>
    %18 = arith.addf %17, %15 : vector<14x16384xf32>
    %cst_8 = arith.constant dense<0.000000e+00> : vector<14xf32>
    %19 = vector.multi_reduction <add>, %18, %cst_8 [1] : vector<14x16384xf32> to vector<14xf32>
    %20 = vector.shape_cast %19 : vector<14xf32> to vector<14x1xf32>
    %c0_9 = arith.constant 0 : index
    %c0_10 = arith.constant 0 : index
    %c0_11 = arith.constant 0 : index
    %c0_12 = arith.constant 0 : index
    %21 = vector.load %arg6[%c0_9, %c0_10, %c0_11, %c0_12] : memref<1x1x8x128xf32, #tpu.memory_space<vmem>>, vector<1x1x8x128xf32>
    %22 = arith.mulf %20, %7 : vector<14x1xf32>
    %23 = vector.shape_cast %22 : vector<14x1xf32> to vector<1x14x1xf32>
    %cst_13 = arith.constant dense<0.000000e+00> : vector<1xf32>
    %24 = vector.multi_reduction <add>, %23, %cst_13 [1, 2] : vector<1x14x1xf32> to vector<1xf32>
    %25 = vector.shape_cast %24 : vector<1xf32> to vector<1x1x1xf32>
    %26 = vector.extract %25[0, 0, 0] : f32 from vector<1x1x1xf32>
    %27 = vector.broadcast %26 : f32 to vector<1x1x8x128xf32>
    %28 = arith.addf %21, %27 : vector<1x1x8x128xf32>
    %c0_14 = arith.constant 0 : index
    %c0_15 = arith.constant 0 : index
    %c0_16 = arith.constant 0 : index
    %c0_17 = arith.constant 0 : index
    %29 = vector.load %arg6[%c0_14, %c0_15, %c0_16, %c0_17] : memref<1x1x8x128xf32, #tpu.memory_space<vmem>>, vector<1x1x8x128xf32>
    tpu.vector_store %arg6[%c0_14, %c0_15, %c0_16, %c0_17], %28 {strides = array<i32>} : memref<1x1x8x128xf32, #tpu.memory_space<vmem>>, vector<1x1x8x128xf32>,
    return
  }
  func.func @transform_0(%arg0: i32, %arg1: i32, %arg2: i32) -> (i32, i32) {
    %c1_i32 = arith.constant 1 : i32
    %0 = arith.muli %arg1, %c1_i32 : i32
    %1 = arith.addi %0, %arg2 : i32
    %c0_i32 = arith.constant 0 : i32
    return %arg0, %1 : i32, i32
  }
  func.func @transform_1(%arg0: i32, %arg1: i32, %arg2: i32) -> (i32, i32) {
    %c1_i32 = arith.constant 1 : i32
    %0 = arith.muli %arg1, %c1_i32 : i32
    %1 = arith.addi %0, %arg2 : i32
    %c0_i32 = arith.constant 0 : i32
    return %arg0, %1 : i32, i32
  }
  func.func @transform_2(%arg0: i32, %arg1: i32, %arg2: i32) -> (i32, i32) {
    %c0_i32 = arith.constant 0 : i32
    %c0_i32_0 = arith.constant 0 : i32
    return %arg0, %c0_i32 : i32, i32
  }
  func.func @transform_3(%arg0: i32, %arg1: i32, %arg2: i32) -> (i32, i32, i32, i32) {
    %c0_i32 = arith.constant 0 : i32
    %c0_i32_0 = arith.constant 0 : i32
    %c0_i32_1 = arith.constant 0 : i32
    return %arg0, %arg1, %c0_i32, %c0_i32_0 : i32, i32, i32, i32
  }
}

</mosaic_0001>

<llo_original>
// kernel: tpu_custom_call.1
$region0: #{tpu_custom_call.1}
  #allocation0 [shape = 'u32[]', space=smem, size = 0x4, offset = 0x4, fixed_abs, tag = 'smem constant byte address 0x4 - core index']
  #allocation1 [shape = 'u32[144,128]{1,0:T(1,128)}', space=vmem, size = 0x12000, scoped, tag = 'internal scratch']
  %s0 = inlined_call_operand.hbm [shape: bf16[14,32768], index: 0, kind: input, shape index: {}]
  %s1 = inlined_call_operand.hbm [shape: bf16[14,32768], index: 1, kind: input, shape index: {}]
  %s2 = inlined_call_operand.vmem [shape: f32[14,1], index: 2, kind: input, shape index: {}]
  %s3 = inlined_call_operand.hbm [shape: f32[1,2,8,128], index: 3, kind: output, shape index: {}]
  %s4 = sld [smem:[#allocation0]]
  $region57: #{tpu_custom_call.1} parent=0
    _
  %s6 = ssub.s32 1, %s4
  %s7 = scalar_select 0, %s6, %s4
  $region1: #{tpu_custom_call.1} parent=0
    #allocation2 [shape = 'u8[1048576]{0}', space=vmem, size = 0x100000, scoped, tag = 'input window, operand 0']
    #allocation3 [shape = 's32[2]{0}', space=sflag, size = 0x8, scoped, tag = 'scoped memory for tpu_custom_call.1']
    #allocation4 [shape = 's32[2]{0}', space=sflag, size = 0x8, scoped, tag = 'scoped memory for tpu_custom_call.1']
    #allocation5 [shape = 'u8[1048576]{0}', space=vmem, size = 0x100000, scoped, tag = 'input window, operand 1']
    #allocation6 [shape = 's32[2]{0}', space=sflag, size = 0x8, scoped, tag = 'scoped memory for tpu_custom_call.1']
    #allocation7 [shape = 'u8[8192]{0}', space=vmem, size = 0x2000, scoped, tag = 'output window, operand 0']
    %8 = vsyncpa [#allocation3], 0
    %s9 = scalar_lea.sflag [#allocation3], 1
    %10 = vsyncpa %s9, 0
    %11 = vsyncpa [#allocation6], 0
    %s12 = scalar_lea.sflag [#allocation6], 1
    %13 = vsyncpa %s12, 0
    %14 = vsyncpa [#allocation4], 0
    %s15 = scalar_lea.sflag [#allocation4], 1
    %16 = vsyncpa %s15, 0
    loop: start=0, step=1, limit=4
    $region2: #{tpu_custom_call.1} parent=1 // loop_pre_header
      _
    $region3: #{tpu_custom_call.1} parent=1 // loop_header
      %s18 = sphi 0, %s22
      %p19 = scmp.ge.s32.totalorder %s18, 4
      %s25 = sphi 0, %s44
      %s26 = sphi 0, %s40
      %s27 = sphi 0, %s36
      %s28 = sphi 0, %s25
      %s29 = sphi 0, %s26
      %s30 = sphi 0, %s27
      %s31 = sphi 0, %s28
      %s32 = sphi 0, %s29
      %s33 = sphi 0, %s30
      %s51 = sphi 0, %s53
      %s54 = sphi 0, %s51
      %s55 = sphi 0, %s54
      %s71 = sphi 0, %s55
      %s81 = sphi 0, %s83
      %s84 = sphi 0, %s81
      %s85 = sphi 0, %s84
      %s101 = sphi 0, %s85
      %s107 = sphi 0, %s109
      %s110 = sphi 0, %s107
      %s111 = sphi 0, %s110
      %s127 = sphi 0, %s111
      %s135 = sphi 0, %s137
      %s138 = sphi 0, %s135
      %s139 = sphi 0, %s138
      %s155 = sphi 0, %s139
    $region4: #{tpu_custom_call.1} parent=1 // loop_header_branch
      %21 = sbr.rel (%p19) target = $region8
    $region5: #{tpu_custom_call.1} parent=1 // loop_body
      %s23 = ssub.s32 %s18, 1
      %s24 = ssub.s32 %s18, 2
      %s34 = sadd.s32 1, %s27
      %p35 = scmp.ge.s32.totalorder %s34, 1
      %s36 = scalar_select %p35, 0, %s34
      %s37 = sadd.s32 1, %s26
      %s38 = scalar_select %p35, %s37, %s26
      %p39 = scmp.ge.s32.totalorder %s38, 2
      %s40 = scalar_select %p39, 0, %s38
      %s41 = sadd.s32 1, %s25
      %s42 = scalar_select %p39, %s41, %s25
      %p43 = scmp.ge.s32.totalorder %s42, 1
      %s44 = scalar_select %p43, 0, %s42
      %s45 = sadd.s32 %s26, %s27
      %s46 = sadd.s32 %s40, %s36
      %s47 = ssub.s32 %s25, %s44
      %s48 = ssub.s32 %s45, %s46
      %s49 = sor.u32 %s47, %s48
      %p50 = scmp.eq.s32.totalorder %s49, 0
      %s52 = sadd.s32 %s51, 1
      %s53 = scalar_select %p50, %s51, %s52
      %p56 = pneg %p50
      %p57 = scmp.eq.s32.totalorder %s18, 1
      %p58 = por %p56, %p57
      %p59 = scmp.ne.s32.totalorder %s51, %s54
      %p60 = scmp.eq.s32.totalorder %s18, 0
      %p61 = por %p59, %p60
      %p62 = scmp.ne.s32.totalorder %s51, %s54
      %p63 = scmp.eq.s32.totalorder %s23, 1
      %p64 = por %p62, %p63
      %p65 = scmp.ne.s32.totalorder %s54, %s55
      %p66 = scmp.eq.s32.totalorder %s23, 0
      %p67 = por %p65, %p66
      %p68 = scmp.ne.s32.totalorder %s54, %s55
      %p69 = scmp.eq.s32.totalorder %s24, 1
      %p70 = por %p68, %p69
      %p72 = scmp.ne.s32.totalorder %s55, %s71
      %p73 = scmp.eq.s32.totalorder %s24, 0
      %p74 = por %p72, %p73
      %s75 = sadd.s32 %s26, %s27
      %s76 = sadd.s32 %s40, %s36
      %s77 = ssub.s32 %s25, %s44
      %s78 = ssub.s32 %s75, %s76
      %s79 = sor.u32 %s77, %s78
      %p80 = scmp.eq.s32.totalorder %s79, 0
      %s82 = sadd.s32 %s81, 1
      %s83 = scalar_select %p80, %s81, %s82
      %p86 = pneg %p80
      %p87 = scmp.eq.s32.totalorder %s18, 1
      %p88 = por %p86, %p87
      %p89 = scmp.ne.s32.totalorder %s81, %s84
      %p90 = scmp.eq.s32.totalorder %s18, 0
      %p91 = por %p89, %p90
      %p92 = scmp.ne.s32.totalorder %s81, %s84
      %p93 = scmp.eq.s32.totalorder %s23, 1
      %p94 = por %p92, %p93
      %p95 = scmp.ne.s32.totalorder %s84, %s85
      %p96 = scmp.eq.s32.totalorder %s23, 0
      %p97 = por %p95, %p96
      %p98 = scmp.ne.s32.totalorder %s84, %s85
      %p99 = scmp.eq.s32.totalorder %s24, 1
      %p100 = por %p98, %p99
      %p102 = scmp.ne.s32.totalorder %s85, %s101
      %p103 = scmp.eq.s32.totalorder %s24, 0
      %p104 = por %p102, %p103
      %s105 = ssub.s32 %s25, %s44
      %p106 = scmp.eq.s32.totalorder %s105, 0
      %s108 = sadd.s32 %s107, 1
      %s109 = scalar_select %p106, %s107, %s108
      %p112 = pneg %p106
      %p113 = scmp.eq.s32.totalorder %s18, 1
      %p114 = por %p112, %p113
      %p115 = scmp.ne.s32.totalorder %s107, %s110
      %p116 = scmp.eq.s32.totalorder %s18, 0
      %p117 = por %p115, %p116
      %p118 = scmp.ne.s32.totalorder %s107, %s110
      %p119 = scmp.eq.s32.totalorder %s23, 1
      %p120 = por %p118, %p119
      %p121 = scmp.ne.s32.totalorder %s110, %s111
      %p122 = scmp.eq.s32.totalorder %s23, 0
      %p123 = por %p121, %p122
      %p124 = scmp.ne.s32.totalorder %s110, %s111
      %p125 = scmp.eq.s32.totalorder %s24, 1
      %p126 = por %p124, %p125
      %p128 = scmp.ne.s32.totalorder %s111, %s127
      %p129 = scmp.eq.s32.totalorder %s24, 0
      %p130 = por %p128, %p129
      %s131 = ssub.s32 %s25, %s44
      %s132 = ssub.s32 %s26, %s40
      %s133 = sor.u32 %s131, %s132
      %p134 = scmp.eq.s32.totalorder %s133, 0
      %s136 = sadd.s32 %s135, 1
      %s137 = scalar_select %p134, %s135, %s136
      %p140 = pneg %p134
      %p141 = scmp.eq.s32.totalorder %s18, 1
      %p142 = por %p140, %p141
      %p143 = scmp.ne.s32.totalorder %s135, %s138
      %p144 = scmp.eq.s32.totalorder %s18, 0
      %p145 = por %p143, %p144
      %p146 = scmp.ne.s32.totalorder %s135, %s138
      %p147 = scmp.eq.s32.totalorder %s23, 1
      %p148 = por %p146, %p147
      %p149 = scmp.ne.s32.totalorder %s138, %s139
      %p150 = scmp.eq.s32.totalorder %s23, 0
      %p151 = por %p149, %p150
      %p152 = scmp.ne.s32.totalorder %s138, %s139
      %p153 = scmp.eq.s32.totalorder %s24, 1
      %p154 = por %p152, %p153
      %p156 = scmp.ne.s32.totalorder %s139, %s155
      %p157 = scmp.eq.s32.totalorder %s24, 0
      %p158 = por %p156, %p157
      %p159 = scmp.le.s32.totalorder 1, %s18
      %p160 = scmp.lt.s32.totalorder %s18, 3
      %p161 = pnand %p159, %p160
      %p162 = pneg %p161
      // Predicated region
      $region9: #{tpu_custom_call.1} parent=5 // pred_check
        _
      $region10: #{tpu_custom_call.1} parent=5 // pred_check_branch
        %164 = sbr.rel (%p161) target = $region12
      $region11: #{tpu_custom_call.1} parent=5 // pred_region
        %s165 = ssub.s32 %s18, 1
        // Predicated region
        $region13: #{tpu_custom_call.1} parent=11 // pred_check
          %p166 = pneg %p123
        $region14: #{tpu_custom_call.1} parent=11 // pred_check_branch
          %168 = sbr.rel (%p166) target = $region16
        $region15: #{tpu_custom_call.1} parent=11 // pred_region
          %s169 = smul.u32 2, %s28
          %p170 = scmp.lt.s32.totalorder %s169, 1
          %s171 = scalar_select %p170, %s169, 1
          %s172 = smul.addr %s171, 8
          %s173 = scalar_lea.vmem %s2, %s172
          %s174 = smul.u32 2, %s28
        $region16: #{tpu_custom_call.1} parent=11 // pred_fallthru
          _
      $region12: #{tpu_custom_call.1} parent=5 // pred_fallthru
        _
      %p175 = scmp.lt.s32.totalorder %s18, 2
      // Predicated region
      $region17: #{tpu_custom_call.1} parent=5 // pred_check
        %p176 = pneg %p175
      $region18: #{tpu_custom_call.1} parent=5 // pred_check_branch
        %178 = sbr.rel (%p176) target = $region20
      $region19: #{tpu_custom_call.1} parent=5 // pred_region
        // Predicated region
        $region21: #{tpu_custom_call.1} parent=19 // pred_check
          %p179 = pneg %p61
        $region22: #{tpu_custom_call.1} parent=19 // pred_check_branch
          %181 = sbr.rel (%p179) target = $region24
        $region23: #{tpu_custom_call.1} parent=19 // pred_region
          %s182 = sand.u32 %s51, 1
          %s183 = scalar_lea.sflag [#allocation3], %s182
          %s184 = sand.u32 %s51, 1
          %s185 = smul.addr %s184, 1024
          %s186 = scalar_lea.vmem [#allocation2], %s185
          %s187 = sadd.s32 %s26, %s27
          %s188 = smul.u32 2, %s25
          %s189 = smul.u32 128, %s187
          %s191 = ssub.s32 16384, 16384
          %192 = vsyncadd %s183, %s191
          %s193 = smul.addr %s188, 256
          %s194 = sadd.s32 %s189, %s193
          %s195 = smul.addr %s194, 64
          %s196 = scalar_lea.hbm %s0, %s195
          %s197 = sshll.u32 %s186, 4
          %s198 = int_to_ptr.vmem [resolvable:$true] %s197
          %203 = dma.hbm_to_vmem [thread:$0]  %s196, 16384, %s198, %s183, 16384, 8192, 512
        $region24: #{tpu_custom_call.1} parent=19 // pred_fallthru
          _
        // Predicated region
        $region25: #{tpu_custom_call.1} parent=19 // pred_check
          %p204 = pneg %p91
        $region26: #{tpu_custom_call.1} parent=19 // pred_check_branch
          %206 = sbr.rel (%p204) target = $region28
        $region27: #{tpu_custom_call.1} parent=19 // pred_region
          %s207 = sand.u32 %s81, 1
          %s208 = scalar_lea.sflag [#allocation6], %s207
          %s209 = sand.u32 %s81, 1
          %s210 = smul.addr %s209, 1024
          %s211 = scalar_lea.vmem [#allocation5], %s210
          %s212 = sadd.s32 %s26, %s27
          %s213 = smul.u32 2, %s25
          %s214 = smul.u32 128, %s212
          %s216 = ssub.s32 16384, 16384
          %217 = vsyncadd %s208, %s216
          %s218 = smul.addr %s213, 256
          %s219 = sadd.s32 %s214, %s218
          %s220 = smul.addr %s219, 64
          %s221 = scalar_lea.hbm %s1, %s220
          %s222 = sshll.u32 %s211, 4
          %s223 = int_to_ptr.vmem [resolvable:$true] %s222
          %228 = dma.hbm_to_vmem [thread:$0]  %s221, 16384, %s223, %s208, 16384, 8192, 512
        $region28: #{tpu_custom_call.1} parent=19 // pred_fallthru
          _
      $region20: #{tpu_custom_call.1} parent=5 // pred_fallthru
        _
      %p229 = scmp.le.s32.totalorder 1, %s18
      %p230 = scmp.lt.s32.totalorder %s18, 3
      %p231 = pnand %p229, %p230
      %p232 = pneg %p231
      // Predicated region
      $region29: #{tpu_custom_call.1} parent=5 // pred_check
        _
      $region30: #{tpu_custom_call.1} parent=5 // pred_check_branch
        %234 = sbr.rel (%p231) target = $region32
      $region31: #{tpu_custom_call.1} parent=5 // pred_region
        %s235 = ssub.s32 %s18, 1
        %s236 = sand.u32 %s54, 1
        %s237 = scalar_lea.sflag [#allocation3], %s236
        %s238 = sand.u32 %s54, 1
        %s239 = smul.addr %s238, 1024
        %s240 = scalar_lea.vmem [#allocation2], %s239
        // Predicated region
        $region33: #{tpu_custom_call.1} parent=31 // pred_check
          %p241 = pneg %p67
        $region34: #{tpu_custom_call.1} parent=31 // pred_check_branch
          %243 = sbr.rel (%p241) target = $region36
        $region35: #{tpu_custom_call.1} parent=31 // pred_region
          %244 = dma.done %s237, 16384
        $region36: #{tpu_custom_call.1} parent=31 // pred_fallthru
          _
        %s245 = sand.u32 %s84, 1
        %s246 = scalar_lea.sflag [#allocation6], %s245
        %s247 = sand.u32 %s84, 1
        %s248 = smul.addr %s247, 1024
        %s249 = scalar_lea.vmem [#allocation5], %s248
        // Predicated region
        $region37: #{tpu_custom_call.1} parent=31 // pred_check
          %p250 = pneg %p97
        $region38: #{tpu_custom_call.1} parent=31 // pred_check_branch
          %252 = sbr.rel (%p250) target = $region40
        $region39: #{tpu_custom_call.1} parent=31 // pred_region
          %253 = dma.done %s246, 16384
        $region40: #{tpu_custom_call.1} parent=31 // pred_fallthru
          _
        %s254 = sand.u32 %s54, 1
        %s255 = scalar_lea.sflag [#allocation3], %s254
        %s256 = sand.u32 %s54, 1
        %s257 = smul.addr %s256, 1024
        %s258 = scalar_lea.vmem [#allocation2], %s257
        %p259 = pneg %p67
        %p260 = pneg %p64
        %s261 = sand.u32 %s84, 1
        %s262 = scalar_lea.sflag [#allocation6], %s261
        %s263 = sand.u32 %s84, 1
        %s264 = smul.addr %s263, 1024
        %s265 = scalar_lea.vmem [#allocation5], %s264
        %p266 = pneg %p97
        %p267 = pneg %p94
        %s268 = smul.u32 2, %s28
        %p269 = scmp.lt.s32.totalorder %s268, 1
        %s270 = scalar_select %p269, %s268, 1
        %s271 = smul.addr %s270, 8
        %s272 = scalar_lea.vmem %s2, %s271
        %p273 = pneg %p123
        %p274 = pneg %p120
        %p275 = pneg %p151
        %p276 = pneg %p148
        %s277 = sand.u32 %s138, 1
        %s278 = scalar_lea.sflag [#allocation4], %s277
        %s279 = sand.u32 %s138, 1
        %s280 = smul.addr %s279, 8
        %s281 = scalar_lea.vmem [#allocation7], %s280
        %s282 = sadd.s32 %s29, %s30
        %s283 = smul.u32 2, %s28
        %s284 = smul.u32 128, %s282
        %s285 = sadd.s32 %s29, %s30
        %s286 = smul.u32 2, %s28
        %s287 = smul.u32 128, %s285
        %s288 = smul.u32 2, %s28
        %p289 = scmp.lt.s32.totalorder %s288, 1
        %s290 = scalar_select %p289, %s288, 1
        %s291 = smul.addr %s290, 8
        %s292 = scalar_lea.vmem %s2, %s291
        %s293 = smul.u32 2, %s28
        %p294 = scmp.eq.s32.totalorder %s30, 0
        // Predicated region
        $region41: #{tpu_custom_call.1} parent=31 // pred_check
          %p295 = pneg %p294
        $region42: #{tpu_custom_call.1} parent=31 // pred_check_branch
          %297 = sbr.rel (%p295) target = $region44
        $region43: #{tpu_custom_call.1} parent=31 // pred_region
          %298 = vst [vmem:[%s281] sm:$0xff] 0.0
        $region44: #{tpu_custom_call.1} parent=31 // pred_fallthru
          _
        %v299 = vld [vmem:[%s240] sm:$0xff]
        %v300 = vld [vmem:[%s240 + $0x8] sm:$0xff]
        %v301 = vld [vmem:[%s240 + $0x10] sm:$0xff]
        %v302 = vld [vmem:[%s240 + $0x18] sm:$0xff]
        %v303 = vld [vmem:[%s240 + $0x20] sm:$0xff]
        %v304 = vld [vmem:[%s240 + $0x28] sm:$0xff]
        %v305 = vld [vmem:[%s240 + $0x30] sm:$0xff]
        %v306 = vld [vmem:[%s240 + $0x38] sm:$0xff]
        %v307 = vld [vmem:[%s240 + $0x40] sm:$0xff]
        %v308 = vld [vmem:[%s240 + $0x48] sm:$0xff]
        %v309 = vld [vmem:[%s240 + $0x50] sm:$0xff]
        %v310 = vld [vmem:[%s240 + $0x58] sm:$0xff]
        %v311 = vld [vmem:[%s240 + $0x60] sm:$0xff]
        %v312 = vld [vmem:[%s240 + $0x68] sm:$0xff]
        %v313 = vld [vmem:[%s240 + $0x70] sm:$0xff]
        %v314 = vld [vmem:[%s240 + $0x78] sm:$0xff]
        %v315 = vld [vmem:[%s240 + $0x80] sm:$0xff]
        %v316 = vld [vmem:[%s240 + $0x88] sm:$0xff]
        %v317 = vld [vmem:[%s240 + $0x90] sm:$0xff]
        %v318 = vld [vmem:[%s240 + $0x98] sm:$0xff]
        %v319 = vld [vmem:[%s240 + $0xa0] sm:$0xff]
        %v320 = vld [vmem:[%s240 + $0xa8] sm:$0xff]
        %v321 = vld [vmem:[%s240 + $0xb0] sm:$0xff]
        %v322 = vld [vmem:[%s240 + $0xb8] sm:$0xff]
        %v323 = vld [vmem:[%s240 + $0xc0] sm:$0xff]
        %v324 = vld [vmem:[%s240 + $0xc8] sm:$0xff]
        %v325 = vld [vmem:[%s240 + $0xd0] sm:$0xff]
        %v326 = vld [vmem:[%s240 + $0xd8] sm:$0xff]
        %v327 = vld [vmem:[%s240 + $0xe0] sm:$0xff]
        %v328 = vld [vmem:[%s240 + $0xe8] sm:$0xff]
        %v329 = vld [vmem:[%s240 + $0xf0] sm:$0xff]
        %v330 = vld [vmem:[%s240 + $0xf8] sm:$0xff]
        %v331 = vld [vmem:[%s240 + $0x100] sm:$0xff]
        %v332 = vld [vmem:[%s240 + $0x108] sm:$0xff]
        %v333 = vld [vmem:[%s240 + $0x110] sm:$0xff]
        %v334 = vld [vmem:[%s240 + $0x118] sm:$0xff]
        %v335 = vld [vmem:[%s240 + $0x120] sm:$0xff]
        %v336 = vld [vmem:[%s240 + $0x128] sm:$0xff]
        %v337 = vld [vmem:[%s240 + $0x130] sm:$0xff]
        %v338 = vld [vmem:[%s240 + $0x138] sm:$0xff]
        %v339 = vld [vmem:[%s240 + $0x140] sm:$0xff]
        %v340 = vld [vmem:[%s240 + $0x148] sm:$0xff]
        %v341 = vld [vmem:[%s240 + $0x150] sm:$0xff]
        %v342 = vld [vmem:[%s240 + $0x158] sm:$0xff]
        %v343 = vld [vmem:[%s240 + $0x160] sm:$0xff]
        %v344 = vld [vmem:[%s240 + $0x168] sm:$0xff]
        %v345 = vld [vmem:[%s240 + $0x170] sm:$0xff]
        %v346 = vld [vmem:[%s240 + $0x178] sm:$0xff]
        %v347 = vld [vmem:[%s240 + $0x180] sm:$0xff]
        %v348 = vld [vmem:[%s240 + $0x188] sm:$0xff]
        %v349 = vld [vmem:[%s240 + $0x190] sm:$0xff]
        %v350 = vld [vmem:[%s240 + $0x198] sm:$0xff]
        %v351 = vld [vmem:[%s240 + $0x1a0] sm:$0xff]
        %v352 = vld [vmem:[%s240 + $0x1a8] sm:$0xff]
        %v353 = vld [vmem:[%s240 + $0x1b0] sm:$0xff]
        %v354 = vld [vmem:[%s240 + $0x1b8] sm:$0xff]
        %v355 = vld [vmem:[%s240 + $0x1c0] sm:$0xff]
        %v356 = vld [vmem:[%s240 + $0x1c8] sm:$0xff]
        %v357 = vld [vmem:[%s240 + $0x1d0] sm:$0xff]
        %v358 = vld [vmem:[%s240 + $0x1d8] sm:$0xff]
        %v359 = vld [vmem:[%s240 + $0x1e0] sm:$0xff]
        %v360 = vld [vmem:[%s240 + $0x1e8] sm:$0xff]
        %v361 = vld [vmem:[%s240 + $0x1f0] sm:$0xff]
        %v362 = vld [vmem:[%s240 + $0x1f8] sm:$0xff]
        %v363 = vld [vmem:[%s240 + $0x200] sm:$0x77]
        %v364 = vld [vmem:[%s240 + $0x208] sm:$0x77]
        %v365 = vld [vmem:[%s240 + $0x210] sm:$0x77]
        %v366 = vld [vmem:[%s240 + $0x218] sm:$0x77]
        %v367 = vld [vmem:[%s240 + $0x220] sm:$0x77]
        %v368 = vld [vmem:[%s240 + $0x228] sm:$0x77]
        %v369 = vld [vmem:[%s240 + $0x230] sm:$0x77]
        %v370 = vld [vmem:[%s240 + $0x238] sm:$0x77]
        %v371 = vld [vmem:[%s240 + $0x240] sm:$0x77]
        %v372 = vld [vmem:[%s240 + $0x248] sm:$0x77]
        %v373 = vld [vmem:[%s240 + $0x250] sm:$0x77]
        %v374 = vld [vmem:[%s240 + $0x258] sm:$0x77]
        %v375 = vld [vmem:[%s240 + $0x260] sm:$0x77]
        %v376 = vld [vmem:[%s240 + $0x268] sm:$0x77]
        %v377 = vld [vmem:[%s240 + $0x270] sm:$0x77]
        %v378 = vld [vmem:[%s240 + $0x278] sm:$0x77]
        %v379 = vld [vmem:[%s240 + $0x280] sm:$0x77]
        %v380 = vld [vmem:[%s240 + $0x288] sm:$0x77]
        %v381 = vld [vmem:[%s240 + $0x290] sm:$0x77]
        %v382 = vld [vmem:[%s240 + $0x298] sm:$0x77]
        %v383 = vld [vmem:[%s240 + $0x2a0] sm:$0x77]
        %v384 = vld [vmem:[%s240 + $0x2a8] sm:$0x77]
        %v385 = vld [vmem:[%s240 + $0x2b0] sm:$0x77]
        %v386 = vld [vmem:[%s240 + $0x2b8] sm:$0x77]
        %v387 = vld [vmem:[%s240 + $0x2c0] sm:$0x77]
        %v388 = vld [vmem:[%s240 + $0x2c8] sm:$0x77]
        %v389 = vld [vmem:[%s240 + $0x2d0] sm:$0x77]
        %v390 = vld [vmem:[%s240 + $0x2d8] sm:$0x77]
        %v391 = vld [vmem:[%s240 + $0x2e0] sm:$0x77]
        %v392 = vld [vmem:[%s240 + $0x2e8] sm:$0x77]
        %v393 = vld [vmem:[%s240 + $0x2f0] sm:$0x77]
        %v394 = vld [vmem:[%s240 + $0x2f8] sm:$0x77]
        %v395 = vld [vmem:[%s240 + $0x300] sm:$0x77]
        %v396 = vld [vmem:[%s240 + $0x308] sm:$0x77]
        %v397 = vld [vmem:[%s240 + $0x310] sm:$0x77]
        %v398 = vld [vmem:[%s240 + $0x318] sm:$0x77]
        %v399 = vld [vmem:[%s240 + $0x320] sm:$0x77]
        %v400 = vld [vmem:[%s240 + $0x328] sm:$0x77]
        %v401 = vld [vmem:[%s240 + $0x330] sm:$0x77]
        %v402 = vld [vmem:[%s240 + $0x338] sm:$0x77]
        %v403 = vld [vmem:[%s240 + $0x340] sm:$0x77]
        %v404 = vld [vmem:[%s240 + $0x348] sm:$0x77]
        %v405 = vld [vmem:[%s240 + $0x350] sm:$0x77]
        %v406 = vld [vmem:[%s240 + $0x358] sm:$0x77]
        %v407 = vld [vmem:[%s240 + $0x360] sm:$0x77]
        %v408 = vld [vmem:[%s240 + $0x368] sm:$0x77]
        %v409 = vld [vmem:[%s240 + $0x370] sm:$0x77]
        %v410 = vld [vmem:[%s240 + $0x378] sm:$0x77]
        %v411 = vld [vmem:[%s240 + $0x380] sm:$0x77]
        %v412 = vld [vmem:[%s240 + $0x388] sm:$0x77]
        %v413 = vld [vmem:[%s240 + $0x390] sm:$0x77]
        %v414 = vld [vmem:[%s240 + $0x398] sm:$0x77]
        %v415 = vld [vmem:[%s240 + $0x3a0] sm:$0x77]
        %v416 = vld [vmem:[%s240 + $0x3a8] sm:$0x77]
        %v417 = vld [vmem:[%s240 + $0x3b0] sm:$0x77]
        %v418 = vld [vmem:[%s240 + $0x3b8] sm:$0x77]
        %v419 = vld [vmem:[%s240 + $0x3c0] sm:$0x77]
        %v420 = vld [vmem:[%s240 + $0x3c8] sm:$0x77]
        %v421 = vld [vmem:[%s240 + $0x3d0] sm:$0x77]
        %v422 = vld [vmem:[%s240 + $0x3d8] sm:$0x77]
        %v423 = vld [vmem:[%s240 + $0x3e0] sm:$0x77]
        %v424 = vld [vmem:[%s240 + $0x3e8] sm:$0x77]
        %v425 = vld [vmem:[%s240 + $0x3f0] sm:$0x77]
        %v426 = vld [vmem:[%s240 + $0x3f8] sm:$0x77]
        %v427 = vunpack.c.l.bf16 %v299
        %v428 = vunpack.c.h.bf16 %v299
        %v429 = vunpack.c.l.bf16 %v300
        %v430 = vunpack.c.h.bf16 %v300
        %v431 = vunpack.c.l.bf16 %v301
        %v432 = vunpack.c.h.bf16 %v301
        %v433 = vunpack.c.l.bf16 %v302
        %v434 = vunpack.c.h.bf16 %v302
        %v435 = vunpack.c.l.bf16 %v303
        %v436 = vunpack.c.h.bf16 %v303
        %v437 = vunpack.c.l.bf16 %v304
        %v438 = vunpack.c.h.bf16 %v304
        %v439 = vunpack.c.l.bf16 %v305
        %v440 = vunpack.c.h.bf16 %v305
        %v441 = vunpack.c.l.bf16 %v306
        %v442 = vunpack.c.h.bf16 %v306
        %v443 = vunpack.c.l.bf16 %v307
        %v444 = vunpack.c.h.bf16 %v307
        %v445 = vunpack.c.l.bf16 %v308
        %v446 = vunpack.c.h.bf16 %v308
        %v447 = vunpack.c.l.bf16 %v309
        %v448 = vunpack.c.h.bf16 %v309
        %v449 = vunpack.c.l.bf16 %v310
        %v450 = vunpack.c.h.bf16 %v310
        %v451 = vunpack.c.l.bf16 %v311
        %v452 = vunpack.c.h.bf16 %v311
        %v453 = vunpack.c.l.bf16 %v312
        %v454 = vunpack.c.h.bf16 %v312
        %v455 = vunpack.c.l.bf16 %v313
        %v456 = vunpack.c.h.bf16 %v313
        %v457 = vunpack.c.l.bf16 %v314
        %v458 = vunpack.c.h.bf16 %v314
        %v459 = vunpack.c.l.bf16 %v315
        %v460 = vunpack.c.h.bf16 %v315
        %v461 = vunpack.c.l.bf16 %v316
        %v462 = vunpack.c.h.bf16 %v316
        %v463 = vunpack.c.l.bf16 %v317
        %v464 = vunpack.c.h.bf16 %v317
        %v465 = vunpack.c.l.bf16 %v318
        %v466 = vunpack.c.h.bf16 %v318
        %v467 = vunpack.c.l.bf16 %v319
        %v468 = vunpack.c.h.bf16 %v319
        %v469 = vunpack.c.l.bf16 %v320
        %v470 = vunpack.c.h.bf16 %v320
        %v471 = vunpack.c.l.bf16 %v321
        %v472 = vunpack.c.h.bf16 %v321
        %v473 = vunpack.c.l.bf16 %v322
        %v474 = vunpack.c.h.bf16 %v322
        %v475 = vunpack.c.l.bf16 %v323
        %v476 = vunpack.c.h.bf16 %v323
        %v477 = vunpack.c.l.bf16 %v324
        %v478 = vunpack.c.h.bf16 %v324
        %v479 = vunpack.c.l.bf16 %v325
        %v480 = vunpack.c.h.bf16 %v325
        %v481 = vunpack.c.l.bf16 %v326
        %v482 = vunpack.c.h.bf16 %v326
        %v483 = vunpack.c.l.bf16 %v327
        %v484 = vunpack.c.h.bf16 %v327
        %v485 = vunpack.c.l.bf16 %v328
        %v486 = vunpack.c.h.bf16 %v328
        %v487 = vunpack.c.l.bf16 %v329
        %v488 = vunpack.c.h.bf16 %v329
        %v489 = vunpack.c.l.bf16 %v330
        %v490 = vunpack.c.h.bf16 %v330
        %v491 = vunpack.c.l.bf16 %v331
        %v492 = vunpack.c.h.bf16 %v331
        %v493 = vunpack.c.l.bf16 %v332
        %v494 = vunpack.c.h.bf16 %v332
        %v495 = vunpack.c.l.bf16 %v333
        %v496 = vunpack.c.h.bf16 %v333
        %v497 = vunpack.c.l.bf16 %v334
        %v498 = vunpack.c.h.bf16 %v334
        %v499 = vunpack.c.l.bf16 %v335
        %v500 = vunpack.c.h.bf16 %v335
        %v501 = vunpack.c.l.bf16 %v336
        %v502 = vunpack.c.h.bf16 %v336
        %v503 = vunpack.c.l.bf16 %v337
        %v504 = vunpack.c.h.bf16 %v337
        %v505 = vunpack.c.l.bf16 %v338
        %v506 = vunpack.c.h.bf16 %v338
        %v507 = vunpack.c.l.bf16 %v339
        %v508 = vunpack.c.h.bf16 %v339
        %v509 = vunpack.c.l.bf16 %v340
        %v510 = vunpack.c.h.bf16 %v340
        %v511 = vunpack.c.l.bf16 %v341
        %v512 = vunpack.c.h.bf16 %v341
        %v513 = vunpack.c.l.bf16 %v342
        %v514 = vunpack.c.h.bf16 %v342
        %v515 = vunpack.c.l.bf16 %v343
        %v516 = vunpack.c.h.bf16 %v343
        %v517 = vunpack.c.l.bf16 %v344
        %v518 = vunpack.c.h.bf16 %v344
        %v519 = vunpack.c.l.bf16 %v345
        %v520 = vunpack.c.h.bf16 %v345
        %v521 = vunpack.c.l.bf16 %v346
        %v522 = vunpack.c.h.bf16 %v346
        %v523 = vunpack.c.l.bf16 %v347
        %v524 = vunpack.c.h.bf16 %v347
        %v525 = vunpack.c.l.bf16 %v348
        %v526 = vunpack.c.h.bf16 %v348
        %v527 = vunpack.c.l.bf16 %v349
        %v528 = vunpack.c.h.bf16 %v349
        %v529 = vunpack.c.l.bf16 %v350
        %v530 = vunpack.c.h.bf16 %v350
        %v531 = vunpack.c.l.bf16 %v351
        %v532 = vunpack.c.h.bf16 %v351
        %v533 = vunpack.c.l.bf16 %v352
        %v534 = vunpack.c.h.bf16 %v352
        %v535 = vunpack.c.l.bf16 %v353
        %v536 = vunpack.c.h.bf16 %v353
        %v537 = vunpack.c.l.bf16 %v354
        %v538 = vunpack.c.h.bf16 %v354
        %v539 = vunpack.c.l.bf16 %v355
        %v540 = vunpack.c.h.bf16 %v355
        %v541 = vunpack.c.l.bf16 %v356
        %v542 = vunpack.c.h.bf16 %v356
        %v543 = vunpack.c.l.bf16 %v357
        %v544 = vunpack.c.h.bf16 %v357
        %v545 = vunpack.c.l.bf16 %v358
        %v546 = vunpack.c.h.bf16 %v358
        %v547 = vunpack.c.l.bf16 %v359
        %v548 = vunpack.c.h.bf16 %v359
        %v549 = vunpack.c.l.bf16 %v360
        %v550 = vunpack.c.h.bf16 %v360
        %v551 = vunpack.c.l.bf16 %v361
        %v552 = vunpack.c.h.bf16 %v361
        %v553 = vunpack.c.l.bf16 %v362
        %v554 = vunpack.c.h.bf16 %v362
        %v555 = vunpack.c.l.bf16 %v363
        %v556 = vunpack.c.h.bf16 %v363
        %v557 = vunpack.c.l.bf16 %v364
        %v558 = vunpack.c.h.bf16 %v364
        %v559 = vunpack.c.l.bf16 %v365
        %v560 = vunpack.c.h.bf16 %v365
        %v561 = vunpack.c.l.bf16 %v366
        %v562 = vunpack.c.h.bf16 %v366
        %v563 = vunpack.c.l.bf16 %v367
        %v564 = vunpack.c.h.bf16 %v367
        %v565 = vunpack.c.l.bf16 %v368
        %v566 = vunpack.c.h.bf16 %v368
        %v567 = vunpack.c.l.bf16 %v369
        %v568 = vunpack.c.h.bf16 %v369
        %v569 = vunpack.c.l.bf16 %v370
        %v570 = vunpack.c.h.bf16 %v370
        %v571 = vunpack.c.l.bf16 %v371
        %v572 = vunpack.c.h.bf16 %v371
        %v573 = vunpack.c.l.bf16 %v372
        %v574 = vunpack.c.h.bf16 %v372
        %v575 = vunpack.c.l.bf16 %v373
        %v576 = vunpack.c.h.bf16 %v373
        %v577 = vunpack.c.l.bf16 %v374
        %v578 = vunpack.c.h.bf16 %v374
        %v579 = vunpack.c.l.bf16 %v375
        %v580 = vunpack.c.h.bf16 %v375
        %v581 = vunpack.c.l.bf16 %v376
        %v582 = vunpack.c.h.bf16 %v376
        %v583 = vunpack.c.l.bf16 %v377
        %v584 = vunpack.c.h.bf16 %v377
        %v585 = vunpack.c.l.bf16 %v378
        %v586 = vunpack.c.h.bf16 %v378
        %v587 = vunpack.c.l.bf16 %v379
        %v588 = vunpack.c.h.bf16 %v379
        %v589 = vunpack.c.l.bf16 %v380
        %v590 = vunpack.c.h.bf16 %v380
        %v591 = vunpack.c.l.bf16 %v381
        %v592 = vunpack.c.h.bf16 %v381
        %v593 = vunpack.c.l.bf16 %v382
        %v594 = vunpack.c.h.bf16 %v382
        %v595 = vunpack.c.l.bf16 %v383
        %v596 = vunpack.c.h.bf16 %v383
        %v597 = vunpack.c.l.bf16 %v384
        %v598 = vunpack.c.h.bf16 %v384
        %v599 = vunpack.c.l.bf16 %v385
        %v600 = vunpack.c.h.bf16 %v385
        %v601 = vunpack.c.l.bf16 %v386
        %v602 = vunpack.c.h.bf16 %v386
        %v603 = vunpack.c.l.bf16 %v387
        %v604 = vunpack.c.h.bf16 %v387
        %v605 = vunpack.c.l.bf16 %v388
        %v606 = vunpack.c.h.bf16 %v388
        %v607 = vunpack.c.l.bf16 %v389
        %v608 = vunpack.c.h.bf16 %v389
        %v609 = vunpack.c.l.bf16 %v390
        %v610 = vunpack.c.h.bf16 %v390
        %v611 = vunpack.c.l.bf16 %v391
        %v612 = vunpack.c.h.bf16 %v391
        %v613 = vunpack.c.l.bf16 %v392
        %v614 = vunpack.c.h.bf16 %v392
        %v615 = vunpack.c.l.bf16 %v393
        %v616 = vunpack.c.h.bf16 %v393
        %v617 = vunpack.c.l.bf16 %v394
        %v618 = vunpack.c.h.bf16 %v394
        %v619 = vunpack.c.l.bf16 %v395
        %v620 = vunpack.c.h.bf16 %v395
        %v621 = vunpack.c.l.bf16 %v396
        %v622 = vunpack.c.h.bf16 %v396
        %v623 = vunpack.c.l.bf16 %v397
        %v624 = vunpack.c.h.bf16 %v397
        %v625 = vunpack.c.l.bf16 %v398
        %v626 = vunpack.c.h.bf16 %v398
        %v627 = vunpack.c.l.bf16 %v399
        %v628 = vunpack.c.h.bf16 %v399
        %v629 = vunpack.c.l.bf16 %v400
        %v630 = vunpack.c.h.bf16 %v400
        %v631 = vunpack.c.l.bf16 %v401
        %v632 = vunpack.c.h.bf16 %v401
        %v633 = vunpack.c.l.bf16 %v402
        %v634 = vunpack.c.h.bf16 %v402
        %v635 = vunpack.c.l.bf16 %v403
        %v636 = vunpack.c.h.bf16 %v403
        %v637 = vunpack.c.l.bf16 %v404
        %v638 = vunpack.c.h.bf16 %v404
        %v639 = vunpack.c.l.bf16 %v405
        %v640 = vunpack.c.h.bf16 %v405
        %v641 = vunpack.c.l.bf16 %v406
        %v642 = vunpack.c.h.bf16 %v406
        %v643 = vunpack.c.l.bf16 %v407
        %v644 = vunpack.c.h.bf16 %v407
        %v645 = vunpack.c.l.bf16 %v408
        %v646 = vunpack.c.h.bf16 %v408
        %v647 = vunpack.c.l.bf16 %v409
        %v648 = vunpack.c.h.bf16 %v409
        %v649 = vunpack.c.l.bf16 %v410
        %v650 = vunpack.c.h.bf16 %v410
        %v651 = vunpack.c.l.bf16 %v411
        %v652 = vunpack.c.h.bf16 %v411
        %v653 = vunpack.c.l.bf16 %v412
        %v654 = vunpack.c.h.bf16 %v412
        %v655 = vunpack.c.l.bf16 %v413
        %v656 = vunpack.c.h.bf16 %v413
        %v657 = vunpack.c.l.bf16 %v414
        %v658 = vunpack.c.h.bf16 %v414
        %v659 = vunpack.c.l.bf16 %v415
        %v660 = vunpack.c.h.bf16 %v415
        %v661 = vunpack.c.l.bf16 %v416
        %v662 = vunpack.c.h.bf16 %v416
        %v663 = vunpack.c.l.bf16 %v417
        %v664 = vunpack.c.h.bf16 %v417
        %v665 = vunpack.c.l.bf16 %v418
        %v666 = vunpack.c.h.bf16 %v418
        %v667 = vunpack.c.l.bf16 %v419
        %v668 = vunpack.c.h.bf16 %v419
        %v669 = vunpack.c.l.bf16 %v420
        %v670 = vunpack.c.h.bf16 %v420
        %v671 = vunpack.c.l.bf16 %v421
        %v672 = vunpack.c.h.bf16 %v421
        %v673 = vunpack.c.l.bf16 %v422
        %v674 = vunpack.c.h.bf16 %v422
        %v675 = vunpack.c.l.bf16 %v423
        %v676 = vunpack.c.h.bf16 %v423
        %v677 = vunpack.c.l.bf16 %v424
        %v678 = vunpack.c.h.bf16 %v424
        %v679 = vunpack.c.l.bf16 %v425
        %v680 = vunpack.c.h.bf16 %v425
        %v681 = vunpack.c.l.bf16 %v426
        %v682 = vunpack.c.h.bf16 %v426
        %v683 = vld [vmem:[%s249] sm:$0xff]
        %v684 = vld [vmem:[%s249 + $0x8] sm:$0xff]
        %v685 = vld [vmem:[%s249 + $0x10] sm:$0xff]
        %v686 = vld [vmem:[%s249 + $0x18] sm:$0xff]
        %v687 = vld [vmem:[%s249 + $0x20] sm:$0xff]
        %v688 = vld [vmem:[%s249 + $0x28] sm:$0xff]
        %v689 = vld [vmem:[%s249 + $0x30] sm:$0xff]
        %v690 = vld [vmem:[%s249 + $0x38] sm:$0xff]
        %v691 = vld [vmem:[%s249 + $0x40] sm:$0xff]
        %v692 = vld [vmem:[%s249 + $0x48] sm:$0xff]
        %v693 = vld [vmem:[%s249 + $0x50] sm:$0xff]
        %v694 = vld [vmem:[%s249 + $0x58] sm:$0xff]
        %v695 = vld [vmem:[%s249 + $0x60] sm:$0xff]
        %v696 = vld [vmem:[%s249 + $0x68] sm:$0xff]
        %v697 = vld [vmem:[%s249 + $0x70] sm:$0xff]
        %v698 = vld [vmem:[%s249 + $0x78] sm:$0xff]
        %v699 = vld [vmem:[%s249 + $0x80] sm:$0xff]
        %v700 = vld [vmem:[%s249 + $0x88] sm:$0xff]
        %v701 = vld [vmem:[%s249 + $0x90] sm:$0xff]
        %v702 = vld [vmem:[%s249 + $0x98] sm:$0xff]
        %v703 = vld [vmem:[%s249 + $0xa0] sm:$0xff]
        %v704 = vld [vmem:[%s249 + $0xa8] sm:$0xff]
        %v705 = vld [vmem:[%s249 + $0xb0] sm:$0xff]
        %v706 = vld [vmem:[%s249 + $0xb8] sm:$0xff]
        %v707 = vld [vmem:[%s249 + $0xc0] sm:$0xff]
        %v708 = vld [vmem:[%s249 + $0xc8] sm:$0xff]
        %v709 = vld [vmem:[%s249 + $0xd0] sm:$0xff]
        %v710 = vld [vmem:[%s249 + $0xd8] sm:$0xff]
        %v711 = vld [vmem:[%s249 + $0xe0] sm:$0xff]
        %v712 = vld [vmem:[%s249 + $0xe8] sm:$0xff]
        %v713 = vld [vmem:[%s249 + $0xf0] sm:$0xff]
        %v714 = vld [vmem:[%s249 + $0xf8] sm:$0xff]
        %v715 = vld [vmem:[%s249 + $0x100] sm:$0xff]
        %v716 = vld [vmem:[%s249 + $0x108] sm:$0xff]
        %v717 = vld [vmem:[%s249 + $0x110] sm:$0xff]
        %v718 = vld [vmem:[%s249 + $0x118] sm:$0xff]
        %v719 = vld [vmem:[%s249 + $0x120] sm:$0xff]
        %v720 = vld [vmem:[%s249 + $0x128] sm:$0xff]
        %v721 = vld [vmem:[%s249 + $0x130] sm:$0xff]
        %v722 = vld [vmem:[%s249 + $0x138] sm:$0xff]
        %v723 = vld [vmem:[%s249 + $0x140] sm:$0xff]
        %v724 = vld [vmem:[%s249 + $0x148] sm:$0xff]
        %v725 = vld [vmem:[%s249 + $0x150] sm:$0xff]
        %v726 = vld [vmem:[%s249 + $0x158] sm:$0xff]
        %v727 = vld [vmem:[%s249 + $0x160] sm:$0xff]
        %v728 = vld [vmem:[%s249 + $0x168] sm:$0xff]
        %v729 = vld [vmem:[%s249 + $0x170] sm:$0xff]
        %v730 = vld [vmem:[%s249 + $0x178] sm:$0xff]
        %v731 = vld [vmem:[%s249 + $0x180] sm:$0xff]
        %v732 = vld [vmem:[%s249 + $0x188] sm:$0xff]
        %v733 = vld [vmem:[%s249 + $0x190] sm:$0xff]
        %v734 = vld [vmem:[%s249 + $0x198] sm:$0xff]
        %v735 = vld [vmem:[%s249 + $0x1a0] sm:$0xff]
        %v736 = vld [vmem:[%s249 + $0x1a8] sm:$0xff]
        %v737 = vld [vmem:[%s249 + $0x1b0] sm:$0xff]
        %v738 = vld [vmem:[%s249 + $0x1b8] sm:$0xff]
        %v739 = vld [vmem:[%s249 + $0x1c0] sm:$0xff]
        %v740 = vld [vmem:[%s249 + $0x1c8] sm:$0xff]
        %v741 = vld [vmem:[%s249 + $0x1d0] sm:$0xff]
        %v742 = vld [vmem:[%s249 + $0x1d8] sm:$0xff]
        %v743 = vld [vmem:[%s249 + $0x1e0] sm:$0xff]
        %v744 = vld [vmem:[%s249 + $0x1e8] sm:$0xff]
        %v745 = vld [vmem:[%s249 + $0x1f0] sm:$0xff]
        %v746 = vld [vmem:[%s249 + $0x1f8] sm:$0xff]
        %v747 = vld [vmem:[%s249 + $0x200] sm:$0x77]
        %v748 = vld [vmem:[%s249 + $0x208] sm:$0x77]
        %v749 = vld [vmem:[%s249 + $0x210] sm:$0x77]
        %v750 = vld [vmem:[%s249 + $0x218] sm:$0x77]
        %v751 = vld [vmem:[%s249 + $0x220] sm:$0x77]
        %v752 = vld [vmem:[%s249 + $0x228] sm:$0x77]
        %v753 = vld [vmem:[%s249 + $0x230] sm:$0x77]
        %v754 = vld [vmem:[%s249 + $0x238] sm:$0x77]
        %v755 = vld [vmem:[%s249 + $0x240] sm:$0x77]
        %v756 = vld [vmem:[%s249 + $0x248] sm:$0x77]
        %v757 = vld [vmem:[%s249 + $0x250] sm:$0x77]
        %v758 = vld [vmem:[%s249 + $0x258] sm:$0x77]
        %v759 = vld [vmem:[%s249 + $0x260] sm:$0x77]
        %v760 = vld [vmem:[%s249 + $0x268] sm:$0x77]
        %v761 = vld [vmem:[%s249 + $0x270] sm:$0x77]
        %v762 = vld [vmem:[%s249 + $0x278] sm:$0x77]
        %v763 = vld [vmem:[%s249 + $0x280] sm:$0x77]
        %v764 = vld [vmem:[%s249 + $0x288] sm:$0x77]
        %v765 = vld [vmem:[%s249 + $0x290] sm:$0x77]
        %v766 = vld [vmem:[%s249 + $0x298] sm:$0x77]
        %v767 = vld [vmem:[%s249 + $0x2a0] sm:$0x77]
        %v768 = vld [vmem:[%s249 + $0x2a8] sm:$0x77]
        %v769 = vld [vmem:[%s249 + $0x2b0] sm:$0x77]
        %v770 = vld [vmem:[%s249 + $0x2b8] sm:$0x77]
        %v771 = vld [vmem:[%s249 + $0x2c0] sm:$0x77]
        %v772 = vld [vmem:[%s249 + $0x2c8] sm:$0x77]
        %v773 = vld [vmem:[%s249 + $0x2d0] sm:$0x77]
        %v774 = vld [vmem:[%s249 + $0x2d8] sm:$0x77]
        %v775 = vld [vmem:[%s249 + $0x2e0] sm:$0x77]
        %v776 = vld [vmem:[%s249 + $0x2e8] sm:$0x77]
        %v777 = vld [vmem:[%s249 + $0x2f0] sm:$0x77]
        %v778 = vld [vmem:[%s249 + $0x2f8] sm:$0x77]
        %v779 = vld [vmem:[%s249 + $0x300] sm:$0x77]
        %v780 = vld [vmem:[%s249 + $0x308] sm:$0x77]
        %v781 = vld [vmem:[%s249 + $0x310] sm:$0x77]
        %v782 = vld [vmem:[%s249 + $0x318] sm:$0x77]
        %v783 = vld [vmem:[%s249 + $0x320] sm:$0x77]
        %v784 = vld [vmem:[%s249 + $0x328] sm:$0x77]
        %v785 = vld [vmem:[%s249 + $0x330] sm:$0x77]
        %v786 = vld [vmem:[%s249 + $0x338] sm:$0x77]
        %v787 = vld [vmem:[%s249 + $0x340] sm:$0x77]
        %v788 = vld [vmem:[%s249 + $0x348] sm:$0x77]
        %v789 = vld [vmem:[%s249 + $0x350] sm:$0x77]
        %v790 = vld [vmem:[%s249 + $0x358] sm:$0x77]
        %v791 = vld [vmem:[%s249 + $0x360] sm:$0x77]
        %v792 = vld [vmem:[%s249 + $0x368] sm:$0x77]
        %v793 = vld [vmem:[%s249 + $0x370] sm:$0x77]
        %v794 = vld [vmem:[%s249 + $0x378] sm:$0x77]
        %v795 = vld [vmem:[%s249 + $0x380] sm:$0x77]
        %v796 = vld [vmem:[%s249 + $0x388] sm:$0x77]
        %v797 = vld [vmem:[%s249 + $0x390] sm:$0x77]
        %v798 = vld [vmem:[%s249 + $0x398] sm:$0x77]
        %v799 = vld [vmem:[%s249 + $0x3a0] sm:$0x77]
        %v800 = vld [vmem:[%s249 + $0x3a8] sm:$0x77]
        %v801 = vld [vmem:[%s249 + $0x3b0] sm:$0x77]
        %v802 = vld [vmem:[%s249 + $0x3b8] sm:$0x77]
        %v803 = vld [vmem:[%s249 + $0x3c0] sm:$0x77]
        %v804 = vld [vmem:[%s249 + $0x3c8] sm:$0x77]
        %v805 = vld [vmem:[%s249 + $0x3d0] sm:$0x77]
        %v806 = vld [vmem:[%s249 + $0x3d8] sm:$0x77]
        %v807 = vld [vmem:[%s249 + $0x3e0] sm:$0x77]
        %v808 = vld [vmem:[%s249 + $0x3e8] sm:$0x77]
        %v809 = vld [vmem:[%s249 + $0x3f0] sm:$0x77]
        %v810 = vld [vmem:[%s249 + $0x3f8] sm:$0x77]
        %v811 = vunpack.c.l.bf16 %v683
        %v812 = vunpack.c.h.bf16 %v683
        %v813 = vunpack.c.l.bf16 %v684
        %v814 = vunpack.c.h.bf16 %v684
        %v815 = vunpack.c.l.bf16 %v685
        %v816 = vunpack.c.h.bf16 %v685
        %v817 = vunpack.c.l.bf16 %v686
        %v818 = vunpack.c.h.bf16 %v686
        %v819 = vunpack.c.l.bf16 %v687
        %v820 = vunpack.c.h.bf16 %v687
        %v821 = vunpack.c.l.bf16 %v688
        %v822 = vunpack.c.h.bf16 %v688
        %v823 = vunpack.c.l.bf16 %v689
        %v824 = vunpack.c.h.bf16 %v689
        %v825 = vunpack.c.l.bf16 %v690
        %v826 = vunpack.c.h.bf16 %v690
        %v827 = vunpack.c.l.bf16 %v691
        %v828 = vunpack.c.h.bf16 %v691
        %v829 = vunpack.c.l.bf16 %v692
        %v830 = vunpack.c.h.bf16 %v692
        %v831 = vunpack.c.l.bf16 %v693
        %v832 = vunpack.c.h.bf16 %v693
        %v833 = vunpack.c.l.bf16 %v694
        %v834 = vunpack.c.h.bf16 %v694
        %v835 = vunpack.c.l.bf16 %v695
        %v836 = vunpack.c.h.bf16 %v695
        %v837 = vunpack.c.l.bf16 %v696
        %v838 = vunpack.c.h.bf16 %v696
        %v839 = vunpack.c.l.bf16 %v697
        %v840 = vunpack.c.h.bf16 %v697
        %v841 = vunpack.c.l.bf16 %v698
        %v842 = vunpack.c.h.bf16 %v698
        %v843 = vunpack.c.l.bf16 %v699
        %v844 = vunpack.c.h.bf16 %v699
        %v845 = vunpack.c.l.bf16 %v700
        %v846 = vunpack.c.h.bf16 %v700
        %v847 = vunpack.c.l.bf16 %v701
        %v848 = vunpack.c.h.bf16 %v701
        %v849 = vunpack.c.l.bf16 %v702
        %v850 = vunpack.c.h.bf16 %v702
        %v851 = vunpack.c.l.bf16 %v703
        %v852 = vunpack.c.h.bf16 %v703
        %v853 = vunpack.c.l.bf16 %v704
        %v854 = vunpack.c.h.bf16 %v704
        %v855 = vunpack.c.l.bf16 %v705
        %v856 = vunpack.c.h.bf16 %v705
        %v857 = vunpack.c.l.bf16 %v706
        %v858 = vunpack.c.h.bf16 %v706
        %v859 = vunpack.c.l.bf16 %v707
        %v860 = vunpack.c.h.bf16 %v707
        %v861 = vunpack.c.l.bf16 %v708
        %v862 = vunpack.c.h.bf16 %v708
        %v863 = vunpack.c.l.bf16 %v709
        %v864 = vunpack.c.h.bf16 %v709
        %v865 = vunpack.c.l.bf16 %v710
        %v866 = vunpack.c.h.bf16 %v710
        %v867 = vunpack.c.l.bf16 %v711
        %v868 = vunpack.c.h.bf16 %v711
        %v869 = vunpack.c.l.bf16 %v712
        %v870 = vunpack.c.h.bf16 %v712
        %v871 = vunpack.c.l.bf16 %v713
        %v872 = vunpack.c.h.bf16 %v713
        %v873 = vunpack.c.l.bf16 %v714
        %v874 = vunpack.c.h.bf16 %v714
        %v875 = vunpack.c.l.bf16 %v715
        %v876 = vunpack.c.h.bf16 %v715
        %v877 = vunpack.c.l.bf16 %v716
        %v878 = vunpack.c.h.bf16 %v716
        %v879 = vunpack.c.l.bf16 %v717
        %v880 = vunpack.c.h.bf16 %v717
        %v881 = vunpack.c.l.bf16 %v718
        %v882 = vunpack.c.h.bf16 %v718
        %v883 = vunpack.c.l.bf16 %v719
        %v884 = vunpack.c.h.bf16 %v719
        %v885 = vunpack.c.l.bf16 %v720
        %v886 = vunpack.c.h.bf16 %v720
        %v887 = vunpack.c.l.bf16 %v721
        %v888 = vunpack.c.h.bf16 %v721
        %v889 = vunpack.c.l.bf16 %v722
        %v890 = vunpack.c.h.bf16 %v722
        %v891 = vunpack.c.l.bf16 %v723
        %v892 = vunpack.c.h.bf16 %v723
        %v893 = vunpack.c.l.bf16 %v724
        %v894 = vunpack.c.h.bf16 %v724
        %v895 = vunpack.c.l.bf16 %v725
        %v896 = vunpack.c.h.bf16 %v725
        %v897 = vunpack.c.l.bf16 %v726
        %v898 = vunpack.c.h.bf16 %v726
        %v899 = vunpack.c.l.bf16 %v727
        %v900 = vunpack.c.h.bf16 %v727
        %v901 = vunpack.c.l.bf16 %v728
        %v902 = vunpack.c.h.bf16 %v728
        %v903 = vunpack.c.l.bf16 %v729
        %v904 = vunpack.c.h.bf16 %v729
        %v905 = vunpack.c.l.bf16 %v730
        %v906 = vunpack.c.h.bf16 %v730
        %v907 = vunpack.c.l.bf16 %v731
        %v908 = vunpack.c.h.bf16 %v731
        %v909 = vunpack.c.l.bf16 %v732
        %v910 = vunpack.c.h.bf16 %v732
        %v911 = vunpack.c.l.bf16 %v733
        %v912 = vunpack.c.h.bf16 %v733
        %v913 = vunpack.c.l.bf16 %v734
        %v914 = vunpack.c.h.bf16 %v734
        %v915 = vunpack.c.l.bf16 %v735
        %v916 = vunpack.c.h.bf16 %v735
        %v917 = vunpack.c.l.bf16 %v736
        %v918 = vunpack.c.h.bf16 %v736
        %v919 = vunpack.c.l.bf16 %v737
        %v920 = vunpack.c.h.bf16 %v737
        %v921 = vunpack.c.l.bf16 %v738
        %v922 = vunpack.c.h.bf16 %v738
        %v923 = vunpack.c.l.bf16 %v739
        %v924 = vunpack.c.h.bf16 %v739
        %v925 = vunpack.c.l.bf16 %v740
        %v926 = vunpack.c.h.bf16 %v740
        %v927 = vunpack.c.l.bf16 %v741
        %v928 = vunpack.c.h.bf16 %v741
        %v929 = vunpack.c.l.bf16 %v742
        %v930 = vunpack.c.h.bf16 %v742
        %v931 = vunpack.c.l.bf16 %v743
        %v932 = vunpack.c.h.bf16 %v743
        %v933 = vunpack.c.l.bf16 %v744
        %v934 = vunpack.c.h.bf16 %v744
        %v935 = vunpack.c.l.bf16 %v745
        %v936 = vunpack.c.h.bf16 %v745
        %v937 = vunpack.c.l.bf16 %v746
        %v938 = vunpack.c.h.bf16 %v746
        %v939 = vunpack.c.l.bf16 %v747
        %v940 = vunpack.c.h.bf16 %v747
        %v941 = vunpack.c.l.bf16 %v748
        %v942 = vunpack.c.h.bf16 %v748
        %v943 = vunpack.c.l.bf16 %v749
        %v944 = vunpack.c.h.bf16 %v749
        %v945 = vunpack.c.l.bf16 %v750
        %v946 = vunpack.c.h.bf16 %v750
        %v947 = vunpack.c.l.bf16 %v751
        %v948 = vunpack.c.h.bf16 %v751
        %v949 = vunpack.c.l.bf16 %v752
        %v950 = vunpack.c.h.bf16 %v752
        %v951 = vunpack.c.l.bf16 %v753
        %v952 = vunpack.c.h.bf16 %v753
        %v953 = vunpack.c.l.bf16 %v754
        %v954 = vunpack.c.h.bf16 %v754
        %v955 = vunpack.c.l.bf16 %v755
        %v956 = vunpack.c.h.bf16 %v755
        %v957 = vunpack.c.l.bf16 %v756
        %v958 = vunpack.c.h.bf16 %v756
        %v959 = vunpack.c.l.bf16 %v757
        %v960 = vunpack.c.h.bf16 %v757
        %v961 = vunpack.c.l.bf16 %v758
        %v962 = vunpack.c.h.bf16 %v758
        %v963 = vunpack.c.l.bf16 %v759
        %v964 = vunpack.c.h.bf16 %v759
        %v965 = vunpack.c.l.bf16 %v760
        %v966 = vunpack.c.h.bf16 %v760
        %v967 = vunpack.c.l.bf16 %v761
        %v968 = vunpack.c.h.bf16 %v761
        %v969 = vunpack.c.l.bf16 %v762
        %v970 = vunpack.c.h.bf16 %v762
        %v971 = vunpack.c.l.bf16 %v763
        %v972 = vunpack.c.h.bf16 %v763
        %v973 = vunpack.c.l.bf16 %v764
        %v974 = vunpack.c.h.bf16 %v764
        %v975 = vunpack.c.l.bf16 %v765
        %v976 = vunpack.c.h.bf16 %v765
        %v977 = vunpack.c.l.bf16 %v766
        %v978 = vunpack.c.h.bf16 %v766
        %v979 = vunpack.c.l.bf16 %v767
        %v980 = vunpack.c.h.bf16 %v767
        %v981 = vunpack.c.l.bf16 %v768
        %v982 = vunpack.c.h.bf16 %v768
        %v983 = vunpack.c.l.bf16 %v769
        %v984 = vunpack.c.h.bf16 %v769
        %v985 = vunpack.c.l.bf16 %v770
        %v986 = vunpack.c.h.bf16 %v770
        %v987 = vunpack.c.l.bf16 %v771
        %v988 = vunpack.c.h.bf16 %v771
        %v989 = vunpack.c.l.bf16 %v772
        %v990 = vunpack.c.h.bf16 %v772
        %v991 = vunpack.c.l.bf16 %v773
        %v992 = vunpack.c.h.bf16 %v773
        %v993 = vunpack.c.l.bf16 %v774
        %v994 = vunpack.c.h.bf16 %v774
        %v995 = vunpack.c.l.bf16 %v775
        %v996 = vunpack.c.h.bf16 %v775
        %v997 = vunpack.c.l.bf16 %v776
        %v998 = vunpack.c.h.bf16 %v776
        %v999 = vunpack.c.l.bf16 %v777
        %v1000 = vunpack.c.h.bf16 %v777
        %v1001 = vunpack.c.l.bf16 %v778
        %v1002 = vunpack.c.h.bf16 %v778
        %v1003 = vunpack.c.l.bf16 %v779
        %v1004 = vunpack.c.h.bf16 %v779
        %v1005 = vunpack.c.l.bf16 %v780
        %v1006 = vunpack.c.h.bf16 %v780
        %v1007 = vunpack.c.l.bf16 %v781
        %v1008 = vunpack.c.h.bf16 %v781
        %v1009 = vunpack.c.l.bf16 %v782
        %v1010 = vunpack.c.h.bf16 %v782
        %v1011 = vunpack.c.l.bf16 %v783
        %v1012 = vunpack.c.h.bf16 %v783
        %v1013 = vunpack.c.l.bf16 %v784
        %v1014 = vunpack.c.h.bf16 %v784
        %v1015 = vunpack.c.l.bf16 %v785
        %v1016 = vunpack.c.h.bf16 %v785
        %v1017 = vunpack.c.l.bf16 %v786
        %v1018 = vunpack.c.h.bf16 %v786
        %v1019 = vunpack.c.l.bf16 %v787
        %v1020 = vunpack.c.h.bf16 %v787
        %v1021 = vunpack.c.l.bf16 %v788
        %v1022 = vunpack.c.h.bf16 %v788
        %v1023 = vunpack.c.l.bf16 %v789
        %v1024 = vunpack.c.h.bf16 %v789
        %v1025 = vunpack.c.l.bf16 %v790
        %v1026 = vunpack.c.h.bf16 %v790
        %v1027 = vunpack.c.l.bf16 %v791
        %v1028 = vunpack.c.h.bf16 %v791
        %v1029 = vunpack.c.l.bf16 %v792
        %v1030 = vunpack.c.h.bf16 %v792
        %v1031 = vunpack.c.l.bf16 %v793
        %v1032 = vunpack.c.h.bf16 %v793
        %v1033 = vunpack.c.l.bf16 %v794
        %v1034 = vunpack.c.h.bf16 %v794
        %v1035 = vunpack.c.l.bf16 %v795
        %v1036 = vunpack.c.h.bf16 %v795
        %v1037 = vunpack.c.l.bf16 %v796
        %v1038 = vunpack.c.h.bf16 %v796
        %v1039 = vunpack.c.l.bf16 %v797
        %v1040 = vunpack.c.h.bf16 %v797
        %v1041 = vunpack.c.l.bf16 %v798
        %v1042 = vunpack.c.h.bf16 %v798
        %v1043 = vunpack.c.l.bf16 %v799
        %v1044 = vunpack.c.h.bf16 %v799
        %v1045 = vunpack.c.l.bf16 %v800
        %v1046 = vunpack.c.h.bf16 %v800
        %v1047 = vunpack.c.l.bf16 %v801
        %v1048 = vunpack.c.h.bf16 %v801
        %v1049 = vunpack.c.l.bf16 %v802
        %v1050 = vunpack.c.h.bf16 %v802
        %v1051 = vunpack.c.l.bf16 %v803
        %v1052 = vunpack.c.h.bf16 %v803
        %v1053 = vunpack.c.l.bf16 %v804
        %v1054 = vunpack.c.h.bf16 %v804
        %v1055 = vunpack.c.l.bf16 %v805
        %v1056 = vunpack.c.h.bf16 %v805
        %v1057 = vunpack.c.l.bf16 %v806
        %v1058 = vunpack.c.h.bf16 %v806
        %v1059 = vunpack.c.l.bf16 %v807
        %v1060 = vunpack.c.h.bf16 %v807
        %v1061 = vunpack.c.l.bf16 %v808
        %v1062 = vunpack.c.h.bf16 %v808
        %v1063 = vunpack.c.l.bf16 %v809
        %v1064 = vunpack.c.h.bf16 %v809
        %v1065 = vunpack.c.l.bf16 %v810
        %v1066 = vunpack.c.h.bf16 %v810
        %v1067 = vld [vmem:[%s292] sm:$0xff]
        %v1068 = vld [vmem:[%s292 + $0x8] sm:$0x3f]
        %v1069 = vlog2.pop %v427
        %v1070 = vmul.f32 %v1069, 0.6931472
        %v1071 = vlog2.pop %v428
        %v1072 = vmul.f32 %v1071, 0.6931472
        %v1073 = vlog2.pop %v429
        %v1074 = vmul.f32 %v1073, 0.6931472
        %v1075 = vlog2.pop %v430
        %v1076 = vmul.f32 %v1075, 0.6931472
        %v1077 = vlog2.pop %v431
        %v1078 = vmul.f32 %v1077, 0.6931472
        %v1079 = vlog2.pop %v432
        %v1080 = vmul.f32 %v1079, 0.6931472
        %v1081 = vlog2.pop %v433
        %v1082 = vmul.f32 %v1081, 0.6931472
        %v1083 = vlog2.pop %v434
        %v1084 = vmul.f32 %v1083, 0.6931472
        %v1085 = vlog2.pop %v435
        %v1086 = vmul.f32 %v1085, 0.6931472
        %v1087 = vlog2.pop %v436
        %v1088 = vmul.f32 %v1087, 0.6931472
        %v1089 = vlog2.pop %v437
        %v1090 = vmul.f32 %v1089, 0.6931472
        %v1091 = vlog2.pop %v438
        %v1092 = vmul.f32 %v1091, 0.6931472
        %v1093 = vlog2.pop %v439
        %v1094 = vmul.f32 %v1093, 0.6931472
        %v1095 = vlog2.pop %v440
        %v1096 = vmul.f32 %v1095, 0.6931472
        %v1097 = vlog2.pop %v441
        %v1098 = vmul.f32 %v1097, 0.6931472
        %v1099 = vlog2.pop %v442
        %v1100 = vmul.f32 %v1099, 0.6931472
        %v1101 = vlog2.pop %v443
        %v1102 = vmul.f32 %v1101, 0.6931472
        %v1103 = vlog2.pop %v444
        %v1104 = vmul.f32 %v1103, 0.6931472
        %v1105 = vlog2.pop %v445
        %v1106 = vmul.f32 %v1105, 0.6931472
        %v1107 = vlog2.pop %v446
        %v1108 = vmul.f32 %v1107, 0.6931472
        %v1109 = vlog2.pop %v447
        %v1110 = vmul.f32 %v1109, 0.6931472
        %v1111 = vlog2.pop %v448
        %v1112 = vmul.f32 %v1111, 0.6931472
        %v1113 = vlog2.pop %v449
        %v1114 = vmul.f32 %v1113, 0.6931472
        %v1115 = vlog2.pop %v450
        %v1116 = vmul.f32 %v1115, 0.6931472
        %v1117 = vlog2.pop %v451
        %v1118 = vmul.f32 %v1117, 0.6931472
        %v1119 = vlog2.pop %v452
        %v1120 = vmul.f32 %v1119, 0.6931472
        %v1121 = vlog2.pop %v453
        %v1122 = vmul.f32 %v1121, 0.6931472
        %v1123 = vlog2.pop %v454
        %v1124 = vmul.f32 %v1123, 0.6931472
        %v1125 = vlog2.pop %v455
        %v1126 = vmul.f32 %v1125, 0.6931472
        %v1127 = vlog2.pop %v456
        %v1128 = vmul.f32 %v1127, 0.6931472
        %v1129 = vlog2.pop %v457
        %v1130 = vmul.f32 %v1129, 0.6931472
        %v1131 = vlog2.pop %v458
        %v1132 = vmul.f32 %v1131, 0.6931472
        %v1133 = vlog2.pop %v459
        %v1134 = vmul.f32 %v1133, 0.6931472
        %v1135 = vlog2.pop %v460
        %v1136 = vmul.f32 %v1135, 0.6931472
        %v1137 = vlog2.pop %v461
        %v1138 = vmul.f32 %v1137, 0.6931472
        %v1139 = vlog2.pop %v462
        %v1140 = vmul.f32 %v1139, 0.6931472
        %v1141 = vlog2.pop %v463
        %v1142 = vmul.f32 %v1141, 0.6931472
        %v1143 = vlog2.pop %v464
        %v1144 = vmul.f32 %v1143, 0.6931472
        %v1145 = vlog2.pop %v465
        %v1146 = vmul.f32 %v1145, 0.6931472
        %v1147 = vlog2.pop %v466
        %v1148 = vmul.f32 %v1147, 0.6931472
        %v1149 = vlog2.pop %v467
        %v1150 = vmul.f32 %v1149, 0.6931472
        %v1151 = vlog2.pop %v468
        %v1152 = vmul.f32 %v1151, 0.6931472
        %v1153 = vlog2.pop %v469
        %v1154 = vmul.f32 %v1153, 0.6931472
        %v1155 = vlog2.pop %v470
        %v1156 = vmul.f32 %v1155, 0.6931472
        %v1157 = vlog2.pop %v471
        %v1158 = vmul.f32 %v1157, 0.6931472
        %v1159 = vlog2.pop %v472
        %v1160 = vmul.f32 %v1159, 0.6931472
        %v1161 = vlog2.pop %v473
        %v1162 = vmul.f32 %v1161, 0.6931472
        %v1163 = vlog2.pop %v474
        %v1164 = vmul.f32 %v1163, 0.6931472
        %v1165 = vlog2.pop %v475
        %v1166 = vmul.f32 %v1165, 0.6931472
        %v1167 = vlog2.pop %v476
        %v1168 = vmul.f32 %v1167, 0.6931472
        %v1169 = vlog2.pop %v477
        %v1170 = vmul.f32 %v1169, 0.6931472
        %v1171 = vlog2.pop %v478
        %v1172 = vmul.f32 %v1171, 0.6931472
        %v1173 = vlog2.pop %v479
        %v1174 = vmul.f32 %v1173, 0.6931472
        %v1175 = vlog2.pop %v480
        %v1176 = vmul.f32 %v1175, 0.6931472
        %v1177 = vlog2.pop %v481
        %v1178 = vmul.f32 %v1177, 0.6931472
        %v1179 = vlog2.pop %v482
        %v1180 = vmul.f32 %v1179, 0.6931472
        %v1181 = vlog2.pop %v483
        %v1182 = vmul.f32 %v1181, 0.6931472
        %v1183 = vlog2.pop %v484
        %v1184 = vmul.f32 %v1183, 0.6931472
        %v1185 = vlog2.pop %v485
        %v1186 = vmul.f32 %v1185, 0.6931472
        %v1187 = vlog2.pop %v486
        %v1188 = vmul.f32 %v1187, 0.6931472
        %v1189 = vlog2.pop %v487
        %v1190 = vmul.f32 %v1189, 0.6931472
        %v1191 = vlog2.pop %v488
        %v1192 = vmul.f32 %v1191, 0.6931472
        %v1193 = vlog2.pop %v489
        %v1194 = vmul.f32 %v1193, 0.6931472
        %v1195 = vlog2.pop %v490
        %v1196 = vmul.f32 %v1195, 0.6931472
        %v1197 = vlog2.pop %v491
        %v1198 = vmul.f32 %v1197, 0.6931472
        %v1199 = vlog2.pop %v492
        %v1200 = vmul.f32 %v1199, 0.6931472
        %v1201 = vlog2.pop %v493
        %v1202 = vmul.f32 %v1201, 0.6931472
        %v1203 = vlog2.pop %v494
        %v1204 = vmul.f32 %v1203, 0.6931472
        %v1205 = vlog2.pop %v495
        %v1206 = vmul.f32 %v1205, 0.6931472
        %v1207 = vlog2.pop %v496
        %v1208 = vmul.f32 %v1207, 0.6931472
        %v1209 = vlog2.pop %v497
        %v1210 = vmul.f32 %v1209, 0.6931472
        %v1211 = vlog2.pop %v498
        %v1212 = vmul.f32 %v1211, 0.6931472
        %v1213 = vlog2.pop %v499
        %v1214 = vmul.f32 %v1213, 0.6931472
        %v1215 = vlog2.pop %v500
        %v1216 = vmul.f32 %v1215, 0.6931472
        %v1217 = vlog2.pop %v501
        %v1218 = vmul.f32 %v1217, 0.6931472
        %v1219 = vlog2.pop %v502
        %v1220 = vmul.f32 %v1219, 0.6931472
        %v1221 = vlog2.pop %v503
        %v1222 = vmul.f32 %v1221, 0.6931472
        %v1223 = vlog2.pop %v504
        %v1224 = vmul.f32 %v1223, 0.6931472
        %v1225 = vlog2.pop %v505
        %v1226 = vmul.f32 %v1225, 0.6931472
        %v1227 = vlog2.pop %v506
        %v1228 = vmul.f32 %v1227, 0.6931472
        %v1229 = vlog2.pop %v507
        %v1230 = vmul.f32 %v1229, 0.6931472
        %v1231 = vlog2.pop %v508
        %v1232 = vmul.f32 %v1231, 0.6931472
        %v1233 = vlog2.pop %v509
        %v1234 = vmul.f32 %v1233, 0.6931472
        %v1235 = vlog2.pop %v510
        %v1236 = vmul.f32 %v1235, 0.6931472
        %v1237 = vlog2.pop %v511
        %v1238 = vmul.f32 %v1237, 0.6931472
        %v1239 = vlog2.pop %v512
        %v1240 = vmul.f32 %v1239, 0.6931472
        %v1241 = vlog2.pop %v513
        %v1242 = vmul.f32 %v1241, 0.6931472
        %v1243 = vlog2.pop %v514
        %v1244 = vmul.f32 %v1243, 0.6931472
        %v1245 = vlog2.pop %v515
        %v1246 = vmul.f32 %v1245, 0.6931472
        %v1247 = vlog2.pop %v516
        %v1248 = vmul.f32 %v1247, 0.6931472
        %v1249 = vlog2.pop %v517
        %v1250 = vmul.f32 %v1249, 0.6931472
        %v1251 = vlog2.pop %v518
        %v1252 = vmul.f32 %v1251, 0.6931472
        %v1253 = vlog2.pop %v519
        %v1254 = vmul.f32 %v1253, 0.6931472
        %v1255 = vlog2.pop %v520
        %v1256 = vmul.f32 %v1255, 0.6931472
        %v1257 = vlog2.pop %v521
        %v1258 = vmul.f32 %v1257, 0.6931472
        %v1259 = vlog2.pop %v522
        %v1260 = vmul.f32 %v1259, 0.6931472
        %v1261 = vlog2.pop %v523
        %v1262 = vmul.f32 %v1261, 0.6931472
        %v1263 = vlog2.pop %v524
        %v1264 = vmul.f32 %v1263, 0.6931472
        %v1265 = vlog2.pop %v525
        %v1266 = vmul.f32 %v1265, 0.6931472
        %v1267 = vlog2.pop %v526
        %v1268 = vmul.f32 %v1267, 0.6931472
        %v1269 = vlog2.pop %v527
        %v1270 = vmul.f32 %v1269, 0.6931472
        %v1271 = vlog2.pop %v528
        %v1272 = vmul.f32 %v1271, 0.6931472
        %v1273 = vlog2.pop %v529
        %v1274 = vmul.f32 %v1273, 0.6931472
        %v1275 = vlog2.pop %v530
        %v1276 = vmul.f32 %v1275, 0.6931472
        %v1277 = vlog2.pop %v531
        %v1278 = vmul.f32 %v1277, 0.6931472
        %v1279 = vlog2.pop %v532
        %v1280 = vmul.f32 %v1279, 0.6931472
        %v1281 = vlog2.pop %v533
        %v1282 = vmul.f32 %v1281, 0.6931472
        %v1283 = vlog2.pop %v534
        %v1284 = vmul.f32 %v1283, 0.6931472
        %v1285 = vlog2.pop %v535
        %v1286 = vmul.f32 %v1285, 0.6931472
        %v1287 = vlog2.pop %v536
        %v1288 = vmul.f32 %v1287, 0.6931472
        %v1289 = vlog2.pop %v537
        %v1290 = vmul.f32 %v1289, 0.6931472
        %v1291 = vlog2.pop %v538
        %v1292 = vmul.f32 %v1291, 0.6931472
        %v1293 = vlog2.pop %v539
        %v1294 = vmul.f32 %v1293, 0.6931472
        %v1295 = vlog2.pop %v540
        %v1296 = vmul.f32 %v1295, 0.6931472
        %v1297 = vlog2.pop %v541
        %v1298 = vmul.f32 %v1297, 0.6931472
        %v1299 = vlog2.pop %v542
        %v1300 = vmul.f32 %v1299, 0.6931472
        %v1301 = vlog2.pop %v543
        %v1302 = vmul.f32 %v1301, 0.6931472
        %v1303 = vlog2.pop %v544
        %v1304 = vmul.f32 %v1303, 0.6931472
        %v1305 = vlog2.pop %v545
        %v1306 = vmul.f32 %v1305, 0.6931472
        %v1307 = vlog2.pop %v546
        %v1308 = vmul.f32 %v1307, 0.6931472
        %v1309 = vlog2.pop %v547
        %v1310 = vmul.f32 %v1309, 0.6931472
        %v1311 = vlog2.pop %v548
        %v1312 = vmul.f32 %v1311, 0.6931472
        %v1313 = vlog2.pop %v549
        %v1314 = vmul.f32 %v1313, 0.6931472
        %v1315 = vlog2.pop %v550
        %v1316 = vmul.f32 %v1315, 0.6931472
        %v1317 = vlog2.pop %v551
        %v1318 = vmul.f32 %v1317, 0.6931472
        %v1319 = vlog2.pop %v552
        %v1320 = vmul.f32 %v1319, 0.6931472
        %v1321 = vlog2.pop %v553
        %v1322 = vmul.f32 %v1321, 0.6931472
        %v1323 = vlog2.pop %v554
        %v1324 = vmul.f32 %v1323, 0.6931472
        %v1325 = vlog2.pop %v555
        %v1326 = vmul.f32 %v1325, 0.6931472
        %v1327 = vlog2.pop %v556
        %v1328 = vmul.f32 %v1327, 0.6931472
        %v1329 = vlog2.pop %v557
        %v1330 = vmul.f32 %v1329, 0.6931472
        %v1331 = vlog2.pop %v558
        %v1332 = vmul.f32 %v1331, 0.6931472
        %v1333 = vlog2.pop %v559
        %v1334 = vmul.f32 %v1333, 0.6931472
        %v1335 = vlog2.pop %v560
        %v1336 = vmul.f32 %v1335, 0.6931472
        %v1337 = vlog2.pop %v561
        %v1338 = vmul.f32 %v1337, 0.6931472
        %v1339 = vlog2.pop %v562
        %v1340 = vmul.f32 %v1339, 0.6931472
        %v1341 = vlog2.pop %v563
        %v1342 = vmul.f32 %v1341, 0.6931472
        %v1343 = vlog2.pop %v564
        %v1344 = vmul.f32 %v1343, 0.6931472
        %v1345 = vlog2.pop %v565
        %v1346 = vmul.f32 %v1345, 0.6931472
        %v1347 = vlog2.pop %v566
        %v1348 = vmul.f32 %v1347, 0.6931472
        %v1349 = vlog2.pop %v567
        %v1350 = vmul.f32 %v1349, 0.6931472
        %v1351 = vlog2.pop %v568
        %v1352 = vmul.f32 %v1351, 0.6931472
        %v1353 = vlog2.pop %v569
        %v1354 = vmul.f32 %v1353, 0.6931472
        %v1355 = vlog2.pop %v570
        %v1356 = vmul.f32 %v1355, 0.6931472
        %v1357 = vlog2.pop %v571
        %v1358 = vmul.f32 %v1357, 0.6931472
        %v1359 = vlog2.pop %v572
        %v1360 = vmul.f32 %v1359, 0.6931472
        %v1361 = vlog2.pop %v573
        %v1362 = vmul.f32 %v1361, 0.6931472
        %v1363 = vlog2.pop %v574
        %v1364 = vmul.f32 %v1363, 0.6931472
        %v1365 = vlog2.pop %v575
        %v1366 = vmul.f32 %v1365, 0.6931472
        %v1367 = vlog2.pop %v576
        %v1368 = vmul.f32 %v1367, 0.6931472
        %v1369 = vlog2.pop %v577
        %v1370 = vmul.f32 %v1369, 0.6931472
        %v1371 = vlog2.pop %v578
        %v1372 = vmul.f32 %v1371, 0.6931472
        %v1373 = vlog2.pop %v579
        %v1374 = vmul.f32 %v1373, 0.6931472
        %v1375 = vlog2.pop %v580
        %v1376 = vmul.f32 %v1375, 0.6931472
        %v1377 = vlog2.pop %v581
        %v1378 = vmul.f32 %v1377, 0.6931472
        %v1379 = vlog2.pop %v582
        %v1380 = vmul.f32 %v1379, 0.6931472
        %v1381 = vlog2.pop %v583
        %v1382 = vmul.f32 %v1381, 0.6931472
        %v1383 = vlog2.pop %v584
        %v1384 = vmul.f32 %v1383, 0.6931472
        %v1385 = vlog2.pop %v585
        %v1386 = vmul.f32 %v1385, 0.6931472
        %v1387 = vlog2.pop %v586
        %v1388 = vmul.f32 %v1387, 0.6931472
        %v1389 = vlog2.pop %v587
        %v1390 = vmul.f32 %v1389, 0.6931472
        %v1391 = vlog2.pop %v588
        %v1392 = vmul.f32 %v1391, 0.6931472
        %v1393 = vlog2.pop %v589
        %v1394 = vmul.f32 %v1393, 0.6931472
        %v1395 = vlog2.pop %v590
        %v1396 = vmul.f32 %v1395, 0.6931472
        %v1397 = vlog2.pop %v591
        %v1398 = vmul.f32 %v1397, 0.6931472
        %v1399 = vlog2.pop %v592
        %v1400 = vmul.f32 %v1399, 0.6931472
        %v1401 = vlog2.pop %v593
        %v1402 = vmul.f32 %v1401, 0.6931472
        %v1403 = vlog2.pop %v594
        %v1404 = vmul.f32 %v1403, 0.6931472
        %v1405 = vlog2.pop %v595
        %v1406 = vmul.f32 %v1405, 0.6931472
        %v1407 = vlog2.pop %v596
        %v1408 = vmul.f32 %v1407, 0.6931472
        %v1409 = vlog2.pop %v597
        %v1410 = vmul.f32 %v1409, 0.6931472
        %v1411 = vlog2.pop %v598
        %v1412 = vmul.f32 %v1411, 0.6931472
        %v1413 = vlog2.pop %v599
        %v1414 = vmul.f32 %v1413, 0.6931472
        %v1415 = vlog2.pop %v600
        %v1416 = vmul.f32 %v1415, 0.6931472
        %v1417 = vlog2.pop %v601
        %v1418 = vmul.f32 %v1417, 0.6931472
        %v1419 = vlog2.pop %v602
        %v1420 = vmul.f32 %v1419, 0.6931472
        %v1421 = vlog2.pop %v603
        %v1422 = vmul.f32 %v1421, 0.6931472
        %v1423 = vlog2.pop %v604
        %v1424 = vmul.f32 %v1423, 0.6931472
        %v1425 = vlog2.pop %v605
        %v1426 = vmul.f32 %v1425, 0.6931472
        %v1427 = vlog2.pop %v606
        %v1428 = vmul.f32 %v1427, 0.6931472
        %v1429 = vlog2.pop %v607
        %v1430 = vmul.f32 %v1429, 0.6931472
        %v1431 = vlog2.pop %v608
        %v1432 = vmul.f32 %v1431, 0.6931472
        %v1433 = vlog2.pop %v609
        %v1434 = vmul.f32 %v1433, 0.6931472
        %v1435 = vlog2.pop %v610
        %v1436 = vmul.f32 %v1435, 0.6931472
        %v1437 = vlog2.pop %v611
        %v1438 = vmul.f32 %v1437, 0.6931472
        %v1439 = vlog2.pop %v612
        %v1440 = vmul.f32 %v1439, 0.6931472
        %v1441 = vlog2.pop %v613
        %v1442 = vmul.f32 %v1441, 0.6931472
        %v1443 = vlog2.pop %v614
        %v1444 = vmul.f32 %v1443, 0.6931472
        %v1445 = vlog2.pop %v615
        %v1446 = vmul.f32 %v1445, 0.6931472
        %v1447 = vlog2.pop %v616
        %v1448 = vmul.f32 %v1447, 0.6931472
        %v1449 = vlog2.pop %v617
        %v1450 = vmul.f32 %v1449, 0.6931472
        %v1451 = vlog2.pop %v618
        %v1452 = vmul.f32 %v1451, 0.6931472
        %v1453 = vlog2.pop %v619
        %v1454 = vmul.f32 %v1453, 0.6931472
        %v1455 = vlog2.pop %v620
        %v1456 = vmul.f32 %v1455, 0.6931472
        %v1457 = vlog2.pop %v621
        %v1458 = vmul.f32 %v1457, 0.6931472
        %v1459 = vlog2.pop %v622
        %v1460 = vmul.f32 %v1459, 0.6931472
        %v1461 = vlog2.pop %v623
        %v1462 = vmul.f32 %v1461, 0.6931472
        %v1463 = vlog2.pop %v624
        %v1464 = vmul.f32 %v1463, 0.6931472
        %v1465 = vlog2.pop %v625
        %v1466 = vmul.f32 %v1465, 0.6931472
        %v1467 = vlog2.pop %v626
        %v1468 = vmul.f32 %v1467, 0.6931472
        %v1469 = vlog2.pop %v627
        %v1470 = vmul.f32 %v1469, 0.6931472
        %v1471 = vlog2.pop %v628
        %v1472 = vmul.f32 %v1471, 0.6931472
        %v1473 = vlog2.pop %v629
        %v1474 = vmul.f32 %v1473, 0.6931472
        %v1475 = vlog2.pop %v630
        %v1476 = vmul.f32 %v1475, 0.6931472
        %v1477 = vlog2.pop %v631
        %v1478 = vmul.f32 %v1477, 0.6931472
        %v1479 = vlog2.pop %v632
        %v1480 = vmul.f32 %v1479, 0.6931472
        %v1481 = vlog2.pop %v633
        %v1482 = vmul.f32 %v1481, 0.6931472
        %v1483 = vlog2.pop %v634
        %v1484 = vmul.f32 %v1483, 0.6931472
        %v1485 = vlog2.pop %v635
        %v1486 = vmul.f32 %v1485, 0.6931472
        %v1487 = vlog2.pop %v636
        %v1488 = vmul.f32 %v1487, 0.6931472
        %v1489 = vlog2.pop %v637
        %v1490 = vmul.f32 %v1489, 0.6931472
        %v1491 = vlog2.pop %v638
        %v1492 = vmul.f32 %v1491, 0.6931472
        %v1493 = vlog2.pop %v639
        %v1494 = vmul.f32 %v1493, 0.6931472
        %v1495 = vlog2.pop %v640
        %v1496 = vmul.f32 %v1495, 0.6931472
        %v1497 = vlog2.pop %v641
        %v1498 = vmul.f32 %v1497, 0.6931472
        %v1499 = vlog2.pop %v642
        %v1500 = vmul.f32 %v1499, 0.6931472
        %v1501 = vlog2.pop %v643
        %v1502 = vmul.f32 %v1501, 0.6931472
        %v1503 = vlog2.pop %v644
        %v1504 = vmul.f32 %v1503, 0.6931472
        %v1505 = vlog2.pop %v645
        %v1506 = vmul.f32 %v1505, 0.6931472
        %v1507 = vlog2.pop %v646
        %v1508 = vmul.f32 %v1507, 0.6931472
        %v1509 = vlog2.pop %v647
        %v1510 = vmul.f32 %v1509, 0.6931472
        %v1511 = vlog2.pop %v648
        %v1512 = vmul.f32 %v1511, 0.6931472
        %v1513 = vlog2.pop %v649
        %v1514 = vmul.f32 %v1513, 0.6931472
        %v1515 = vlog2.pop %v650
        %v1516 = vmul.f32 %v1515, 0.6931472
        %v1517 = vlog2.pop %v651
        %v1518 = vmul.f32 %v1517, 0.6931472
        %v1519 = vlog2.pop %v652
        %v1520 = vmul.f32 %v1519, 0.6931472
        %v1521 = vlog2.pop %v653
        %v1522 = vmul.f32 %v1521, 0.6931472
        %v1523 = vlog2.pop %v654
        %v1524 = vmul.f32 %v1523, 0.6931472
        %v1525 = vlog2.pop %v655
        %v1526 = vmul.f32 %v1525, 0.6931472
        %v1527 = vlog2.pop %v656
        %v1528 = vmul.f32 %v1527, 0.6931472
        %v1529 = vlog2.pop %v657
        %v1530 = vmul.f32 %v1529, 0.6931472
        %v1531 = vlog2.pop %v658
        %v1532 = vmul.f32 %v1531, 0.6931472
        %v1533 = vlog2.pop %v659
        %v1534 = vmul.f32 %v1533, 0.6931472
        %v1535 = vlog2.pop %v660
        %v1536 = vmul.f32 %v1535, 0.6931472
        %v1537 = vlog2.pop %v661
        %v1538 = vmul.f32 %v1537, 0.6931472
        %v1539 = vlog2.pop %v662
        %v1540 = vmul.f32 %v1539, 0.6931472
        %v1541 = vlog2.pop %v663
        %v1542 = vmul.f32 %v1541, 0.6931472
        %v1543 = vlog2.pop %v664
        %v1544 = vmul.f32 %v1543, 0.6931472
        %v1545 = vlog2.pop %v665
        %v1546 = vmul.f32 %v1545, 0.6931472
        %v1547 = vlog2.pop %v666
        %v1548 = vmul.f32 %v1547, 0.6931472
        %v1549 = vlog2.pop %v667
        %v1550 = vmul.f32 %v1549, 0.6931472
        %v1551 = vlog2.pop %v668
        %v1552 = vmul.f32 %v1551, 0.6931472
        %v1553 = vlog2.pop %v669
        %v1554 = vmul.f32 %v1553, 0.6931472
        %v1555 = vlog2.pop %v670
        %v1556 = vmul.f32 %v1555, 0.6931472
        %v1557 = vlog2.pop %v671
        %v1558 = vmul.f32 %v1557, 0.6931472
        %v1559 = vlog2.pop %v672
        %v1560 = vmul.f32 %v1559, 0.6931472
        %v1561 = vlog2.pop %v673
        %v1562 = vmul.f32 %v1561, 0.6931472
        %v1563 = vlog2.pop %v674
        %v1564 = vmul.f32 %v1563, 0.6931472
        %v1565 = vlog2.pop %v675
        %v1566 = vmul.f32 %v1565, 0.6931472
        %v1567 = vlog2.pop %v676
        %v1568 = vmul.f32 %v1567, 0.6931472
        %v1569 = vlog2.pop %v677
        %v1570 = vmul.f32 %v1569, 0.6931472
        %v1571 = vlog2.pop %v678
        %v1572 = vmul.f32 %v1571, 0.6931472
        %v1573 = vlog2.pop %v679
        %v1574 = vmul.f32 %v1573, 0.6931472
        %v1575 = vlog2.pop %v680
        %v1576 = vmul.f32 %v1575, 0.6931472
        %v1577 = vlog2.pop %v681
        %v1578 = vmul.f32 %v1577, 0.6931472
        %v1579 = vlog2.pop %v682
        %v1580 = vmul.f32 %v1579, 0.6931472
        %v1581 = vmax.f32 %v1070, -100.0
        %v1582 = vmax.f32 %v1072, -100.0
        %v1583 = vmax.f32 %v1074, -100.0
        %v1584 = vmax.f32 %v1076, -100.0
        %v1585 = vmax.f32 %v1078, -100.0
        %v1586 = vmax.f32 %v1080, -100.0
        %v1587 = vmax.f32 %v1082, -100.0
        %v1588 = vmax.f32 %v1084, -100.0
        %v1589 = vmax.f32 %v1086, -100.0
        %v1590 = vmax.f32 %v1088, -100.0
        %v1591 = vmax.f32 %v1090, -100.0
        %v1592 = vmax.f32 %v1092, -100.0
        %v1593 = vmax.f32 %v1094, -100.0
        %v1594 = vmax.f32 %v1096, -100.0
        %v1595 = vmax.f32 %v1098, -100.0
        %v1596 = vmax.f32 %v1100, -100.0
        %v1597 = vmax.f32 %v1102, -100.0
        %v1598 = vmax.f32 %v1104, -100.0
        %v1599 = vmax.f32 %v1106, -100.0
        %v1600 = vmax.f32 %v1108, -100.0
        %v1601 = vmax.f32 %v1110, -100.0
        %v1602 = vmax.f32 %v1112, -100.0
        %v1603 = vmax.f32 %v1114, -100.0
        %v1604 = vmax.f32 %v1116, -100.0
        %v1605 = vmax.f32 %v1118, -100.0
        %v1606 = vmax.f32 %v1120, -100.0
        %v1607 = vmax.f32 %v1122, -100.0
        %v1608 = vmax.f32 %v1124, -100.0
        %v1609 = vmax.f32 %v1126, -100.0
        %v1610 = vmax.f32 %v1128, -100.0
        %v1611 = vmax.f32 %v1130, -100.0
        %v1612 = vmax.f32 %v1132, -100.0
        %v1613 = vmax.f32 %v1134, -100.0
        %v1614 = vmax.f32 %v1136, -100.0
        %v1615 = vmax.f32 %v1138, -100.0
        %v1616 = vmax.f32 %v1140, -100.0
        %v1617 = vmax.f32 %v1142, -100.0
        %v1618 = vmax.f32 %v1144, -100.0
        %v1619 = vmax.f32 %v1146, -100.0
        %v1620 = vmax.f32 %v1148, -100.0
        %v1621 = vmax.f32 %v1150, -100.0
        %v1622 = vmax.f32 %v1152, -100.0
        %v1623 = vmax.f32 %v1154, -100.0
        %v1624 = vmax.f32 %v1156, -100.0
        %v1625 = vmax.f32 %v1158, -100.0
        %v1626 = vmax.f32 %v1160, -100.0
        %v1627 = vmax.f32 %v1162, -100.0
        %v1628 = vmax.f32 %v1164, -100.0
        %v1629 = vmax.f32 %v1166, -100.0
        %v1630 = vmax.f32 %v1168, -100.0
        %v1631 = vmax.f32 %v1170, -100.0
        %v1632 = vmax.f32 %v1172, -100.0
        %v1633 = vmax.f32 %v1174, -100.0
        %v1634 = vmax.f32 %v1176, -100.0
        %v1635 = vmax.f32 %v1178, -100.0
        %v1636 = vmax.f32 %v1180, -100.0
        %v1637 = vmax.f32 %v1182, -100.0
        %v1638 = vmax.f32 %v1184, -100.0
        %v1639 = vmax.f32 %v1186, -100.0
        %v1640 = vmax.f32 %v1188, -100.0
        %v1641 = vmax.f32 %v1190, -100.0
        %v1642 = vmax.f32 %v1192, -100.0
        %v1643 = vmax.f32 %v1194, -100.0
        %v1644 = vmax.f32 %v1196, -100.0
        %v1645 = vmax.f32 %v1198, -100.0
        %v1646 = vmax.f32 %v1200, -100.0
        %v1647 = vmax.f32 %v1202, -100.0
        %v1648 = vmax.f32 %v1204, -100.0
        %v1649 = vmax.f32 %v1206, -100.0
        %v1650 = vmax.f32 %v1208, -100.0
        %v1651 = vmax.f32 %v1210, -100.0
        %v1652 = vmax.f32 %v1212, -100.0
        %v1653 = vmax.f32 %v1214, -100.0
        %v1654 = vmax.f32 %v1216, -100.0
        %v1655 = vmax.f32 %v1218, -100.0
        %v1656 = vmax.f32 %v1220, -100.0
        %v1657 = vmax.f32 %v1222, -100.0
        %v1658 = vmax.f32 %v1224, -100.0
        %v1659 = vmax.f32 %v1226, -100.0
        %v1660 = vmax.f32 %v1228, -100.0
        %v1661 = vmax.f32 %v1230, -100.0
        %v1662 = vmax.f32 %v1232, -100.0
        %v1663 = vmax.f32 %v1234, -100.0
        %v1664 = vmax.f32 %v1236, -100.0
        %v1665 = vmax.f32 %v1238, -100.0
        %v1666 = vmax.f32 %v1240, -100.0
        %v1667 = vmax.f32 %v1242, -100.0
        %v1668 = vmax.f32 %v1244, -100.0
        %v1669 = vmax.f32 %v1246, -100.0
        %v1670 = vmax.f32 %v1248, -100.0
        %v1671 = vmax.f32 %v1250, -100.0
        %v1672 = vmax.f32 %v1252, -100.0
        %v1673 = vmax.f32 %v1254, -100.0
        %v1674 = vmax.f32 %v1256, -100.0
        %v1675 = vmax.f32 %v1258, -100.0
        %v1676 = vmax.f32 %v1260, -100.0
        %v1677 = vmax.f32 %v1262, -100.0
        %v1678 = vmax.f32 %v1264, -100.0
        %v1679 = vmax.f32 %v1266, -100.0
        %v1680 = vmax.f32 %v1268, -100.0
        %v1681 = vmax.f32 %v1270, -100.0
        %v1682 = vmax.f32 %v1272, -100.0
        %v1683 = vmax.f32 %v1274, -100.0
        %v1684 = vmax.f32 %v1276, -100.0
        %v1685 = vmax.f32 %v1278, -100.0
        %v1686 = vmax.f32 %v1280, -100.0
        %v1687 = vmax.f32 %v1282, -100.0
        %v1688 = vmax.f32 %v1284, -100.0
        %v1689 = vmax.f32 %v1286, -100.0
        %v1690 = vmax.f32 %v1288, -100.0
        %v1691 = vmax.f32 %v1290, -100.0
        %v1692 = vmax.f32 %v1292, -100.0
        %v1693 = vmax.f32 %v1294, -100.0
        %v1694 = vmax.f32 %v1296, -100.0
        %v1695 = vmax.f32 %v1298, -100.0
        %v1696 = vmax.f32 %v1300, -100.0
        %v1697 = vmax.f32 %v1302, -100.0
        %v1698 = vmax.f32 %v1304, -100.0
        %v1699 = vmax.f32 %v1306, -100.0
        %v1700 = vmax.f32 %v1308, -100.0
        %v1701 = vmax.f32 %v1310, -100.0
        %v1702 = vmax.f32 %v1312, -100.0
        %v1703 = vmax.f32 %v1314, -100.0
        %v1704 = vmax.f32 %v1316, -100.0
        %v1705 = vmax.f32 %v1318, -100.0
        %v1706 = vmax.f32 %v1320, -100.0
        %v1707 = vmax.f32 %v1322, -100.0
        %v1708 = vmax.f32 %v1324, -100.0
        %v1709 = vmax.f32 %v1326, -100.0
        %v1710 = vmax.f32 %v1328, -100.0
        %v1711 = vmax.f32 %v1330, -100.0
        %v1712 = vmax.f32 %v1332, -100.0
        %v1713 = vmax.f32 %v1334, -100.0
        %v1714 = vmax.f32 %v1336, -100.0
        %v1715 = vmax.f32 %v1338, -100.0
        %v1716 = vmax.f32 %v1340, -100.0
        %v1717 = vmax.f32 %v1342, -100.0
        %v1718 = vmax.f32 %v1344, -100.0
        %v1719 = vmax.f32 %v1346, -100.0
        %v1720 = vmax.f32 %v1348, -100.0
        %v1721 = vmax.f32 %v1350, -100.0
        %v1722 = vmax.f32 %v1352, -100.0
        %v1723 = vmax.f32 %v1354, -100.0
        %v1724 = vmax.f32 %v1356, -100.0
        %v1725 = vmax.f32 %v1358, -100.0
        %v1726 = vmax.f32 %v1360, -100.0
        %v1727 = vmax.f32 %v1362, -100.0
        %v1728 = vmax.f32 %v1364, -100.0
        %v1729 = vmax.f32 %v1366, -100.0
        %v1730 = vmax.f32 %v1368, -100.0
        %v1731 = vmax.f32 %v1370, -100.0
        %v1732 = vmax.f32 %v1372, -100.0
        %v1733 = vmax.f32 %v1374, -100.0
        %v1734 = vmax.f32 %v1376, -100.0
        %v1735 = vmax.f32 %v1378, -100.0
        %v1736 = vmax.f32 %v1380, -100.0
        %v1737 = vmax.f32 %v1382, -100.0
        %v1738 = vmax.f32 %v1384, -100.0
        %v1739 = vmax.f32 %v1386, -100.0
        %v1740 = vmax.f32 %v1388, -100.0
        %v1741 = vmax.f32 %v1390, -100.0
        %v1742 = vmax.f32 %v1392, -100.0
        %v1743 = vmax.f32 %v1394, -100.0
        %v1744 = vmax.f32 %v1396, -100.0
        %v1745 = vmax.f32 %v1398, -100.0
        %v1746 = vmax.f32 %v1400, -100.0
        %v1747 = vmax.f32 %v1402, -100.0
        %v1748 = vmax.f32 %v1404, -100.0
        %v1749 = vmax.f32 %v1406, -100.0
        %v1750 = vmax.f32 %v1408, -100.0
        %v1751 = vmax.f32 %v1410, -100.0
        %v1752 = vmax.f32 %v1412, -100.0
        %v1753 = vmax.f32 %v1414, -100.0
        %v1754 = vmax.f32 %v1416, -100.0
        %v1755 = vmax.f32 %v1418, -100.0
        %v1756 = vmax.f32 %v1420, -100.0
        %v1757 = vmax.f32 %v1422, -100.0
        %v1758 = vmax.f32 %v1424, -100.0
        %v1759 = vmax.f32 %v1426, -100.0
        %v1760 = vmax.f32 %v1428, -100.0
        %v1761 = vmax.f32 %v1430, -100.0
        %v1762 = vmax.f32 %v1432, -100.0
        %v1763 = vmax.f32 %v1434, -100.0
        %v1764 = vmax.f32 %v1436, -100.0
        %v1765 = vmax.f32 %v1438, -100.0
        %v1766 = vmax.f32 %v1440, -100.0
        %v1767 = vmax.f32 %v1442, -100.0
        %v1768 = vmax.f32 %v1444, -100.0
        %v1769 = vmax.f32 %v1446, -100.0
        %v1770 = vmax.f32 %v1448, -100.0
        %v1771 = vmax.f32 %v1450, -100.0
        %v1772 = vmax.f32 %v1452, -100.0
        %v1773 = vmax.f32 %v1454, -100.0
        %v1774 = vmax.f32 %v1456, -100.0
        %v1775 = vmax.f32 %v1458, -100.0
        %v1776 = vmax.f32 %v1460, -100.0
        %v1777 = vmax.f32 %v1462, -100.0
        %v1778 = vmax.f32 %v1464, -100.0
        %v1779 = vmax.f32 %v1466, -100.0
        %v1780 = vmax.f32 %v1468, -100.0
        %v1781 = vmax.f32 %v1470, -100.0
        %v1782 = vmax.f32 %v1472, -100.0
        %v1783 = vmax.f32 %v1474, -100.0
        %v1784 = vmax.f32 %v1476, -100.0
        %v1785 = vmax.f32 %v1478, -100.0
        %v1786 = vmax.f32 %v1480, -100.0
        %v1787 = vmax.f32 %v1482, -100.0
        %v1788 = vmax.f32 %v1484, -100.0
        %v1789 = vmax.f32 %v1486, -100.0
        %v1790 = vmax.f32 %v1488, -100.0
        %v1791 = vmax.f32 %v1490, -100.0
        %v1792 = vmax.f32 %v1492, -100.0
        %v1793 = vmax.f32 %v1494, -100.0
        %v1794 = vmax.f32 %v1496, -100.0
        %v1795 = vmax.f32 %v1498, -100.0
        %v1796 = vmax.f32 %v1500, -100.0
        %v1797 = vmax.f32 %v1502, -100.0
        %v1798 = vmax.f32 %v1504, -100.0
        %v1799 = vmax.f32 %v1506, -100.0
        %v1800 = vmax.f32 %v1508, -100.0
        %v1801 = vmax.f32 %v1510, -100.0
        %v1802 = vmax.f32 %v1512, -100.0
        %v1803 = vmax.f32 %v1514, -100.0
        %v1804 = vmax.f32 %v1516, -100.0
        %v1805 = vmax.f32 %v1518, -100.0
        %v1806 = vmax.f32 %v1520, -100.0
        %v1807 = vmax.f32 %v1522, -100.0
        %v1808 = vmax.f32 %v1524, -100.0
        %v1809 = vmax.f32 %v1526, -100.0
        %v1810 = vmax.f32 %v1528, -100.0
        %v1811 = vmax.f32 %v1530, -100.0
        %v1812 = vmax.f32 %v1532, -100.0
        %v1813 = vmax.f32 %v1534, -100.0
        %v1814 = vmax.f32 %v1536, -100.0
        %v1815 = vmax.f32 %v1538, -100.0
        %v1816 = vmax.f32 %v1540, -100.0
        %v1817 = vmax.f32 %v1542, -100.0
        %v1818 = vmax.f32 %v1544, -100.0
        %v1819 = vmax.f32 %v1546, -100.0
        %v1820 = vmax.f32 %v1548, -100.0
        %v1821 = vmax.f32 %v1550, -100.0
        %v1822 = vmax.f32 %v1552, -100.0
        %v1823 = vmax.f32 %v1554, -100.0
        %v1824 = vmax.f32 %v1556, -100.0
        %v1825 = vmax.f32 %v1558, -100.0
        %v1826 = vmax.f32 %v1560, -100.0
        %v1827 = vmax.f32 %v1562, -100.0
        %v1828 = vmax.f32 %v1564, -100.0
        %v1829 = vmax.f32 %v1566, -100.0
        %v1830 = vmax.f32 %v1568, -100.0
        %v1831 = vmax.f32 %v1570, -100.0
        %v1832 = vmax.f32 %v1572, -100.0
        %v1833 = vmax.f32 %v1574, -100.0
        %v1834 = vmax.f32 %v1576, -100.0
        %v1835 = vmax.f32 %v1578, -100.0
        %v1836 = vmax.f32 %v1580, -100.0
        %v1837 = vsub.f32 1.0, %v427
        %v1838 = vsub.f32 1.0, %v428
        %v1839 = vsub.f32 1.0, %v429
        %v1840 = vsub.f32 1.0, %v430
        %v1841 = vsub.f32 1.0, %v431
        %v1842 = vsub.f32 1.0, %v432
        %v1843 = vsub.f32 1.0, %v433
        %v1844 = vsub.f32 1.0, %v434
        %v1845 = vsub.f32 1.0, %v435
        %v1846 = vsub.f32 1.0, %v436
        %v1847 = vsub.f32 1.0, %v437
        %v1848 = vsub.f32 1.0, %v438
        %v1849 = vsub.f32 1.0, %v439
        %v1850 = vsub.f32 1.0, %v440
        %v1851 = vsub.f32 1.0, %v441
        %v1852 = vsub.f32 1.0, %v442
        %v1853 = vsub.f32 1.0, %v443
        %v1854 = vsub.f32 1.0, %v444
        %v1855 = vsub.f32 1.0, %v445
        %v1856 = vsub.f32 1.0, %v446
        %v1857 = vsub.f32 1.0, %v447
        %v1858 = vsub.f32 1.0, %v448
        %v1859 = vsub.f32 1.0, %v449
        %v1860 = vsub.f32 1.0, %v450
        %v1861 = vsub.f32 1.0, %v451
        %v1862 = vsub.f32 1.0, %v452
        %v1863 = vsub.f32 1.0, %v453
        %v1864 = vsub.f32 1.0, %v454
        %v1865 = vsub.f32 1.0, %v455
        %v1866 = vsub.f32 1.0, %v456
        %v1867 = vsub.f32 1.0, %v457
        %v1868 = vsub.f32 1.0, %v458
        %v1869 = vsub.f32 1.0, %v459
        %v1870 = vsub.f32 1.0, %v460
        %v1871 = vsub.f32 1.0, %v461
        %v1872 = vsub.f32 1.0, %v462
        %v1873 = vsub.f32 1.0, %v463
        %v1874 = vsub.f32 1.0, %v464
        %v1875 = vsub.f32 1.0, %v465
        %v1876 = vsub.f32 1.0, %v466
        %v1877 = vsub.f32 1.0, %v467
        %v1878 = vsub.f32 1.0, %v468
        %v1879 = vsub.f32 1.0, %v469
        %v1880 = vsub.f32 1.0, %v470
        %v1881 = vsub.f32 1.0, %v471
        %v1882 = vsub.f32 1.0, %v472
        %v1883 = vsub.f32 1.0, %v473
        %v1884 = vsub.f32 1.0, %v474
        %v1885 = vsub.f32 1.0, %v475
        %v1886 = vsub.f32 1.0, %v476
        %v1887 = vsub.f32 1.0, %v477
        %v1888 = vsub.f32 1.0, %v478
        %v1889 = vsub.f32 1.0, %v479
        %v1890 = vsub.f32 1.0, %v480
        %v1891 = vsub.f32 1.0, %v481
        %v1892 = vsub.f32 1.0, %v482
        %v1893 = vsub.f32 1.0, %v483
        %v1894 = vsub.f32 1.0, %v484
        %v1895 = vsub.f32 1.0, %v485
        %v1896 = vsub.f32 1.0, %v486
        %v1897 = vsub.f32 1.0, %v487
        %v1898 = vsub.f32 1.0, %v488
        %v1899 = vsub.f32 1.0, %v489
        %v1900 = vsub.f32 1.0, %v490
        %v1901 = vsub.f32 1.0, %v491
        %v1902 = vsub.f32 1.0, %v492
        %v1903 = vsub.f32 1.0, %v493
        %v1904 = vsub.f32 1.0, %v494
        %v1905 = vsub.f32 1.0, %v495
        %v1906 = vsub.f32 1.0, %v496
        %v1907 = vsub.f32 1.0, %v497
        %v1908 = vsub.f32 1.0, %v498
        %v1909 = vsub.f32 1.0, %v499
        %v1910 = vsub.f32 1.0, %v500
        %v1911 = vsub.f32 1.0, %v501
        %v1912 = vsub.f32 1.0, %v502
        %v1913 = vsub.f32 1.0, %v503
        %v1914 = vsub.f32 1.0, %v504
        %v1915 = vsub.f32 1.0, %v505
        %v1916 = vsub.f32 1.0, %v506
        %v1917 = vsub.f32 1.0, %v507
        %v1918 = vsub.f32 1.0, %v508
        %v1919 = vsub.f32 1.0, %v509
        %v1920 = vsub.f32 1.0, %v510
        %v1921 = vsub.f32 1.0, %v511
        %v1922 = vsub.f32 1.0, %v512
        %v1923 = vsub.f32 1.0, %v513
        %v1924 = vsub.f32 1.0, %v514
        %v1925 = vsub.f32 1.0, %v515
        %v1926 = vsub.f32 1.0, %v516
        %v1927 = vsub.f32 1.0, %v517
        %v1928 = vsub.f32 1.0, %v518
        %v1929 = vsub.f32 1.0, %v519
        %v1930 = vsub.f32 1.0, %v520
        %v1931 = vsub.f32 1.0, %v521
        %v1932 = vsub.f32 1.0, %v522
        %v1933 = vsub.f32 1.0, %v523
        %v1934 = vsub.f32 1.0, %v524
        %v1935 = vsub.f32 1.0, %v525
        %v1936 = vsub.f32 1.0, %v526
        %v1937 = vsub.f32 1.0, %v527
        %v1938 = vsub.f32 1.0, %v528
        %v1939 = vsub.f32 1.0, %v529
        %v1940 = vsub.f32 1.0, %v530
        %v1941 = vsub.f32 1.0, %v531
        %v1942 = vsub.f32 1.0, %v532
        %v1943 = vsub.f32 1.0, %v533
        %v1944 = vsub.f32 1.0, %v534
        %v1945 = vsub.f32 1.0, %v535
        %v1946 = vsub.f32 1.0, %v536
        %v1947 = vsub.f32 1.0, %v537
        %v1948 = vsub.f32 1.0, %v538
        %v1949 = vsub.f32 1.0, %v539
        %v1950 = vsub.f32 1.0, %v540
        %v1951 = vsub.f32 1.0, %v541
        %v1952 = vsub.f32 1.0, %v542
        %v1953 = vsub.f32 1.0, %v543
        %v1954 = vsub.f32 1.0, %v544
        %v1955 = vsub.f32 1.0, %v545
        %v1956 = vsub.f32 1.0, %v546
        %v1957 = vsub.f32 1.0, %v547
        %v1958 = vsub.f32 1.0, %v548
        %v1959 = vsub.f32 1.0, %v549
        %v1960 = vsub.f32 1.0, %v550
        %v1961 = vsub.f32 1.0, %v551
        %v1962 = vsub.f32 1.0, %v552
        %v1963 = vsub.f32 1.0, %v553
        %v1964 = vsub.f32 1.0, %v554
        %v1965 = vsub.f32 1.0, %v555
        %v1966 = vsub.f32 1.0, %v556
        %v1967 = vsub.f32 1.0, %v557
        %v1968 = vsub.f32 1.0, %v558
        %v1969 = vsub.f32 1.0, %v559
        %v1970 = vsub.f32 1.0, %v560
        %v1971 = vsub.f32 1.0, %v561
        %v1972 = vsub.f32 1.0, %v562
        %v1973 = vsub.f32 1.0, %v563
        %v1974 = vsub.f32 1.0, %v564
        %v1975 = vsub.f32 1.0, %v565
        %v1976 = vsub.f32 1.0, %v566
        %v1977 = vsub.f32 1.0, %v567
        %v1978 = vsub.f32 1.0, %v568
        %v1979 = vsub.f32 1.0, %v569
        %v1980 = vsub.f32 1.0, %v570
        %v1981 = vsub.f32 1.0, %v571
        %v1982 = vsub.f32 1.0, %v572
        %v1983 = vsub.f32 1.0, %v573
        %v1984 = vsub.f32 1.0, %v574
        %v1985 = vsub.f32 1.0, %v575
        %v1986 = vsub.f32 1.0, %v576
        %v1987 = vsub.f32 1.0, %v577
        %v1988 = vsub.f32 1.0, %v578
        %v1989 = vsub.f32 1.0, %v579
        %v1990 = vsub.f32 1.0, %v580
        %v1991 = vsub.f32 1.0, %v581
        %v1992 = vsub.f32 1.0, %v582
        %v1993 = vsub.f32 1.0, %v583
        %v1994 = vsub.f32 1.0, %v584
        %v1995 = vsub.f32 1.0, %v585
        %v1996 = vsub.f32 1.0, %v586
        %v1997 = vsub.f32 1.0, %v587
        %v1998 = vsub.f32 1.0, %v588
        %v1999 = vsub.f32 1.0, %v589
        %v2000 = vsub.f32 1.0, %v590
        %v2001 = vsub.f32 1.0, %v591
        %v2002 = vsub.f32 1.0, %v592
        %v2003 = vsub.f32 1.0, %v593
        %v2004 = vsub.f32 1.0, %v594
        %v2005 = vsub.f32 1.0, %v595
        %v2006 = vsub.f32 1.0, %v596
        %v2007 = vsub.f32 1.0, %v597
        %v2008 = vsub.f32 1.0, %v598
        %v2009 = vsub.f32 1.0, %v599
        %v2010 = vsub.f32 1.0, %v600
        %v2011 = vsub.f32 1.0, %v601
        %v2012 = vsub.f32 1.0, %v602
        %v2013 = vsub.f32 1.0, %v603
        %v2014 = vsub.f32 1.0, %v604
        %v2015 = vsub.f32 1.0, %v605
        %v2016 = vsub.f32 1.0, %v606
        %v2017 = vsub.f32 1.0, %v607
        %v2018 = vsub.f32 1.0, %v608
        %v2019 = vsub.f32 1.0, %v609
        %v2020 = vsub.f32 1.0, %v610
        %v2021 = vsub.f32 1.0, %v611
        %v2022 = vsub.f32 1.0, %v612
        %v2023 = vsub.f32 1.0, %v613
        %v2024 = vsub.f32 1.0, %v614
        %v2025 = vsub.f32 1.0, %v615
        %v2026 = vsub.f32 1.0, %v616
        %v2027 = vsub.f32 1.0, %v617
        %v2028 = vsub.f32 1.0, %v618
        %v2029 = vsub.f32 1.0, %v619
        %v2030 = vsub.f32 1.0, %v620
        %v2031 = vsub.f32 1.0, %v621
        %v2032 = vsub.f32 1.0, %v622
        %v2033 = vsub.f32 1.0, %v623
        %v2034 = vsub.f32 1.0, %v624
        %v2035 = vsub.f32 1.0, %v625
        %v2036 = vsub.f32 1.0, %v626
        %v2037 = vsub.f32 1.0, %v627
        %v2038 = vsub.f32 1.0, %v628
        %v2039 = vsub.f32 1.0, %v629
        %v2040 = vsub.f32 1.0, %v630
        %v2041 = vsub.f32 1.0, %v631
        %v2042 = vsub.f32 1.0, %v632
        %v2043 = vsub.f32 1.0, %v633
        %v2044 = vsub.f32 1.0, %v634
        %v2045 = vsub.f32 1.0, %v635
        %v2046 = vsub.f32 1.0, %v636
        %v2047 = vsub.f32 1.0, %v637
        %v2048 = vsub.f32 1.0, %v638
        %v2049 = vsub.f32 1.0, %v639
        %v2050 = vsub.f32 1.0, %v640
        %v2051 = vsub.f32 1.0, %v641
        %v2052 = vsub.f32 1.0, %v642
        %v2053 = vsub.f32 1.0, %v643
        %v2054 = vsub.f32 1.0, %v644
        %v2055 = vsub.f32 1.0, %v645
        %v2056 = vsub.f32 1.0, %v646
        %v2057 = vsub.f32 1.0, %v647
        %v2058 = vsub.f32 1.0, %v648
        %v2059 = vsub.f32 1.0, %v649
        %v2060 = vsub.f32 1.0, %v650
        %v2061 = vsub.f32 1.0, %v651
        %v2062 = vsub.f32 1.0, %v652
        %v2063 = vsub.f32 1.0, %v653
        %v2064 = vsub.f32 1.0, %v654
        %v2065 = vsub.f32 1.0, %v655
        %v2066 = vsub.f32 1.0, %v656
        %v2067 = vsub.f32 1.0, %v657
        %v2068 = vsub.f32 1.0, %v658
        %v2069 = vsub.f32 1.0, %v659
        %v2070 = vsub.f32 1.0, %v660
        %v2071 = vsub.f32 1.0, %v661
        %v2072 = vsub.f32 1.0, %v662
        %v2073 = vsub.f32 1.0, %v663
        %v2074 = vsub.f32 1.0, %v664
        %v2075 = vsub.f32 1.0, %v665
        %v2076 = vsub.f32 1.0, %v666
        %v2077 = vsub.f32 1.0, %v667
        %v2078 = vsub.f32 1.0, %v668
        %v2079 = vsub.f32 1.0, %v669
        %v2080 = vsub.f32 1.0, %v670
        %v2081 = vsub.f32 1.0, %v671
        %v2082 = vsub.f32 1.0, %v672
        %v2083 = vsub.f32 1.0, %v673
        %v2084 = vsub.f32 1.0, %v674
        %v2085 = vsub.f32 1.0, %v675
        %v2086 = vsub.f32 1.0, %v676
        %v2087 = vsub.f32 1.0, %v677
        %v2088 = vsub.f32 1.0, %v678
        %v2089 = vsub.f32 1.0, %v679
        %v2090 = vsub.f32 1.0, %v680
        %v2091 = vsub.f32 1.0, %v681
        %v2092 = vsub.f32 1.0, %v682
        %v2093 = vlog2.pop %v1837
        %v2094 = vmul.f32 %v2093, 0.6931472
        %v2095 = vlog2.pop %v1838
        %v2096 = vmul.f32 %v2095, 0.6931472
        %v2097 = vlog2.pop %v1839
        %v2098 = vmul.f32 %v2097, 0.6931472
        %v2099 = vlog2.pop %v1840
        %v2100 = vmul.f32 %v2099, 0.6931472
        %v2101 = vlog2.pop %v1841
        %v2102 = vmul.f32 %v2101, 0.6931472
        %v2103 = vlog2.pop %v1842
        %v2104 = vmul.f32 %v2103, 0.6931472
        %v2105 = vlog2.pop %v1843
        %v2106 = vmul.f32 %v2105, 0.6931472
        %v2107 = vlog2.pop %v1844
        %v2108 = vmul.f32 %v2107, 0.6931472
        %v2109 = vlog2.pop %v1845
        %v2110 = vmul.f32 %v2109, 0.6931472
        %v2111 = vlog2.pop %v1846
        %v2112 = vmul.f32 %v2111, 0.6931472
        %v2113 = vlog2.pop %v1847
        %v2114 = vmul.f32 %v2113, 0.6931472
        %v2115 = vlog2.pop %v1848
        %v2116 = vmul.f32 %v2115, 0.6931472
        %v2117 = vlog2.pop %v1849
        %v2118 = vmul.f32 %v2117, 0.6931472
        %v2119 = vlog2.pop %v1850
        %v2120 = vmul.f32 %v2119, 0.6931472
        %v2121 = vlog2.pop %v1851
        %v2122 = vmul.f32 %v2121, 0.6931472
        %v2123 = vlog2.pop %v1852
        %v2124 = vmul.f32 %v2123, 0.6931472
        %v2125 = vlog2.pop %v1853
        %v2126 = vmul.f32 %v2125, 0.6931472
        %v2127 = vlog2.pop %v1854
        %v2128 = vmul.f32 %v2127, 0.6931472
        %v2129 = vlog2.pop %v1855
        %v2130 = vmul.f32 %v2129, 0.6931472
        %v2131 = vlog2.pop %v1856
        %v2132 = vmul.f32 %v2131, 0.6931472
        %v2133 = vlog2.pop %v1857
        %v2134 = vmul.f32 %v2133, 0.6931472
        %v2135 = vlog2.pop %v1858
        %v2136 = vmul.f32 %v2135, 0.6931472
        %v2137 = vlog2.pop %v1859
        %v2138 = vmul.f32 %v2137, 0.6931472
        %v2139 = vlog2.pop %v1860
        %v2140 = vmul.f32 %v2139, 0.6931472
        %v2141 = vlog2.pop %v1861
        %v2142 = vmul.f32 %v2141, 0.6931472
        %v2143 = vlog2.pop %v1862
        %v2144 = vmul.f32 %v2143, 0.6931472
        %v2145 = vlog2.pop %v1863
        %v2146 = vmul.f32 %v2145, 0.6931472
        %v2147 = vlog2.pop %v1864
        %v2148 = vmul.f32 %v2147, 0.6931472
        %v2149 = vlog2.pop %v1865
        %v2150 = vmul.f32 %v2149, 0.6931472
        %v2151 = vlog2.pop %v1866
        %v2152 = vmul.f32 %v2151, 0.6931472
        %v2153 = vlog2.pop %v1867
        %v2154 = vmul.f32 %v2153, 0.6931472
        %v2155 = vlog2.pop %v1868
        %v2156 = vmul.f32 %v2155, 0.6931472
        %v2157 = vlog2.pop %v1869
        %v2158 = vmul.f32 %v2157, 0.6931472
        %v2159 = vlog2.pop %v1870
        %v2160 = vmul.f32 %v2159, 0.6931472
        %v2161 = vlog2.pop %v1871
        %v2162 = vmul.f32 %v2161, 0.6931472
        %v2163 = vlog2.pop %v1872
        %v2164 = vmul.f32 %v2163, 0.6931472
        %v2165 = vlog2.pop %v1873
        %v2166 = vmul.f32 %v2165, 0.6931472
        %v2167 = vlog2.pop %v1874
        %v2168 = vmul.f32 %v2167, 0.6931472
        %v2169 = vlog2.pop %v1875
        %v2170 = vmul.f32 %v2169, 0.6931472
        %v2171 = vlog2.pop %v1876
        %v2172 = vmul.f32 %v2171, 0.6931472
        %v2173 = vlog2.pop %v1877
        %v2174 = vmul.f32 %v2173, 0.6931472
        %v2175 = vlog2.pop %v1878
        %v2176 = vmul.f32 %v2175, 0.6931472
        %v2177 = vlog2.pop %v1879
        %v2178 = vmul.f32 %v2177, 0.6931472
        %v2179 = vlog2.pop %v1880
        %v2180 = vmul.f32 %v2179, 0.6931472
        %v2181 = vlog2.pop %v1881
        %v2182 = vmul.f32 %v2181, 0.6931472
        %v2183 = vlog2.pop %v1882
        %v2184 = vmul.f32 %v2183, 0.6931472
        %v2185 = vlog2.pop %v1883
        %v2186 = vmul.f32 %v2185, 0.6931472
        %v2187 = vlog2.pop %v1884
        %v2188 = vmul.f32 %v2187, 0.6931472
        %v2189 = vlog2.pop %v1885
        %v2190 = vmul.f32 %v2189, 0.6931472
        %v2191 = vlog2.pop %v1886
        %v2192 = vmul.f32 %v2191, 0.6931472
        %v2193 = vlog2.pop %v1887
        %v2194 = vmul.f32 %v2193, 0.6931472
        %v2195 = vlog2.pop %v1888
        %v2196 = vmul.f32 %v2195, 0.6931472
        %v2197 = vlog2.pop %v1889
        %v2198 = vmul.f32 %v2197, 0.6931472
        %v2199 = vlog2.pop %v1890
        %v2200 = vmul.f32 %v2199, 0.6931472
        %v2201 = vlog2.pop %v1891
        %v2202 = vmul.f32 %v2201, 0.6931472
        %v2203 = vlog2.pop %v1892
        %v2204 = vmul.f32 %v2203, 0.6931472
        %v2205 = vlog2.pop %v1893
        %v2206 = vmul.f32 %v2205, 0.6931472
        %v2207 = vlog2.pop %v1894
        %v2208 = vmul.f32 %v2207, 0.6931472
        %v2209 = vlog2.pop %v1895
        %v2210 = vmul.f32 %v2209, 0.6931472
        %v2211 = vlog2.pop %v1896
        %v2212 = vmul.f32 %v2211, 0.6931472
        %v2213 = vlog2.pop %v1897
        %v2214 = vmul.f32 %v2213, 0.6931472
        %v2215 = vlog2.pop %v1898
        %v2216 = vmul.f32 %v2215, 0.6931472
        %v2217 = vlog2.pop %v1899
        %v2218 = vmul.f32 %v2217, 0.6931472
        %v2219 = vlog2.pop %v1900
        %v2220 = vmul.f32 %v2219, 0.6931472
        %v2221 = vlog2.pop %v1901
        %v2222 = vmul.f32 %v2221, 0.6931472
        %v2223 = vlog2.pop %v1902
        %v2224 = vmul.f32 %v2223, 0.6931472
        %v2225 = vlog2.pop %v1903
        %v2226 = vmul.f32 %v2225, 0.6931472
        %v2227 = vlog2.pop %v1904
        %v2228 = vmul.f32 %v2227, 0.6931472
        %v2229 = vlog2.pop %v1905
        %v2230 = vmul.f32 %v2229, 0.6931472
        %v2231 = vlog2.pop %v1906
        %v2232 = vmul.f32 %v2231, 0.6931472
        %v2233 = vlog2.pop %v1907
        %v2234 = vmul.f32 %v2233, 0.6931472
        %v2235 = vlog2.pop %v1908
        %v2236 = vmul.f32 %v2235, 0.6931472
        %v2237 = vlog2.pop %v1909
        %v2238 = vmul.f32 %v2237, 0.6931472
        %v2239 = vlog2.pop %v1910
        %v2240 = vmul.f32 %v2239, 0.6931472
        %v2241 = vlog2.pop %v1911
        %v2242 = vmul.f32 %v2241, 0.6931472
        %v2243 = vlog2.pop %v1912
        %v2244 = vmul.f32 %v2243, 0.6931472
        %v2245 = vlog2.pop %v1913
        %v2246 = vmul.f32 %v2245, 0.6931472
        %v2247 = vlog2.pop %v1914
        %v2248 = vmul.f32 %v2247, 0.6931472
        %v2249 = vlog2.pop %v1915
        %v2250 = vmul.f32 %v2249, 0.6931472
        %v2251 = vlog2.pop %v1916
        %v2252 = vmul.f32 %v2251, 0.6931472
        %v2253 = vlog2.pop %v1917
        %v2254 = vmul.f32 %v2253, 0.6931472
        %v2255 = vlog2.pop %v1918
        %v2256 = vmul.f32 %v2255, 0.6931472
        %v2257 = vlog2.pop %v1919
        %v2258 = vmul.f32 %v2257, 0.6931472
        %v2259 = vlog2.pop %v1920
        %v2260 = vmul.f32 %v2259, 0.6931472
        %v2261 = vlog2.pop %v1921
        %v2262 = vmul.f32 %v2261, 0.6931472
        %v2263 = vlog2.pop %v1922
        %v2264 = vmul.f32 %v2263, 0.6931472
        %v2265 = vlog2.pop %v1923
        %v2266 = vmul.f32 %v2265, 0.6931472
        %v2267 = vlog2.pop %v1924
        %v2268 = vmul.f32 %v2267, 0.6931472
        %v2269 = vlog2.pop %v1925
        %v2270 = vmul.f32 %v2269, 0.6931472
        %v2271 = vlog2.pop %v1926
        %v2272 = vmul.f32 %v2271, 0.6931472
        %v2273 = vlog2.pop %v1927
        %v2274 = vmul.f32 %v2273, 0.6931472
        %v2275 = vlog2.pop %v1928
        %v2276 = vmul.f32 %v2275, 0.6931472
        %v2277 = vlog2.pop %v1929
        %v2278 = vmul.f32 %v2277, 0.6931472
        %v2279 = vlog2.pop %v1930
        %v2280 = vmul.f32 %v2279, 0.6931472
        %v2281 = vlog2.pop %v1931
        %v2282 = vmul.f32 %v2281, 0.6931472
        %v2283 = vlog2.pop %v1932
        %v2284 = vmul.f32 %v2283, 0.6931472
        %v2285 = vlog2.pop %v1933
        %v2286 = vmul.f32 %v2285, 0.6931472
        %v2287 = vlog2.pop %v1934
        %v2288 = vmul.f32 %v2287, 0.6931472
        %v2289 = vlog2.pop %v1935
        %v2290 = vmul.f32 %v2289, 0.6931472
        %v2291 = vlog2.pop %v1936
        %v2292 = vmul.f32 %v2291, 0.6931472
        %v2293 = vlog2.pop %v1937
        %v2294 = vmul.f32 %v2293, 0.6931472
        %v2295 = vlog2.pop %v1938
        %v2296 = vmul.f32 %v2295, 0.6931472
        %v2297 = vlog2.pop %v1939
        %v2298 = vmul.f32 %v2297, 0.6931472
        %v2299 = vlog2.pop %v1940
        %v2300 = vmul.f32 %v2299, 0.6931472
        %v2301 = vlog2.pop %v1941
        %v2302 = vmul.f32 %v2301, 0.6931472
        %v2303 = vlog2.pop %v1942
        %v2304 = vmul.f32 %v2303, 0.6931472
        %v2305 = vlog2.pop %v1943
        %v2306 = vmul.f32 %v2305, 0.6931472
        %v2307 = vlog2.pop %v1944
        %v2308 = vmul.f32 %v2307, 0.6931472
        %v2309 = vlog2.pop %v1945
        %v2310 = vmul.f32 %v2309, 0.6931472
        %v2311 = vlog2.pop %v1946
        %v2312 = vmul.f32 %v2311, 0.6931472
        %v2313 = vlog2.pop %v1947
        %v2314 = vmul.f32 %v2313, 0.6931472
        %v2315 = vlog2.pop %v1948
        %v2316 = vmul.f32 %v2315, 0.6931472
        %v2317 = vlog2.pop %v1949
        %v2318 = vmul.f32 %v2317, 0.6931472
        %v2319 = vlog2.pop %v1950
        %v2320 = vmul.f32 %v2319, 0.6931472
        %v2321 = vlog2.pop %v1951
        %v2322 = vmul.f32 %v2321, 0.6931472
        %v2323 = vlog2.pop %v1952
        %v2324 = vmul.f32 %v2323, 0.6931472
        %v2325 = vlog2.pop %v1953
        %v2326 = vmul.f32 %v2325, 0.6931472
        %v2327 = vlog2.pop %v1954
        %v2328 = vmul.f32 %v2327, 0.6931472
        %v2329 = vlog2.pop %v1955
        %v2330 = vmul.f32 %v2329, 0.6931472
        %v2331 = vlog2.pop %v1956
        %v2332 = vmul.f32 %v2331, 0.6931472
        %v2333 = vlog2.pop %v1957
        %v2334 = vmul.f32 %v2333, 0.6931472
        %v2335 = vlog2.pop %v1958
        %v2336 = vmul.f32 %v2335, 0.6931472
        %v2337 = vlog2.pop %v1959
        %v2338 = vmul.f32 %v2337, 0.6931472
        %v2339 = vlog2.pop %v1960
        %v2340 = vmul.f32 %v2339, 0.6931472
        %v2341 = vlog2.pop %v1961
        %v2342 = vmul.f32 %v2341, 0.6931472
        %v2343 = vlog2.pop %v1962
        %v2344 = vmul.f32 %v2343, 0.6931472
        %v2345 = vlog2.pop %v1963
        %v2346 = vmul.f32 %v2345, 0.6931472
        %v2347 = vlog2.pop %v1964
        %v2348 = vmul.f32 %v2347, 0.6931472
        %v2349 = vlog2.pop %v1965
        %v2350 = vmul.f32 %v2349, 0.6931472
        %v2351 = vlog2.pop %v1966
        %v2352 = vmul.f32 %v2351, 0.6931472
        %v2353 = vlog2.pop %v1967
        %v2354 = vmul.f32 %v2353, 0.6931472
        %v2355 = vlog2.pop %v1968
        %v2356 = vmul.f32 %v2355, 0.6931472
        %v2357 = vlog2.pop %v1969
        %v2358 = vmul.f32 %v2357, 0.6931472
        %v2359 = vlog2.pop %v1970
        %v2360 = vmul.f32 %v2359, 0.6931472
        %v2361 = vlog2.pop %v1971
        %v2362 = vmul.f32 %v2361, 0.6931472
        %v2363 = vlog2.pop %v1972
        %v2364 = vmul.f32 %v2363, 0.6931472
        %v2365 = vlog2.pop %v1973
        %v2366 = vmul.f32 %v2365, 0.6931472
        %v2367 = vlog2.pop %v1974
        %v2368 = vmul.f32 %v2367, 0.6931472
        %v2369 = vlog2.pop %v1975
        %v2370 = vmul.f32 %v2369, 0.6931472
        %v2371 = vlog2.pop %v1976
        %v2372 = vmul.f32 %v2371, 0.6931472
        %v2373 = vlog2.pop %v1977
        %v2374 = vmul.f32 %v2373, 0.6931472
        %v2375 = vlog2.pop %v1978
        %v2376 = vmul.f32 %v2375, 0.6931472
        %v2377 = vlog2.pop %v1979
        %v2378 = vmul.f32 %v2377, 0.6931472
        %v2379 = vlog2.pop %v1980
        %v2380 = vmul.f32 %v2379, 0.6931472
        %v2381 = vlog2.pop %v1981
        %v2382 = vmul.f32 %v2381, 0.6931472
        %v2383 = vlog2.pop %v1982
        %v2384 = vmul.f32 %v2383, 0.6931472
        %v2385 = vlog2.pop %v1983
        %v2386 = vmul.f32 %v2385, 0.6931472
        %v2387 = vlog2.pop %v1984
        %v2388 = vmul.f32 %v2387, 0.6931472
        %v2389 = vlog2.pop %v1985
        %v2390 = vmul.f32 %v2389, 0.6931472
        %v2391 = vlog2.pop %v1986
        %v2392 = vmul.f32 %v2391, 0.6931472
        %v2393 = vlog2.pop %v1987
        %v2394 = vmul.f32 %v2393, 0.6931472
        %v2395 = vlog2.pop %v1988
        %v2396 = vmul.f32 %v2395, 0.6931472
        %v2397 = vlog2.pop %v1989
        %v2398 = vmul.f32 %v2397, 0.6931472
        %v2399 = vlog2.pop %v1990
        %v2400 = vmul.f32 %v2399, 0.6931472
        %v2401 = vlog2.pop %v1991
        %v2402 = vmul.f32 %v2401, 0.6931472
        %v2403 = vlog2.pop %v1992
        %v2404 = vmul.f32 %v2403, 0.6931472
        %v2405 = vlog2.pop %v1993
        %v2406 = vmul.f32 %v2405, 0.6931472
        %v2407 = vlog2.pop %v1994
        %v2408 = vmul.f32 %v2407, 0.6931472
        %v2409 = vlog2.pop %v1995
        %v2410 = vmul.f32 %v2409, 0.6931472
        %v2411 = vlog2.pop %v1996
        %v2412 = vmul.f32 %v2411, 0.6931472
        %v2413 = vlog2.pop %v1997
        %v2414 = vmul.f32 %v2413, 0.6931472
        %v2415 = vlog2.pop %v1998
        %v2416 = vmul.f32 %v2415, 0.6931472
        %v2417 = vlog2.pop %v1999
        %v2418 = vmul.f32 %v2417, 0.6931472
        %v2419 = vlog2.pop %v2000
        %v2420 = vmul.f32 %v2419, 0.6931472
        %v2421 = vlog2.pop %v2001
        %v2422 = vmul.f32 %v2421, 0.6931472
        %v2423 = vlog2.pop %v2002
        %v2424 = vmul.f32 %v2423, 0.6931472
        %v2425 = vlog2.pop %v2003
        %v2426 = vmul.f32 %v2425, 0.6931472
        %v2427 = vlog2.pop %v2004
        %v2428 = vmul.f32 %v2427, 0.6931472
        %v2429 = vlog2.pop %v2005
        %v2430 = vmul.f32 %v2429, 0.6931472
        %v2431 = vlog2.pop %v2006
        %v2432 = vmul.f32 %v2431, 0.6931472
        %v2433 = vlog2.pop %v2007
        %v2434 = vmul.f32 %v2433, 0.6931472
        %v2435 = vlog2.pop %v2008
        %v2436 = vmul.f32 %v2435, 0.6931472
        %v2437 = vlog2.pop %v2009
        %v2438 = vmul.f32 %v2437, 0.6931472
        %v2439 = vlog2.pop %v2010
        %v2440 = vmul.f32 %v2439, 0.6931472
        %v2441 = vlog2.pop %v2011
        %v2442 = vmul.f32 %v2441, 0.6931472
        %v2443 = vlog2.pop %v2012
        %v2444 = vmul.f32 %v2443, 0.6931472
        %v2445 = vlog2.pop %v2013
        %v2446 = vmul.f32 %v2445, 0.6931472
        %v2447 = vlog2.pop %v2014
        %v2448 = vmul.f32 %v2447, 0.6931472
        %v2449 = vlog2.pop %v2015
        %v2450 = vmul.f32 %v2449, 0.6931472
        %v2451 = vlog2.pop %v2016
        %v2452 = vmul.f32 %v2451, 0.6931472
        %v2453 = vlog2.pop %v2017
        %v2454 = vmul.f32 %v2453, 0.6931472
        %v2455 = vlog2.pop %v2018
        %v2456 = vmul.f32 %v2455, 0.6931472
        %v2457 = vlog2.pop %v2019
        %v2458 = vmul.f32 %v2457, 0.6931472
        %v2459 = vlog2.pop %v2020
        %v2460 = vmul.f32 %v2459, 0.6931472
        %v2461 = vlog2.pop %v2021
        %v2462 = vmul.f32 %v2461, 0.6931472
        %v2463 = vlog2.pop %v2022
        %v2464 = vmul.f32 %v2463, 0.6931472
        %v2465 = vlog2.pop %v2023
        %v2466 = vmul.f32 %v2465, 0.6931472
        %v2467 = vlog2.pop %v2024
        %v2468 = vmul.f32 %v2467, 0.6931472
        %v2469 = vlog2.pop %v2025
        %v2470 = vmul.f32 %v2469, 0.6931472
        %v2471 = vlog2.pop %v2026
        %v2472 = vmul.f32 %v2471, 0.6931472
        %v2473 = vlog2.pop %v2027
        %v2474 = vmul.f32 %v2473, 0.6931472
        %v2475 = vlog2.pop %v2028
        %v2476 = vmul.f32 %v2475, 0.6931472
        %v2477 = vlog2.pop %v2029
        %v2478 = vmul.f32 %v2477, 0.6931472
        %v2479 = vlog2.pop %v2030
        %v2480 = vmul.f32 %v2479, 0.6931472
        %v2481 = vlog2.pop %v2031
        %v2482 = vmul.f32 %v2481, 0.6931472
        %v2483 = vlog2.pop %v2032
        %v2484 = vmul.f32 %v2483, 0.6931472
        %v2485 = vlog2.pop %v2033
        %v2486 = vmul.f32 %v2485, 0.6931472
        %v2487 = vlog2.pop %v2034
        %v2488 = vmul.f32 %v2487, 0.6931472
        %v2489 = vlog2.pop %v2035
        %v2490 = vmul.f32 %v2489, 0.6931472
        %v2491 = vlog2.pop %v2036
        %v2492 = vmul.f32 %v2491, 0.6931472
        %v2493 = vlog2.pop %v2037
        %v2494 = vmul.f32 %v2493, 0.6931472
        %v2495 = vlog2.pop %v2038
        %v2496 = vmul.f32 %v2495, 0.6931472
        %v2497 = vlog2.pop %v2039
        %v2498 = vmul.f32 %v2497, 0.6931472
        %v2499 = vlog2.pop %v2040
        %v2500 = vmul.f32 %v2499, 0.6931472
        %v2501 = vlog2.pop %v2041
        %v2502 = vmul.f32 %v2501, 0.6931472
        %v2503 = vlog2.pop %v2042
        %v2504 = vmul.f32 %v2503, 0.6931472
        %v2505 = vlog2.pop %v2043
        %v2506 = vmul.f32 %v2505, 0.6931472
        %v2507 = vlog2.pop %v2044
        %v2508 = vmul.f32 %v2507, 0.6931472
        %v2509 = vlog2.pop %v2045
        %v2510 = vmul.f32 %v2509, 0.6931472
        %v2511 = vlog2.pop %v2046
        %v2512 = vmul.f32 %v2511, 0.6931472
        %v2513 = vlog2.pop %v2047
        %v2514 = vmul.f32 %v2513, 0.6931472
        %v2515 = vlog2.pop %v2048
        %v2516 = vmul.f32 %v2515, 0.6931472
        %v2517 = vlog2.pop %v2049
        %v2518 = vmul.f32 %v2517, 0.6931472
        %v2519 = vlog2.pop %v2050
        %v2520 = vmul.f32 %v2519, 0.6931472
        %v2521 = vlog2.pop %v2051
        %v2522 = vmul.f32 %v2521, 0.6931472
        %v2523 = vlog2.pop %v2052
        %v2524 = vmul.f32 %v2523, 0.6931472
        %v2525 = vlog2.pop %v2053
        %v2526 = vmul.f32 %v2525, 0.6931472
        %v2527 = vlog2.pop %v2054
        %v2528 = vmul.f32 %v2527, 0.6931472
        %v2529 = vlog2.pop %v2055
        %v2530 = vmul.f32 %v2529, 0.6931472
        %v2531 = vlog2.pop %v2056
        %v2532 = vmul.f32 %v2531, 0.6931472
        %v2533 = vlog2.pop %v2057
        %v2534 = vmul.f32 %v2533, 0.6931472
        %v2535 = vlog2.pop %v2058
        %v2536 = vmul.f32 %v2535, 0.6931472
        %v2537 = vlog2.pop %v2059
        %v2538 = vmul.f32 %v2537, 0.6931472
        %v2539 = vlog2.pop %v2060
        %v2540 = vmul.f32 %v2539, 0.6931472
        %v2541 = vlog2.pop %v2061
        %v2542 = vmul.f32 %v2541, 0.6931472
        %v2543 = vlog2.pop %v2062
        %v2544 = vmul.f32 %v2543, 0.6931472
        %v2545 = vlog2.pop %v2063
        %v2546 = vmul.f32 %v2545, 0.6931472
        %v2547 = vlog2.pop %v2064
        %v2548 = vmul.f32 %v2547, 0.6931472
        %v2549 = vlog2.pop %v2065
        %v2550 = vmul.f32 %v2549, 0.6931472
        %v2551 = vlog2.pop %v2066
        %v2552 = vmul.f32 %v2551, 0.6931472
        %v2553 = vlog2.pop %v2067
        %v2554 = vmul.f32 %v2553, 0.6931472
        %v2555 = vlog2.pop %v2068
        %v2556 = vmul.f32 %v2555, 0.6931472
        %v2557 = vlog2.pop %v2069
        %v2558 = vmul.f32 %v2557, 0.6931472
        %v2559 = vlog2.pop %v2070
        %v2560 = vmul.f32 %v2559, 0.6931472
        %v2561 = vlog2.pop %v2071
        %v2562 = vmul.f32 %v2561, 0.6931472
        %v2563 = vlog2.pop %v2072
        %v2564 = vmul.f32 %v2563, 0.6931472
        %v2565 = vlog2.pop %v2073
        %v2566 = vmul.f32 %v2565, 0.6931472
        %v2567 = vlog2.pop %v2074
        %v2568 = vmul.f32 %v2567, 0.6931472
        %v2569 = vlog2.pop %v2075
        %v2570 = vmul.f32 %v2569, 0.6931472
        %v2571 = vlog2.pop %v2076
        %v2572 = vmul.f32 %v2571, 0.6931472
        %v2573 = vlog2.pop %v2077
        %v2574 = vmul.f32 %v2573, 0.6931472
        %v2575 = vlog2.pop %v2078
        %v2576 = vmul.f32 %v2575, 0.6931472
        %v2577 = vlog2.pop %v2079
        %v2578 = vmul.f32 %v2577, 0.6931472
        %v2579 = vlog2.pop %v2080
        %v2580 = vmul.f32 %v2579, 0.6931472
        %v2581 = vlog2.pop %v2081
        %v2582 = vmul.f32 %v2581, 0.6931472
        %v2583 = vlog2.pop %v2082
        %v2584 = vmul.f32 %v2583, 0.6931472
        %v2585 = vlog2.pop %v2083
        %v2586 = vmul.f32 %v2585, 0.6931472
        %v2587 = vlog2.pop %v2084
        %v2588 = vmul.f32 %v2587, 0.6931472
        %v2589 = vlog2.pop %v2085
        %v2590 = vmul.f32 %v2589, 0.6931472
        %v2591 = vlog2.pop %v2086
        %v2592 = vmul.f32 %v2591, 0.6931472
        %v2593 = vlog2.pop %v2087
        %v2594 = vmul.f32 %v2593, 0.6931472
        %v2595 = vlog2.pop %v2088
        %v2596 = vmul.f32 %v2595, 0.6931472
        %v2597 = vlog2.pop %v2089
        %v2598 = vmul.f32 %v2597, 0.6931472
        %v2599 = vlog2.pop %v2090
        %v2600 = vmul.f32 %v2599, 0.6931472
        %v2601 = vlog2.pop %v2091
        %v2602 = vmul.f32 %v2601, 0.6931472
        %v2603 = vlog2.pop %v2092
        %v2604 = vmul.f32 %v2603, 0.6931472
        %v2605 = vmax.f32 %v2094, -100.0
        %v2606 = vmax.f32 %v2096, -100.0
        %v2607 = vmax.f32 %v2098, -100.0
        %v2608 = vmax.f32 %v2100, -100.0
        %v2609 = vmax.f32 %v2102, -100.0
        %v2610 = vmax.f32 %v2104, -100.0
        %v2611 = vmax.f32 %v2106, -100.0
        %v2612 = vmax.f32 %v2108, -100.0
        %v2613 = vmax.f32 %v2110, -100.0
        %v2614 = vmax.f32 %v2112, -100.0
        %v2615 = vmax.f32 %v2114, -100.0
        %v2616 = vmax.f32 %v2116, -100.0
        %v2617 = vmax.f32 %v2118, -100.0
        %v2618 = vmax.f32 %v2120, -100.0
        %v2619 = vmax.f32 %v2122, -100.0
        %v2620 = vmax.f32 %v2124, -100.0
        %v2621 = vmax.f32 %v2126, -100.0
        %v2622 = vmax.f32 %v2128, -100.0
        %v2623 = vmax.f32 %v2130, -100.0
        %v2624 = vmax.f32 %v2132, -100.0
        %v2625 = vmax.f32 %v2134, -100.0
        %v2626 = vmax.f32 %v2136, -100.0
        %v2627 = vmax.f32 %v2138, -100.0
        %v2628 = vmax.f32 %v2140, -100.0
        %v2629 = vmax.f32 %v2142, -100.0
        %v2630 = vmax.f32 %v2144, -100.0
        %v2631 = vmax.f32 %v2146, -100.0
        %v2632 = vmax.f32 %v2148, -100.0
        %v2633 = vmax.f32 %v2150, -100.0
        %v2634 = vmax.f32 %v2152, -100.0
        %v2635 = vmax.f32 %v2154, -100.0
        %v2636 = vmax.f32 %v2156, -100.0
        %v2637 = vmax.f32 %v2158, -100.0
        %v2638 = vmax.f32 %v2160, -100.0
        %v2639 = vmax.f32 %v2162, -100.0
        %v2640 = vmax.f32 %v2164, -100.0
        %v2641 = vmax.f32 %v2166, -100.0
        %v2642 = vmax.f32 %v2168, -100.0
        %v2643 = vmax.f32 %v2170, -100.0
        %v2644 = vmax.f32 %v2172, -100.0
        %v2645 = vmax.f32 %v2174, -100.0
        %v2646 = vmax.f32 %v2176, -100.0
        %v2647 = vmax.f32 %v2178, -100.0
        %v2648 = vmax.f32 %v2180, -100.0
        %v2649 = vmax.f32 %v2182, -100.0
        %v2650 = vmax.f32 %v2184, -100.0
        %v2651 = vmax.f32 %v2186, -100.0
        %v2652 = vmax.f32 %v2188, -100.0
        %v2653 = vmax.f32 %v2190, -100.0
        %v2654 = vmax.f32 %v2192, -100.0
        %v2655 = vmax.f32 %v2194, -100.0
        %v2656 = vmax.f32 %v2196, -100.0
        %v2657 = vmax.f32 %v2198, -100.0
        %v2658 = vmax.f32 %v2200, -100.0
        %v2659 = vmax.f32 %v2202, -100.0
        %v2660 = vmax.f32 %v2204, -100.0
        %v2661 = vmax.f32 %v2206, -100.0
        %v2662 = vmax.f32 %v2208, -100.0
        %v2663 = vmax.f32 %v2210, -100.0
        %v2664 = vmax.f32 %v2212, -100.0
        %v2665 = vmax.f32 %v2214, -100.0
        %v2666 = vmax.f32 %v2216, -100.0
        %v2667 = vmax.f32 %v2218, -100.0
        %v2668 = vmax.f32 %v2220, -100.0
        %v2669 = vmax.f32 %v2222, -100.0
        %v2670 = vmax.f32 %v2224, -100.0
        %v2671 = vmax.f32 %v2226, -100.0
        %v2672 = vmax.f32 %v2228, -100.0
        %v2673 = vmax.f32 %v2230, -100.0
        %v2674 = vmax.f32 %v2232, -100.0
        %v2675 = vmax.f32 %v2234, -100.0
        %v2676 = vmax.f32 %v2236, -100.0
        %v2677 = vmax.f32 %v2238, -100.0
        %v2678 = vmax.f32 %v2240, -100.0
        %v2679 = vmax.f32 %v2242, -100.0
        %v2680 = vmax.f32 %v2244, -100.0
        %v2681 = vmax.f32 %v2246, -100.0
        %v2682 = vmax.f32 %v2248, -100.0
        %v2683 = vmax.f32 %v2250, -100.0
        %v2684 = vmax.f32 %v2252, -100.0
        %v2685 = vmax.f32 %v2254, -100.0
        %v2686 = vmax.f32 %v2256, -100.0
        %v2687 = vmax.f32 %v2258, -100.0
        %v2688 = vmax.f32 %v2260, -100.0
        %v2689 = vmax.f32 %v2262, -100.0
        %v2690 = vmax.f32 %v2264, -100.0
        %v2691 = vmax.f32 %v2266, -100.0
        %v2692 = vmax.f32 %v2268, -100.0
        %v2693 = vmax.f32 %v2270, -100.0
        %v2694 = vmax.f32 %v2272, -100.0
        %v2695 = vmax.f32 %v2274, -100.0
        %v2696 = vmax.f32 %v2276, -100.0
        %v2697 = vmax.f32 %v2278, -100.0
        %v2698 = vmax.f32 %v2280, -100.0
        %v2699 = vmax.f32 %v2282, -100.0
        %v2700 = vmax.f32 %v2284, -100.0
        %v2701 = vmax.f32 %v2286, -100.0
        %v2702 = vmax.f32 %v2288, -100.0
        %v2703 = vmax.f32 %v2290, -100.0
        %v2704 = vmax.f32 %v2292, -100.0
        %v2705 = vmax.f32 %v2294, -100.0
        %v2706 = vmax.f32 %v2296, -100.0
        %v2707 = vmax.f32 %v2298, -100.0
        %v2708 = vmax.f32 %v2300, -100.0
        %v2709 = vmax.f32 %v2302, -100.0
        %v2710 = vmax.f32 %v2304, -100.0
        %v2711 = vmax.f32 %v2306, -100.0
        %v2712 = vmax.f32 %v2308, -100.0
        %v2713 = vmax.f32 %v2310, -100.0
        %v2714 = vmax.f32 %v2312, -100.0
        %v2715 = vmax.f32 %v2314, -100.0
        %v2716 = vmax.f32 %v2316, -100.0
        %v2717 = vmax.f32 %v2318, -100.0
        %v2718 = vmax.f32 %v2320, -100.0
        %v2719 = vmax.f32 %v2322, -100.0
        %v2720 = vmax.f32 %v2324, -100.0
        %v2721 = vmax.f32 %v2326, -100.0
        %v2722 = vmax.f32 %v2328, -100.0
        %v2723 = vmax.f32 %v2330, -100.0
        %v2724 = vmax.f32 %v2332, -100.0
        %v2725 = vmax.f32 %v2334, -100.0
        %v2726 = vmax.f32 %v2336, -100.0
        %v2727 = vmax.f32 %v2338, -100.0
        %v2728 = vmax.f32 %v2340, -100.0
        %v2729 = vmax.f32 %v2342, -100.0
        %v2730 = vmax.f32 %v2344, -100.0
        %v2731 = vmax.f32 %v2346, -100.0
        %v2732 = vmax.f32 %v2348, -100.0
        %v2733 = vmax.f32 %v2350, -100.0
        %v2734 = vmax.f32 %v2352, -100.0
        %v2735 = vmax.f32 %v2354, -100.0
        %v2736 = vmax.f32 %v2356, -100.0
        %v2737 = vmax.f32 %v2358, -100.0
        %v2738 = vmax.f32 %v2360, -100.0
        %v2739 = vmax.f32 %v2362, -100.0
        %v2740 = vmax.f32 %v2364, -100.0
        %v2741 = vmax.f32 %v2366, -100.0
        %v2742 = vmax.f32 %v2368, -100.0
        %v2743 = vmax.f32 %v2370, -100.0
        %v2744 = vmax.f32 %v2372, -100.0
        %v2745 = vmax.f32 %v2374, -100.0
        %v2746 = vmax.f32 %v2376, -100.0
        %v2747 = vmax.f32 %v2378, -100.0
        %v2748 = vmax.f32 %v2380, -100.0
        %v2749 = vmax.f32 %v2382, -100.0
        %v2750 = vmax.f32 %v2384, -100.0
        %v2751 = vmax.f32 %v2386, -100.0
        %v2752 = vmax.f32 %v2388, -100.0
        %v2753 = vmax.f32 %v2390, -100.0
        %v2754 = vmax.f32 %v2392, -100.0
        %v2755 = vmax.f32 %v2394, -100.0
        %v2756 = vmax.f32 %v2396, -100.0
        %v2757 = vmax.f32 %v2398, -100.0
        %v2758 = vmax.f32 %v2400, -100.0
        %v2759 = vmax.f32 %v2402, -100.0
        %v2760 = vmax.f32 %v2404, -100.0
        %v2761 = vmax.f32 %v2406, -100.0
        %v2762 = vmax.f32 %v2408, -100.0
        %v2763 = vmax.f32 %v2410, -100.0
        %v2764 = vmax.f32 %v2412, -100.0
        %v2765 = vmax.f32 %v2414, -100.0
        %v2766 = vmax.f32 %v2416, -100.0
        %v2767 = vmax.f32 %v2418, -100.0
        %v2768 = vmax.f32 %v2420, -100.0
        %v2769 = vmax.f32 %v2422, -100.0
        %v2770 = vmax.f32 %v2424, -100.0
        %v2771 = vmax.f32 %v2426, -100.0
        %v2772 = vmax.f32 %v2428, -100.0
        %v2773 = vmax.f32 %v2430, -100.0
        %v2774 = vmax.f32 %v2432, -100.0
        %v2775 = vmax.f32 %v2434, -100.0
        %v2776 = vmax.f32 %v2436, -100.0
        %v2777 = vmax.f32 %v2438, -100.0
        %v2778 = vmax.f32 %v2440, -100.0
        %v2779 = vmax.f32 %v2442, -100.0
        %v2780 = vmax.f32 %v2444, -100.0
        %v2781 = vmax.f32 %v2446, -100.0
        %v2782 = vmax.f32 %v2448, -100.0
        %v2783 = vmax.f32 %v2450, -100.0
        %v2784 = vmax.f32 %v2452, -100.0
        %v2785 = vmax.f32 %v2454, -100.0
        %v2786 = vmax.f32 %v2456, -100.0
        %v2787 = vmax.f32 %v2458, -100.0
        %v2788 = vmax.f32 %v2460, -100.0
        %v2789 = vmax.f32 %v2462, -100.0
        %v2790 = vmax.f32 %v2464, -100.0
        %v2791 = vmax.f32 %v2466, -100.0
        %v2792 = vmax.f32 %v2468, -100.0
        %v2793 = vmax.f32 %v2470, -100.0
        %v2794 = vmax.f32 %v2472, -100.0
        %v2795 = vmax.f32 %v2474, -100.0
        %v2796 = vmax.f32 %v2476, -100.0
        %v2797 = vmax.f32 %v2478, -100.0
        %v2798 = vmax.f32 %v2480, -100.0
        %v2799 = vmax.f32 %v2482, -100.0
        %v2800 = vmax.f32 %v2484, -100.0
        %v2801 = vmax.f32 %v2486, -100.0
        %v2802 = vmax.f32 %v2488, -100.0
        %v2803 = vmax.f32 %v2490, -100.0
        %v2804 = vmax.f32 %v2492, -100.0
        %v2805 = vmax.f32 %v2494, -100.0
        %v2806 = vmax.f32 %v2496, -100.0
        %v2807 = vmax.f32 %v2498, -100.0
        %v2808 = vmax.f32 %v2500, -100.0
        %v2809 = vmax.f32 %v2502, -100.0
        %v2810 = vmax.f32 %v2504, -100.0
        %v2811 = vmax.f32 %v2506, -100.0
        %v2812 = vmax.f32 %v2508, -100.0
        %v2813 = vmax.f32 %v2510, -100.0
        %v2814 = vmax.f32 %v2512, -100.0
        %v2815 = vmax.f32 %v2514, -100.0
        %v2816 = vmax.f32 %v2516, -100.0
        %v2817 = vmax.f32 %v2518, -100.0
        %v2818 = vmax.f32 %v2520, -100.0
        %v2819 = vmax.f32 %v2522, -100.0
        %v2820 = vmax.f32 %v2524, -100.0
        %v2821 = vmax.f32 %v2526, -100.0
        %v2822 = vmax.f32 %v2528, -100.0
        %v2823 = vmax.f32 %v2530, -100.0
        %v2824 = vmax.f32 %v2532, -100.0
        %v2825 = vmax.f32 %v2534, -100.0
        %v2826 = vmax.f32 %v2536, -100.0
        %v2827 = vmax.f32 %v2538, -100.0
        %v2828 = vmax.f32 %v2540, -100.0
        %v2829 = vmax.f32 %v2542, -100.0
        %v2830 = vmax.f32 %v2544, -100.0
        %v2831 = vmax.f32 %v2546, -100.0
        %v2832 = vmax.f32 %v2548, -100.0
        %v2833 = vmax.f32 %v2550, -100.0
        %v2834 = vmax.f32 %v2552, -100.0
        %v2835 = vmax.f32 %v2554, -100.0
        %v2836 = vmax.f32 %v2556, -100.0
        %v2837 = vmax.f32 %v2558, -100.0
        %v2838 = vmax.f32 %v2560, -100.0
        %v2839 = vmax.f32 %v2562, -100.0
        %v2840 = vmax.f32 %v2564, -100.0
        %v2841 = vmax.f32 %v2566, -100.0
        %v2842 = vmax.f32 %v2568, -100.0
        %v2843 = vmax.f32 %v2570, -100.0
        %v2844 = vmax.f32 %v2572, -100.0
        %v2845 = vmax.f32 %v2574, -100.0
        %v2846 = vmax.f32 %v2576, -100.0
        %v2847 = vmax.f32 %v2578, -100.0
        %v2848 = vmax.f32 %v2580, -100.0
        %v2849 = vmax.f32 %v2582, -100.0
        %v2850 = vmax.f32 %v2584, -100.0
        %v2851 = vmax.f32 %v2586, -100.0
        %v2852 = vmax.f32 %v2588, -100.0
        %v2853 = vmax.f32 %v2590, -100.0
        %v2854 = vmax.f32 %v2592, -100.0
        %v2855 = vmax.f32 %v2594, -100.0
        %v2856 = vmax.f32 %v2596, -100.0
        %v2857 = vmax.f32 %v2598, -100.0
        %v2858 = vmax.f32 %v2600, -100.0
        %v2859 = vmax.f32 %v2602, -100.0
        %v2860 = vmax.f32 %v2604, -100.0
        %v2861 = vsub.f32 %v1581, %v2605
        %v2862 = vsub.f32 %v1582, %v2606
        %v2863 = vsub.f32 %v1583, %v2607
        %v2864 = vsub.f32 %v1584, %v2608
        %v2865 = vsub.f32 %v1585, %v2609
        %v2866 = vsub.f32 %v1586, %v2610
        %v2867 = vsub.f32 %v1587, %v2611
        %v2868 = vsub.f32 %v1588, %v2612
        %v2869 = vsub.f32 %v1589, %v2613
        %v2870 = vsub.f32 %v1590, %v2614
        %v2871 = vsub.f32 %v1591, %v2615
        %v2872 = vsub.f32 %v1592, %v2616
        %v2873 = vsub.f32 %v1593, %v2617
        %v2874 = vsub.f32 %v1594, %v2618
        %v2875 = vsub.f32 %v1595, %v2619
        %v2876 = vsub.f32 %v1596, %v2620
        %v2877 = vsub.f32 %v1597, %v2621
        %v2878 = vsub.f32 %v1598, %v2622
        %v2879 = vsub.f32 %v1599, %v2623
        %v2880 = vsub.f32 %v1600, %v2624
        %v2881 = vsub.f32 %v1601, %v2625
        %v2882 = vsub.f32 %v1602, %v2626
        %v2883 = vsub.f32 %v1603, %v2627
        %v2884 = vsub.f32 %v1604, %v2628
        %v2885 = vsub.f32 %v1605, %v2629
        %v2886 = vsub.f32 %v1606, %v2630
        %v2887 = vsub.f32 %v1607, %v2631
        %v2888 = vsub.f32 %v1608, %v2632
        %v2889 = vsub.f32 %v1609, %v2633
        %v2890 = vsub.f32 %v1610, %v2634
        %v2891 = vsub.f32 %v1611, %v2635
        %v2892 = vsub.f32 %v1612, %v2636
        %v2893 = vsub.f32 %v1613, %v2637
        %v2894 = vsub.f32 %v1614, %v2638
        %v2895 = vsub.f32 %v1615, %v2639
        %v2896 = vsub.f32 %v1616, %v2640
        %v2897 = vsub.f32 %v1617, %v2641
        %v2898 = vsub.f32 %v1618, %v2642
        %v2899 = vsub.f32 %v1619, %v2643
        %v2900 = vsub.f32 %v1620, %v2644
        %v2901 = vsub.f32 %v1621, %v2645
        %v2902 = vsub.f32 %v1622, %v2646
        %v2903 = vsub.f32 %v1623, %v2647
        %v2904 = vsub.f32 %v1624, %v2648
        %v2905 = vsub.f32 %v1625, %v2649
        %v2906 = vsub.f32 %v1626, %v2650
        %v2907 = vsub.f32 %v1627, %v2651
        %v2908 = vsub.f32 %v1628, %v2652
        %v2909 = vsub.f32 %v1629, %v2653
        %v2910 = vsub.f32 %v1630, %v2654
        %v2911 = vsub.f32 %v1631, %v2655
        %v2912 = vsub.f32 %v1632, %v2656
        %v2913 = vsub.f32 %v1633, %v2657
        %v2914 = vsub.f32 %v1634, %v2658
        %v2915 = vsub.f32 %v1635, %v2659
        %v2916 = vsub.f32 %v1636, %v2660
        %v2917 = vsub.f32 %v1637, %v2661
        %v2918 = vsub.f32 %v1638, %v2662
        %v2919 = vsub.f32 %v1639, %v2663
        %v2920 = vsub.f32 %v1640, %v2664
        %v2921 = vsub.f32 %v1641, %v2665
        %v2922 = vsub.f32 %v1642, %v2666
        %v2923 = vsub.f32 %v1643, %v2667
        %v2924 = vsub.f32 %v1644, %v2668
        %v2925 = vsub.f32 %v1645, %v2669
        %v2926 = vsub.f32 %v1646, %v2670
        %v2927 = vsub.f32 %v1647, %v2671
        %v2928 = vsub.f32 %v1648, %v2672
        %v2929 = vsub.f32 %v1649, %v2673
        %v2930 = vsub.f32 %v1650, %v2674
        %v2931 = vsub.f32 %v1651, %v2675
        %v2932 = vsub.f32 %v1652, %v2676
        %v2933 = vsub.f32 %v1653, %v2677
        %v2934 = vsub.f32 %v1654, %v2678
        %v2935 = vsub.f32 %v1655, %v2679
        %v2936 = vsub.f32 %v1656, %v2680
        %v2937 = vsub.f32 %v1657, %v2681
        %v2938 = vsub.f32 %v1658, %v2682
        %v2939 = vsub.f32 %v1659, %v2683
        %v2940 = vsub.f32 %v1660, %v2684
        %v2941 = vsub.f32 %v1661, %v2685
        %v2942 = vsub.f32 %v1662, %v2686
        %v2943 = vsub.f32 %v1663, %v2687
        %v2944 = vsub.f32 %v1664, %v2688
        %v2945 = vsub.f32 %v1665, %v2689
        %v2946 = vsub.f32 %v1666, %v2690
        %v2947 = vsub.f32 %v1667, %v2691
        %v2948 = vsub.f32 %v1668, %v2692
        %v2949 = vsub.f32 %v1669, %v2693
        %v2950 = vsub.f32 %v1670, %v2694
        %v2951 = vsub.f32 %v1671, %v2695
        %v2952 = vsub.f32 %v1672, %v2696
        %v2953 = vsub.f32 %v1673, %v2697
        %v2954 = vsub.f32 %v1674, %v2698
        %v2955 = vsub.f32 %v1675, %v2699
        %v2956 = vsub.f32 %v1676, %v2700
        %v2957 = vsub.f32 %v1677, %v2701
        %v2958 = vsub.f32 %v1678, %v2702
        %v2959 = vsub.f32 %v1679, %v2703
        %v2960 = vsub.f32 %v1680, %v2704
        %v2961 = vsub.f32 %v1681, %v2705
        %v2962 = vsub.f32 %v1682, %v2706
        %v2963 = vsub.f32 %v1683, %v2707
        %v2964 = vsub.f32 %v1684, %v2708
        %v2965 = vsub.f32 %v1685, %v2709
        %v2966 = vsub.f32 %v1686, %v2710
        %v2967 = vsub.f32 %v1687, %v2711
        %v2968 = vsub.f32 %v1688, %v2712
        %v2969 = vsub.f32 %v1689, %v2713
        %v2970 = vsub.f32 %v1690, %v2714
        %v2971 = vsub.f32 %v1691, %v2715
        %v2972 = vsub.f32 %v1692, %v2716
        %v2973 = vsub.f32 %v1693, %v2717
        %v2974 = vsub.f32 %v1694, %v2718
        %v2975 = vsub.f32 %v1695, %v2719
        %v2976 = vsub.f32 %v1696, %v2720
        %v2977 = vsub.f32 %v1697, %v2721
        %v2978 = vsub.f32 %v1698, %v2722
        %v2979 = vsub.f32 %v1699, %v2723
        %v2980 = vsub.f32 %v1700, %v2724
        %v2981 = vsub.f32 %v1701, %v2725
        %v2982 = vsub.f32 %v1702, %v2726
        %v2983 = vsub.f32 %v1703, %v2727
        %v2984 = vsub.f32 %v1704, %v2728
        %v2985 = vsub.f32 %v1705, %v2729
        %v2986 = vsub.f32 %v1706, %v2730
        %v2987 = vsub.f32 %v1707, %v2731
        %v2988 = vsub.f32 %v1708, %v2732
        %v2989 = vsub.f32 %v1709, %v2733
        %v2990 = vsub.f32 %v1710, %v2734
        %v2991 = vsub.f32 %v1711, %v2735
        %v2992 = vsub.f32 %v1712, %v2736
        %v2993 = vsub.f32 %v1713, %v2737
        %v2994 = vsub.f32 %v1714, %v2738
        %v2995 = vsub.f32 %v1715, %v2739
        %v2996 = vsub.f32 %v1716, %v2740
        %v2997 = vsub.f32 %v1717, %v2741
        %v2998 = vsub.f32 %v1718, %v2742
        %v2999 = vsub.f32 %v1719, %v2743
        %v3000 = vsub.f32 %v1720, %v2744
        %v3001 = vsub.f32 %v1721, %v2745
        %v3002 = vsub.f32 %v1722, %v2746
        %v3003 = vsub.f32 %v1723, %v2747
        %v3004 = vsub.f32 %v1724, %v2748
        %v3005 = vsub.f32 %v1725, %v2749
        %v3006 = vsub.f32 %v1726, %v2750
        %v3007 = vsub.f32 %v1727, %v2751
        %v3008 = vsub.f32 %v1728, %v2752
        %v3009 = vsub.f32 %v1729, %v2753
        %v3010 = vsub.f32 %v1730, %v2754
        %v3011 = vsub.f32 %v1731, %v2755
        %v3012 = vsub.f32 %v1732, %v2756
        %v3013 = vsub.f32 %v1733, %v2757
        %v3014 = vsub.f32 %v1734, %v2758
        %v3015 = vsub.f32 %v1735, %v2759
        %v3016 = vsub.f32 %v1736, %v2760
        %v3017 = vsub.f32 %v1737, %v2761
        %v3018 = vsub.f32 %v1738, %v2762
        %v3019 = vsub.f32 %v1739, %v2763
        %v3020 = vsub.f32 %v1740, %v2764
        %v3021 = vsub.f32 %v1741, %v2765
        %v3022 = vsub.f32 %v1742, %v2766
        %v3023 = vsub.f32 %v1743, %v2767
        %v3024 = vsub.f32 %v1744, %v2768
        %v3025 = vsub.f32 %v1745, %v2769
        %v3026 = vsub.f32 %v1746, %v2770
        %v3027 = vsub.f32 %v1747, %v2771
        %v3028 = vsub.f32 %v1748, %v2772
        %v3029 = vsub.f32 %v1749, %v2773
        %v3030 = vsub.f32 %v1750, %v2774
        %v3031 = vsub.f32 %v1751, %v2775
        %v3032 = vsub.f32 %v1752, %v2776
        %v3033 = vsub.f32 %v1753, %v2777
        %v3034 = vsub.f32 %v1754, %v2778
        %v3035 = vsub.f32 %v1755, %v2779
        %v3036 = vsub.f32 %v1756, %v2780
        %v3037 = vsub.f32 %v1757, %v2781
        %v3038 = vsub.f32 %v1758, %v2782
        %v3039 = vsub.f32 %v1759, %v2783
        %v3040 = vsub.f32 %v1760, %v2784
        %v3041 = vsub.f32 %v1761, %v2785
        %v3042 = vsub.f32 %v1762, %v2786
        %v3043 = vsub.f32 %v1763, %v2787
        %v3044 = vsub.f32 %v1764, %v2788
        %v3045 = vsub.f32 %v1765, %v2789
        %v3046 = vsub.f32 %v1766, %v2790
        %v3047 = vsub.f32 %v1767, %v2791
        %v3048 = vsub.f32 %v1768, %v2792
        %v3049 = vsub.f32 %v1769, %v2793
        %v3050 = vsub.f32 %v1770, %v2794
        %v3051 = vsub.f32 %v1771, %v2795
        %v3052 = vsub.f32 %v1772, %v2796
        %v3053 = vsub.f32 %v1773, %v2797
        %v3054 = vsub.f32 %v1774, %v2798
        %v3055 = vsub.f32 %v1775, %v2799
        %v3056 = vsub.f32 %v1776, %v2800
        %v3057 = vsub.f32 %v1777, %v2801
        %v3058 = vsub.f32 %v1778, %v2802
        %v3059 = vsub.f32 %v1779, %v2803
        %v3060 = vsub.f32 %v1780, %v2804
        %v3061 = vsub.f32 %v1781, %v2805
        %v3062 = vsub.f32 %v1782, %v2806
        %v3063 = vsub.f32 %v1783, %v2807
        %v3064 = vsub.f32 %v1784, %v2808
        %v3065 = vsub.f32 %v1785, %v2809
        %v3066 = vsub.f32 %v1786, %v2810
        %v3067 = vsub.f32 %v1787, %v2811
        %v3068 = vsub.f32 %v1788, %v2812
        %v3069 = vsub.f32 %v1789, %v2813
        %v3070 = vsub.f32 %v1790, %v2814
        %v3071 = vsub.f32 %v1791, %v2815
        %v3072 = vsub.f32 %v1792, %v2816
        %v3073 = vsub.f32 %v1793, %v2817
        %v3074 = vsub.f32 %v1794, %v2818
        %v3075 = vsub.f32 %v1795, %v2819
        %v3076 = vsub.f32 %v1796, %v2820
        %v3077 = vsub.f32 %v1797, %v2821
        %v3078 = vsub.f32 %v1798, %v2822
        %v3079 = vsub.f32 %v1799, %v2823
        %v3080 = vsub.f32 %v1800, %v2824
        %v3081 = vsub.f32 %v1801, %v2825
        %v3082 = vsub.f32 %v1802, %v2826
        %v3083 = vsub.f32 %v1803, %v2827
        %v3084 = vsub.f32 %v1804, %v2828
        %v3085 = vsub.f32 %v1805, %v2829
        %v3086 = vsub.f32 %v1806, %v2830
        %v3087 = vsub.f32 %v1807, %v2831
        %v3088 = vsub.f32 %v1808, %v2832
        %v3089 = vsub.f32 %v1809, %v2833
        %v3090 = vsub.f32 %v1810, %v2834
        %v3091 = vsub.f32 %v1811, %v2835
        %v3092 = vsub.f32 %v1812, %v2836
        %v3093 = vsub.f32 %v1813, %v2837
        %v3094 = vsub.f32 %v1814, %v2838
        %v3095 = vsub.f32 %v1815, %v2839
        %v3096 = vsub.f32 %v1816, %v2840
        %v3097 = vsub.f32 %v1817, %v2841
        %v3098 = vsub.f32 %v1818, %v2842
        %v3099 = vsub.f32 %v1819, %v2843
        %v3100 = vsub.f32 %v1820, %v2844
        %v3101 = vsub.f32 %v1821, %v2845
        %v3102 = vsub.f32 %v1822, %v2846
        %v3103 = vsub.f32 %v1823, %v2847
        %v3104 = vsub.f32 %v1824, %v2848
        %v3105 = vsub.f32 %v1825, %v2849
        %v3106 = vsub.f32 %v1826, %v2850
        %v3107 = vsub.f32 %v1827, %v2851
        %v3108 = vsub.f32 %v1828, %v2852
        %v3109 = vsub.f32 %v1829, %v2853
        %v3110 = vsub.f32 %v1830, %v2854
        %v3111 = vsub.f32 %v1831, %v2855
        %v3112 = vsub.f32 %v1832, %v2856
        %v3113 = vsub.f32 %v1833, %v2857
        %v3114 = vsub.f32 %v1834, %v2858
        %v3115 = vsub.f32 %v1835, %v2859
        %v3116 = vsub.f32 %v1836, %v2860
        %v3117 = vmul.f32 %v811, %v2861
        %v3118 = vmul.f32 %v812, %v2862
        %v3119 = vmul.f32 %v813, %v2863
        %v3120 = vmul.f32 %v814, %v2864
        %v3121 = vmul.f32 %v815, %v2865
        %v3122 = vmul.f32 %v816, %v2866
        %v3123 = vmul.f32 %v817, %v2867
        %v3124 = vmul.f32 %v818, %v2868
        %v3125 = vmul.f32 %v819, %v2869
        %v3126 = vmul.f32 %v820, %v2870
        %v3127 = vmul.f32 %v821, %v2871
        %v3128 = vmul.f32 %v822, %v2872
        %v3129 = vmul.f32 %v823, %v2873
        %v3130 = vmul.f32 %v824, %v2874
        %v3131 = vmul.f32 %v825, %v2875
        %v3132 = vmul.f32 %v826, %v2876
        %v3133 = vmul.f32 %v827, %v2877
        %v3134 = vmul.f32 %v828, %v2878
        %v3135 = vmul.f32 %v829, %v2879
        %v3136 = vmul.f32 %v830, %v2880
        %v3137 = vmul.f32 %v831, %v2881
        %v3138 = vmul.f32 %v832, %v2882
        %v3139 = vmul.f32 %v833, %v2883
        %v3140 = vmul.f32 %v834, %v2884
        %v3141 = vmul.f32 %v835, %v2885
        %v3142 = vmul.f32 %v836, %v2886
        %v3143 = vmul.f32 %v837, %v2887
        %v3144 = vmul.f32 %v838, %v2888
        %v3145 = vmul.f32 %v839, %v2889
        %v3146 = vmul.f32 %v840, %v2890
        %v3147 = vmul.f32 %v841, %v2891
        %v3148 = vmul.f32 %v842, %v2892
        %v3149 = vmul.f32 %v843, %v2893
        %v3150 = vmul.f32 %v844, %v2894
        %v3151 = vmul.f32 %v845, %v2895
        %v3152 = vmul.f32 %v846, %v2896
        %v3153 = vmul.f32 %v847, %v2897
        %v3154 = vmul.f32 %v848, %v2898
        %v3155 = vmul.f32 %v849, %v2899
        %v3156 = vmul.f32 %v850, %v2900
        %v3157 = vmul.f32 %v851, %v2901
        %v3158 = vmul.f32 %v852, %v2902
        %v3159 = vmul.f32 %v853, %v2903
        %v3160 = vmul.f32 %v854, %v2904
        %v3161 = vmul.f32 %v855, %v2905
        %v3162 = vmul.f32 %v856, %v2906
        %v3163 = vmul.f32 %v857, %v2907
        %v3164 = vmul.f32 %v858, %v2908
        %v3165 = vmul.f32 %v859, %v2909
        %v3166 = vmul.f32 %v860, %v2910
        %v3167 = vmul.f32 %v861, %v2911
        %v3168 = vmul.f32 %v862, %v2912
        %v3169 = vmul.f32 %v863, %v2913
        %v3170 = vmul.f32 %v864, %v2914
        %v3171 = vmul.f32 %v865, %v2915
        %v3172 = vmul.f32 %v866, %v2916
        %v3173 = vmul.f32 %v867, %v2917
        %v3174 = vmul.f32 %v868, %v2918
        %v3175 = vmul.f32 %v869, %v2919
        %v3176 = vmul.f32 %v870, %v2920
        %v3177 = vmul.f32 %v871, %v2921
        %v3178 = vmul.f32 %v872, %v2922
        %v3179 = vmul.f32 %v873, %v2923
        %v3180 = vmul.f32 %v874, %v2924
        %v3181 = vmul.f32 %v875, %v2925
        %v3182 = vmul.f32 %v876, %v2926
        %v3183 = vmul.f32 %v877, %v2927
        %v3184 = vmul.f32 %v878, %v2928
        %v3185 = vmul.f32 %v879, %v2929
        %v3186 = vmul.f32 %v880, %v2930
        %v3187 = vmul.f32 %v881, %v2931
        %v3188 = vmul.f32 %v882, %v2932
        %v3189 = vmul.f32 %v883, %v2933
        %v3190 = vmul.f32 %v884, %v2934
        %v3191 = vmul.f32 %v885, %v2935
        %v3192 = vmul.f32 %v886, %v2936
        %v3193 = vmul.f32 %v887, %v2937
        %v3194 = vmul.f32 %v888, %v2938
        %v3195 = vmul.f32 %v889, %v2939
        %v3196 = vmul.f32 %v890, %v2940
        %v3197 = vmul.f32 %v891, %v2941
        %v3198 = vmul.f32 %v892, %v2942
        %v3199 = vmul.f32 %v893, %v2943
        %v3200 = vmul.f32 %v894, %v2944
        %v3201 = vmul.f32 %v895, %v2945
        %v3202 = vmul.f32 %v896, %v2946
        %v3203 = vmul.f32 %v897, %v2947
        %v3204 = vmul.f32 %v898, %v2948
        %v3205 = vmul.f32 %v899, %v2949
        %v3206 = vmul.f32 %v900, %v2950
        %v3207 = vmul.f32 %v901, %v2951
        %v3208 = vmul.f32 %v902, %v2952
        %v3209 = vmul.f32 %v903, %v2953
        %v3210 = vmul.f32 %v904, %v2954
        %v3211 = vmul.f32 %v905, %v2955
        %v3212 = vmul.f32 %v906, %v2956
        %v3213 = vmul.f32 %v907, %v2957
        %v3214 = vmul.f32 %v908, %v2958
        %v3215 = vmul.f32 %v909, %v2959
        %v3216 = vmul.f32 %v910, %v2960
        %v3217 = vmul.f32 %v911, %v2961
        %v3218 = vmul.f32 %v912, %v2962
        %v3219 = vmul.f32 %v913, %v2963
        %v3220 = vmul.f32 %v914, %v2964
        %v3221 = vmul.f32 %v915, %v2965
        %v3222 = vmul.f32 %v916, %v2966
        %v3223 = vmul.f32 %v917, %v2967
        %v3224 = vmul.f32 %v918, %v2968
        %v3225 = vmul.f32 %v919, %v2969
        %v3226 = vmul.f32 %v920, %v2970
        %v3227 = vmul.f32 %v921, %v2971
        %v3228 = vmul.f32 %v922, %v2972
        %v3229 = vmul.f32 %v923, %v2973
        %v3230 = vmul.f32 %v924, %v2974
        %v3231 = vmul.f32 %v925, %v2975
        %v3232 = vmul.f32 %v926, %v2976
        %v3233 = vmul.f32 %v927, %v2977
        %v3234 = vmul.f32 %v928, %v2978
        %v3235 = vmul.f32 %v929, %v2979
        %v3236 = vmul.f32 %v930, %v2980
        %v3237 = vmul.f32 %v931, %v2981
        %v3238 = vmul.f32 %v932, %v2982
        %v3239 = vmul.f32 %v933, %v2983
        %v3240 = vmul.f32 %v934, %v2984
        %v3241 = vmul.f32 %v935, %v2985
        %v3242 = vmul.f32 %v936, %v2986
        %v3243 = vmul.f32 %v937, %v2987
        %v3244 = vmul.f32 %v938, %v2988
        %v3245 = vmul.f32 %v939, %v2989
        %v3246 = vmul.f32 %v940, %v2990
        %v3247 = vmul.f32 %v941, %v2991
        %v3248 = vmul.f32 %v942, %v2992
        %v3249 = vmul.f32 %v943, %v2993
        %v3250 = vmul.f32 %v944, %v2994
        %v3251 = vmul.f32 %v945, %v2995
        %v3252 = vmul.f32 %v946, %v2996
        %v3253 = vmul.f32 %v947, %v2997
        %v3254 = vmul.f32 %v948, %v2998
        %v3255 = vmul.f32 %v949, %v2999
        %v3256 = vmul.f32 %v950, %v3000
        %v3257 = vmul.f32 %v951, %v3001
        %v3258 = vmul.f32 %v952, %v3002
        %v3259 = vmul.f32 %v953, %v3003
        %v3260 = vmul.f32 %v954, %v3004
        %v3261 = vmul.f32 %v955, %v3005
        %v3262 = vmul.f32 %v956, %v3006
        %v3263 = vmul.f32 %v957, %v3007
        %v3264 = vmul.f32 %v958, %v3008
        %v3265 = vmul.f32 %v959, %v3009
        %v3266 = vmul.f32 %v960, %v3010
        %v3267 = vmul.f32 %v961, %v3011
        %v3268 = vmul.f32 %v962, %v3012
        %v3269 = vmul.f32 %v963, %v3013
        %v3270 = vmul.f32 %v964, %v3014
        %v3271 = vmul.f32 %v965, %v3015
        %v3272 = vmul.f32 %v966, %v3016
        %v3273 = vmul.f32 %v967, %v3017
        %v3274 = vmul.f32 %v968, %v3018
        %v3275 = vmul.f32 %v969, %v3019
        %v3276 = vmul.f32 %v970, %v3020
        %v3277 = vmul.f32 %v971, %v3021
        %v3278 = vmul.f32 %v972, %v3022
        %v3279 = vmul.f32 %v973, %v3023
        %v3280 = vmul.f32 %v974, %v3024
        %v3281 = vmul.f32 %v975, %v3025
        %v3282 = vmul.f32 %v976, %v3026
        %v3283 = vmul.f32 %v977, %v3027
        %v3284 = vmul.f32 %v978, %v3028
        %v3285 = vmul.f32 %v979, %v3029
        %v3286 = vmul.f32 %v980, %v3030
        %v3287 = vmul.f32 %v981, %v3031
        %v3288 = vmul.f32 %v982, %v3032
        %v3289 = vmul.f32 %v983, %v3033
        %v3290 = vmul.f32 %v984, %v3034
        %v3291 = vmul.f32 %v985, %v3035
        %v3292 = vmul.f32 %v986, %v3036
        %v3293 = vmul.f32 %v987, %v3037
        %v3294 = vmul.f32 %v988, %v3038
        %v3295 = vmul.f32 %v989, %v3039
        %v3296 = vmul.f32 %v990, %v3040
        %v3297 = vmul.f32 %v991, %v3041
        %v3298 = vmul.f32 %v992, %v3042
        %v3299 = vmul.f32 %v993, %v3043
        %v3300 = vmul.f32 %v994, %v3044
        %v3301 = vmul.f32 %v995, %v3045
        %v3302 = vmul.f32 %v996, %v3046
        %v3303 = vmul.f32 %v997, %v3047
        %v3304 = vmul.f32 %v998, %v3048
        %v3305 = vmul.f32 %v999, %v3049
        %v3306 = vmul.f32 %v1000, %v3050
        %v3307 = vmul.f32 %v1001, %v3051
        %v3308 = vmul.f32 %v1002, %v3052
        %v3309 = vmul.f32 %v1003, %v3053
        %v3310 = vmul.f32 %v1004, %v3054
        %v3311 = vmul.f32 %v1005, %v3055
        %v3312 = vmul.f32 %v1006, %v3056
        %v3313 = vmul.f32 %v1007, %v3057
        %v3314 = vmul.f32 %v1008, %v3058
        %v3315 = vmul.f32 %v1009, %v3059
        %v3316 = vmul.f32 %v1010, %v3060
        %v3317 = vmul.f32 %v1011, %v3061
        %v3318 = vmul.f32 %v1012, %v3062
        %v3319 = vmul.f32 %v1013, %v3063
        %v3320 = vmul.f32 %v1014, %v3064
        %v3321 = vmul.f32 %v1015, %v3065
        %v3322 = vmul.f32 %v1016, %v3066
        %v3323 = vmul.f32 %v1017, %v3067
        %v3324 = vmul.f32 %v1018, %v3068
        %v3325 = vmul.f32 %v1019, %v3069
        %v3326 = vmul.f32 %v1020, %v3070
        %v3327 = vmul.f32 %v1021, %v3071
        %v3328 = vmul.f32 %v1022, %v3072
        %v3329 = vmul.f32 %v1023, %v3073
        %v3330 = vmul.f32 %v1024, %v3074
        %v3331 = vmul.f32 %v1025, %v3075
        %v3332 = vmul.f32 %v1026, %v3076
        %v3333 = vmul.f32 %v1027, %v3077
        %v3334 = vmul.f32 %v1028, %v3078
        %v3335 = vmul.f32 %v1029, %v3079
        %v3336 = vmul.f32 %v1030, %v3080
        %v3337 = vmul.f32 %v1031, %v3081
        %v3338 = vmul.f32 %v1032, %v3082
        %v3339 = vmul.f32 %v1033, %v3083
        %v3340 = vmul.f32 %v1034, %v3084
        %v3341 = vmul.f32 %v1035, %v3085
        %v3342 = vmul.f32 %v1036, %v3086
        %v3343 = vmul.f32 %v1037, %v3087
        %v3344 = vmul.f32 %v1038, %v3088
        %v3345 = vmul.f32 %v1039, %v3089
        %v3346 = vmul.f32 %v1040, %v3090
        %v3347 = vmul.f32 %v1041, %v3091
        %v3348 = vmul.f32 %v1042, %v3092
        %v3349 = vmul.f32 %v1043, %v3093
        %v3350 = vmul.f32 %v1044, %v3094
        %v3351 = vmul.f32 %v1045, %v3095
        %v3352 = vmul.f32 %v1046, %v3096
        %v3353 = vmul.f32 %v1047, %v3097
        %v3354 = vmul.f32 %v1048, %v3098
        %v3355 = vmul.f32 %v1049, %v3099
        %v3356 = vmul.f32 %v1050, %v3100
        %v3357 = vmul.f32 %v1051, %v3101
        %v3358 = vmul.f32 %v1052, %v3102
        %v3359 = vmul.f32 %v1053, %v3103
        %v3360 = vmul.f32 %v1054, %v3104
        %v3361 = vmul.f32 %v1055, %v3105
        %v3362 = vmul.f32 %v1056, %v3106
        %v3363 = vmul.f32 %v1057, %v3107
        %v3364 = vmul.f32 %v1058, %v3108
        %v3365 = vmul.f32 %v1059, %v3109
        %v3366 = vmul.f32 %v1060, %v3110
        %v3367 = vmul.f32 %v1061, %v3111
        %v3368 = vmul.f32 %v1062, %v3112
        %v3369 = vmul.f32 %v1063, %v3113
        %v3370 = vmul.f32 %v1064, %v3114
        %v3371 = vmul.f32 %v1065, %v3115
        %v3372 = vmul.f32 %v1066, %v3116
        %v3373 = vadd.f32 %v3117, %v2605
        %v3374 = vadd.f32 %v3118, %v2606
        %v3375 = vadd.f32 %v3119, %v2607
        %v3376 = vadd.f32 %v3120, %v2608
        %v3377 = vadd.f32 %v3121, %v2609
        %v3378 = vadd.f32 %v3122, %v2610
        %v3379 = vadd.f32 %v3123, %v2611
        %v3380 = vadd.f32 %v3124, %v2612
        %v3381 = vadd.f32 %v3125, %v2613
        %v3382 = vadd.f32 %v3126, %v2614
        %v3383 = vadd.f32 %v3127, %v2615
        %v3384 = vadd.f32 %v3128, %v2616
        %v3385 = vadd.f32 %v3129, %v2617
        %v3386 = vadd.f32 %v3130, %v2618
        %v3387 = vadd.f32 %v3131, %v2619
        %v3388 = vadd.f32 %v3132, %v2620
        %v3389 = vadd.f32 %v3133, %v2621
        %v3390 = vadd.f32 %v3134, %v2622
        %v3391 = vadd.f32 %v3135, %v2623
        %v3392 = vadd.f32 %v3136, %v2624
        %v3393 = vadd.f32 %v3137, %v2625
        %v3394 = vadd.f32 %v3138, %v2626
        %v3395 = vadd.f32 %v3139, %v2627
        %v3396 = vadd.f32 %v3140, %v2628
        %v3397 = vadd.f32 %v3141, %v2629
        %v3398 = vadd.f32 %v3142, %v2630
        %v3399 = vadd.f32 %v3143, %v2631
        %v3400 = vadd.f32 %v3144, %v2632
        %v3401 = vadd.f32 %v3145, %v2633
        %v3402 = vadd.f32 %v3146, %v2634
        %v3403 = vadd.f32 %v3147, %v2635
        %v3404 = vadd.f32 %v3148, %v2636
        %v3405 = vadd.f32 %v3149, %v2637
        %v3406 = vadd.f32 %v3150, %v2638
        %v3407 = vadd.f32 %v3151, %v2639
        %v3408 = vadd.f32 %v3152, %v2640
        %v3409 = vadd.f32 %v3153, %v2641
        %v3410 = vadd.f32 %v3154, %v2642
        %v3411 = vadd.f32 %v3155, %v2643
        %v3412 = vadd.f32 %v3156, %v2644
        %v3413 = vadd.f32 %v3157, %v2645
        %v3414 = vadd.f32 %v3158, %v2646
        %v3415 = vadd.f32 %v3159, %v2647
        %v3416 = vadd.f32 %v3160, %v2648
        %v3417 = vadd.f32 %v3161, %v2649
        %v3418 = vadd.f32 %v3162, %v2650
        %v3419 = vadd.f32 %v3163, %v2651
        %v3420 = vadd.f32 %v3164, %v2652
        %v3421 = vadd.f32 %v3165, %v2653
        %v3422 = vadd.f32 %v3166, %v2654
        %v3423 = vadd.f32 %v3167, %v2655
        %v3424 = vadd.f32 %v3168, %v2656
        %v3425 = vadd.f32 %v3169, %v2657
        %v3426 = vadd.f32 %v3170, %v2658
        %v3427 = vadd.f32 %v3171, %v2659
        %v3428 = vadd.f32 %v3172, %v2660
        %v3429 = vadd.f32 %v3173, %v2661
        %v3430 = vadd.f32 %v3174, %v2662
        %v3431 = vadd.f32 %v3175, %v2663
        %v3432 = vadd.f32 %v3176, %v2664
        %v3433 = vadd.f32 %v3177, %v2665
        %v3434 = vadd.f32 %v3178, %v2666
        %v3435 = vadd.f32 %v3179, %v2667
        %v3436 = vadd.f32 %v3180, %v2668
        %v3437 = vadd.f32 %v3181, %v2669
        %v3438 = vadd.f32 %v3182, %v2670
        %v3439 = vadd.f32 %v3183, %v2671
        %v3440 = vadd.f32 %v3184, %v2672
        %v3441 = vadd.f32 %v3185, %v2673
        %v3442 = vadd.f32 %v3186, %v2674
        %v3443 = vadd.f32 %v3187, %v2675
        %v3444 = vadd.f32 %v3188, %v2676
        %v3445 = vadd.f32 %v3189, %v2677
        %v3446 = vadd.f32 %v3190, %v2678
        %v3447 = vadd.f32 %v3191, %v2679
        %v3448 = vadd.f32 %v3192, %v2680
        %v3449 = vadd.f32 %v3193, %v2681
        %v3450 = vadd.f32 %v3194, %v2682
        %v3451 = vadd.f32 %v3195, %v2683
        %v3452 = vadd.f32 %v3196, %v2684
        %v3453 = vadd.f32 %v3197, %v2685
        %v3454 = vadd.f32 %v3198, %v2686
        %v3455 = vadd.f32 %v3199, %v2687
        %v3456 = vadd.f32 %v3200, %v2688
        %v3457 = vadd.f32 %v3201, %v2689
        %v3458 = vadd.f32 %v3202, %v2690
        %v3459 = vadd.f32 %v3203, %v2691
        %v3460 = vadd.f32 %v3204, %v2692
        %v3461 = vadd.f32 %v3205, %v2693
        %v3462 = vadd.f32 %v3206, %v2694
        %v3463 = vadd.f32 %v3207, %v2695
        %v3464 = vadd.f32 %v3208, %v2696
        %v3465 = vadd.f32 %v3209, %v2697
        %v3466 = vadd.f32 %v3210, %v2698
        %v3467 = vadd.f32 %v3211, %v2699
        %v3468 = vadd.f32 %v3212, %v2700
        %v3469 = vadd.f32 %v3213, %v2701
        %v3470 = vadd.f32 %v3214, %v2702
        %v3471 = vadd.f32 %v3215, %v2703
        %v3472 = vadd.f32 %v3216, %v2704
        %v3473 = vadd.f32 %v3217, %v2705
        %v3474 = vadd.f32 %v3218, %v2706
        %v3475 = vadd.f32 %v3219, %v2707
        %v3476 = vadd.f32 %v3220, %v2708
        %v3477 = vadd.f32 %v3221, %v2709
        %v3478 = vadd.f32 %v3222, %v2710
        %v3479 = vadd.f32 %v3223, %v2711
        %v3480 = vadd.f32 %v3224, %v2712
        %v3481 = vadd.f32 %v3225, %v2713
        %v3482 = vadd.f32 %v3226, %v2714
        %v3483 = vadd.f32 %v3227, %v2715
        %v3484 = vadd.f32 %v3228, %v2716
        %v3485 = vadd.f32 %v3229, %v2717
        %v3486 = vadd.f32 %v3230, %v2718
        %v3487 = vadd.f32 %v3231, %v2719
        %v3488 = vadd.f32 %v3232, %v2720
        %v3489 = vadd.f32 %v3233, %v2721
        %v3490 = vadd.f32 %v3234, %v2722
        %v3491 = vadd.f32 %v3235, %v2723
        %v3492 = vadd.f32 %v3236, %v2724
        %v3493 = vadd.f32 %v3237, %v2725
        %v3494 = vadd.f32 %v3238, %v2726
        %v3495 = vadd.f32 %v3239, %v2727
        %v3496 = vadd.f32 %v3240, %v2728
        %v3497 = vadd.f32 %v3241, %v2729
        %v3498 = vadd.f32 %v3242, %v2730
        %v3499 = vadd.f32 %v3243, %v2731
        %v3500 = vadd.f32 %v3244, %v2732
        %v3501 = vadd.f32 %v3245, %v2733
        %v3502 = vadd.f32 %v3246, %v2734
        %v3503 = vadd.f32 %v3247, %v2735
        %v3504 = vadd.f32 %v3248, %v2736
        %v3505 = vadd.f32 %v3249, %v2737
        %v3506 = vadd.f32 %v3250, %v2738
        %v3507 = vadd.f32 %v3251, %v2739
        %v3508 = vadd.f32 %v3252, %v2740
        %v3509 = vadd.f32 %v3253, %v2741
        %v3510 = vadd.f32 %v3254, %v2742
        %v3511 = vadd.f32 %v3255, %v2743
        %v3512 = vadd.f32 %v3256, %v2744
        %v3513 = vadd.f32 %v3257, %v2745
        %v3514 = vadd.f32 %v3258, %v2746
        %v3515 = vadd.f32 %v3259, %v2747
        %v3516 = vadd.f32 %v3260, %v2748
        %v3517 = vadd.f32 %v3261, %v2749
        %v3518 = vadd.f32 %v3262, %v2750
        %v3519 = vadd.f32 %v3263, %v2751
        %v3520 = vadd.f32 %v3264, %v2752
        %v3521 = vadd.f32 %v3265, %v2753
        %v3522 = vadd.f32 %v3266, %v2754
        %v3523 = vadd.f32 %v3267, %v2755
        %v3524 = vadd.f32 %v3268, %v2756
        %v3525 = vadd.f32 %v3269, %v2757
        %v3526 = vadd.f32 %v3270, %v2758
        %v3527 = vadd.f32 %v3271, %v2759
        %v3528 = vadd.f32 %v3272, %v2760
        %v3529 = vadd.f32 %v3273, %v2761
        %v3530 = vadd.f32 %v3274, %v2762
        %v3531 = vadd.f32 %v3275, %v2763
        %v3532 = vadd.f32 %v3276, %v2764
        %v3533 = vadd.f32 %v3277, %v2765
        %v3534 = vadd.f32 %v3278, %v2766
        %v3535 = vadd.f32 %v3279, %v2767
        %v3536 = vadd.f32 %v3280, %v2768
        %v3537 = vadd.f32 %v3281, %v2769
        %v3538 = vadd.f32 %v3282, %v2770
        %v3539 = vadd.f32 %v3283, %v2771
        %v3540 = vadd.f32 %v3284, %v2772
        %v3541 = vadd.f32 %v3285, %v2773
        %v3542 = vadd.f32 %v3286, %v2774
        %v3543 = vadd.f32 %v3287, %v2775
        %v3544 = vadd.f32 %v3288, %v2776
        %v3545 = vadd.f32 %v3289, %v2777
        %v3546 = vadd.f32 %v3290, %v2778
        %v3547 = vadd.f32 %v3291, %v2779
        %v3548 = vadd.f32 %v3292, %v2780
        %v3549 = vadd.f32 %v3293, %v2781
        %v3550 = vadd.f32 %v3294, %v2782
        %v3551 = vadd.f32 %v3295, %v2783
        %v3552 = vadd.f32 %v3296, %v2784
        %v3553 = vadd.f32 %v3297, %v2785
        %v3554 = vadd.f32 %v3298, %v2786
        %v3555 = vadd.f32 %v3299, %v2787
        %v3556 = vadd.f32 %v3300, %v2788
        %v3557 = vadd.f32 %v3301, %v2789
        %v3558 = vadd.f32 %v3302, %v2790
        %v3559 = vadd.f32 %v3303, %v2791
        %v3560 = vadd.f32 %v3304, %v2792
        %v3561 = vadd.f32 %v3305, %v2793
        %v3562 = vadd.f32 %v3306, %v2794
        %v3563 = vadd.f32 %v3307, %v2795
        %v3564 = vadd.f32 %v3308, %v2796
        %v3565 = vadd.f32 %v3309, %v2797
        %v3566 = vadd.f32 %v3310, %v2798
        %v3567 = vadd.f32 %v3311, %v2799
        %v3568 = vadd.f32 %v3312, %v2800
        %v3569 = vadd.f32 %v3313, %v2801
        %v3570 = vadd.f32 %v3314, %v2802
        %v3571 = vadd.f32 %v3315, %v2803
        %v3572 = vadd.f32 %v3316, %v2804
        %v3573 = vadd.f32 %v3317, %v2805
        %v3574 = vadd.f32 %v3318, %v2806
        %v3575 = vadd.f32 %v3319, %v2807
        %v3576 = vadd.f32 %v3320, %v2808
        %v3577 = vadd.f32 %v3321, %v2809
        %v3578 = vadd.f32 %v3322, %v2810
        %v3579 = vadd.f32 %v3323, %v2811
        %v3580 = vadd.f32 %v3324, %v2812
        %v3581 = vadd.f32 %v3325, %v2813
        %v3582 = vadd.f32 %v3326, %v2814
        %v3583 = vadd.f32 %v3327, %v2815
        %v3584 = vadd.f32 %v3328, %v2816
        %v3585 = vadd.f32 %v3329, %v2817
        %v3586 = vadd.f32 %v3330, %v2818
        %v3587 = vadd.f32 %v3331, %v2819
        %v3588 = vadd.f32 %v3332, %v2820
        %v3589 = vadd.f32 %v3333, %v2821
        %v3590 = vadd.f32 %v3334, %v2822
        %v3591 = vadd.f32 %v3335, %v2823
        %v3592 = vadd.f32 %v3336, %v2824
        %v3593 = vadd.f32 %v3337, %v2825
        %v3594 = vadd.f32 %v3338, %v2826
        %v3595 = vadd.f32 %v3339, %v2827
        %v3596 = vadd.f32 %v3340, %v2828
        %v3597 = vadd.f32 %v3341, %v2829
        %v3598 = vadd.f32 %v3342, %v2830
        %v3599 = vadd.f32 %v3343, %v2831
        %v3600 = vadd.f32 %v3344, %v2832
        %v3601 = vadd.f32 %v3345, %v2833
        %v3602 = vadd.f32 %v3346, %v2834
        %v3603 = vadd.f32 %v3347, %v2835
        %v3604 = vadd.f32 %v3348, %v2836
        %v3605 = vadd.f32 %v3349, %v2837
        %v3606 = vadd.f32 %v3350, %v2838
        %v3607 = vadd.f32 %v3351, %v2839
        %v3608 = vadd.f32 %v3352, %v2840
        %v3609 = vadd.f32 %v3353, %v2841
        %v3610 = vadd.f32 %v3354, %v2842
        %v3611 = vadd.f32 %v3355, %v2843
        %v3612 = vadd.f32 %v3356, %v2844
        %v3613 = vadd.f32 %v3357, %v2845
        %v3614 = vadd.f32 %v3358, %v2846
        %v3615 = vadd.f32 %v3359, %v2847
        %v3616 = vadd.f32 %v3360, %v2848
        %v3617 = vadd.f32 %v3361, %v2849
        %v3618 = vadd.f32 %v3362, %v2850
        %v3619 = vadd.f32 %v3363, %v2851
        %v3620 = vadd.f32 %v3364, %v2852
        %v3621 = vadd.f32 %v3365, %v2853
        %v3622 = vadd.f32 %v3366, %v2854
        %v3623 = vadd.f32 %v3367, %v2855
        %v3624 = vadd.f32 %v3368, %v2856
        %v3625 = vadd.f32 %v3369, %v2857
        %v3626 = vadd.f32 %v3370, %v2858
        %v3627 = vadd.f32 %v3371, %v2859
        %v3628 = vadd.f32 %v3372, %v2860
        %v3629 = vadd.f32 %v3373, %v3374
        %v3630 = vadd.f32 %v3629, %v3375
        %v3631 = vadd.f32 %v3630, %v3376
        %v3632 = vadd.f32 %v3631, %v3377
        %v3633 = vadd.f32 %v3632, %v3378
        %v3634 = vadd.f32 %v3633, %v3379
        %v3635 = vadd.f32 %v3634, %v3380
        %v3636 = vadd.f32 %v3635, %v3381
        %v3637 = vadd.f32 %v3636, %v3382
        %v3638 = vadd.f32 %v3637, %v3383
        %v3639 = vadd.f32 %v3638, %v3384
        %v3640 = vadd.f32 %v3639, %v3385
        %v3641 = vadd.f32 %v3640, %v3386
        %v3642 = vadd.f32 %v3641, %v3387
        %v3643 = vadd.f32 %v3642, %v3388
        %v3644 = vadd.f32 %v3643, %v3389
        %v3645 = vadd.f32 %v3644, %v3390
        %v3646 = vadd.f32 %v3645, %v3391
        %v3647 = vadd.f32 %v3646, %v3392
        %v3648 = vadd.f32 %v3647, %v3393
        %v3649 = vadd.f32 %v3648, %v3394
        %v3650 = vadd.f32 %v3649, %v3395
        %v3651 = vadd.f32 %v3650, %v3396
        %v3652 = vadd.f32 %v3651, %v3397
        %v3653 = vadd.f32 %v3652, %v3398
        %v3654 = vadd.f32 %v3653, %v3399
        %v3655 = vadd.f32 %v3654, %v3400
        %v3656 = vadd.f32 %v3655, %v3401
        %v3657 = vadd.f32 %v3656, %v3402
        %v3658 = vadd.f32 %v3657, %v3403
        %v3659 = vadd.f32 %v3658, %v3404
        %v3660 = vadd.f32 %v3659, %v3405
        %v3661 = vadd.f32 %v3660, %v3406
        %v3662 = vadd.f32 %v3661, %v3407
        %v3663 = vadd.f32 %v3662, %v3408
        %v3664 = vadd.f32 %v3663, %v3409
        %v3665 = vadd.f32 %v3664, %v3410
        %v3666 = vadd.f32 %v3665, %v3411
        %v3667 = vadd.f32 %v3666, %v3412
        %v3668 = vadd.f32 %v3667, %v3413
        %v3669 = vadd.f32 %v3668, %v3414
        %v3670 = vadd.f32 %v3669, %v3415
        %v3671 = vadd.f32 %v3670, %v3416
        %v3672 = vadd.f32 %v3671, %v3417
        %v3673 = vadd.f32 %v3672, %v3418
        %v3674 = vadd.f32 %v3673, %v3419
        %v3675 = vadd.f32 %v3674, %v3420
        %v3676 = vadd.f32 %v3675, %v3421
        %v3677 = vadd.f32 %v3676, %v3422
        %v3678 = vadd.f32 %v3677, %v3423
        %v3679 = vadd.f32 %v3678, %v3424
        %v3680 = vadd.f32 %v3679, %v3425
        %v3681 = vadd.f32 %v3680, %v3426
        %v3682 = vadd.f32 %v3681, %v3427
        %v3683 = vadd.f32 %v3682, %v3428
        %v3684 = vadd.f32 %v3683, %v3429
        %v3685 = vadd.f32 %v3684, %v3430
        %v3686 = vadd.f32 %v3685, %v3431
        %v3687 = vadd.f32 %v3686, %v3432
        %v3688 = vadd.f32 %v3687, %v3433
        %v3689 = vadd.f32 %v3688, %v3434
        %v3690 = vadd.f32 %v3689, %v3435
        %v3691 = vadd.f32 %v3690, %v3436
        %v3692 = vadd.f32 %v3691, %v3437
        %v3693 = vadd.f32 %v3692, %v3438
        %v3694 = vadd.f32 %v3693, %v3439
        %v3695 = vadd.f32 %v3694, %v3440
        %v3696 = vadd.f32 %v3695, %v3441
        %v3697 = vadd.f32 %v3696, %v3442
        %v3698 = vadd.f32 %v3697, %v3443
        %v3699 = vadd.f32 %v3698, %v3444
        %v3700 = vadd.f32 %v3699, %v3445
        %v3701 = vadd.f32 %v3700, %v3446
        %v3702 = vadd.f32 %v3701, %v3447
        %v3703 = vadd.f32 %v3702, %v3448
        %v3704 = vadd.f32 %v3703, %v3449
        %v3705 = vadd.f32 %v3704, %v3450
        %v3706 = vadd.f32 %v3705, %v3451
        %v3707 = vadd.f32 %v3706, %v3452
        %v3708 = vadd.f32 %v3707, %v3453
        %v3709 = vadd.f32 %v3708, %v3454
        %v3710 = vadd.f32 %v3709, %v3455
        %v3711 = vadd.f32 %v3710, %v3456
        %v3712 = vadd.f32 %v3711, %v3457
        %v3713 = vadd.f32 %v3712, %v3458
        %v3714 = vadd.f32 %v3713, %v3459
        %v3715 = vadd.f32 %v3714, %v3460
        %v3716 = vadd.f32 %v3715, %v3461
        %v3717 = vadd.f32 %v3716, %v3462
        %v3718 = vadd.f32 %v3717, %v3463
        %v3719 = vadd.f32 %v3718, %v3464
        %v3720 = vadd.f32 %v3719, %v3465
        %v3721 = vadd.f32 %v3720, %v3466
        %v3722 = vadd.f32 %v3721, %v3467
        %v3723 = vadd.f32 %v3722, %v3468
        %v3724 = vadd.f32 %v3723, %v3469
        %v3725 = vadd.f32 %v3724, %v3470
        %v3726 = vadd.f32 %v3725, %v3471
        %v3727 = vadd.f32 %v3726, %v3472
        %v3728 = vadd.f32 %v3727, %v3473
        %v3729 = vadd.f32 %v3728, %v3474
        %v3730 = vadd.f32 %v3729, %v3475
        %v3731 = vadd.f32 %v3730, %v3476
        %v3732 = vadd.f32 %v3731, %v3477
        %v3733 = vadd.f32 %v3732, %v3478
        %v3734 = vadd.f32 %v3733, %v3479
        %v3735 = vadd.f32 %v3734, %v3480
        %v3736 = vadd.f32 %v3735, %v3481
        %v3737 = vadd.f32 %v3736, %v3482
        %v3738 = vadd.f32 %v3737, %v3483
        %v3739 = vadd.f32 %v3738, %v3484
        %v3740 = vadd.f32 %v3739, %v3485
        %v3741 = vadd.f32 %v3740, %v3486
        %v3742 = vadd.f32 %v3741, %v3487
        %v3743 = vadd.f32 %v3742, %v3488
        %v3744 = vadd.f32 %v3743, %v3489
        %v3745 = vadd.f32 %v3744, %v3490
        %v3746 = vadd.f32 %v3745, %v3491
        %v3747 = vadd.f32 %v3746, %v3492
        %v3748 = vadd.f32 %v3747, %v3493
        %v3749 = vadd.f32 %v3748, %v3494
        %v3750 = vadd.f32 %v3749, %v3495
        %v3751 = vadd.f32 %v3750, %v3496
        %v3752 = vadd.f32 %v3751, %v3497
        %v3753 = vadd.f32 %v3752, %v3498
        %v3754 = vadd.f32 %v3753, %v3499
        %v3755 = vadd.f32 %v3754, %v3500
        %3756 = vadd.xlane.f32.xlu0 %v3755
        %v3757 = vpop.xlane.xlu0 %3756
        %vm3758 = vcmask 1045504
        %v3759 = vsel %vm3758, %v3501, 0.0
        %v3760 = vsel %vm3758, %v3502, 0.0
        %v3761 = vadd.f32 %v3759, %v3760
        %v3762 = vsel %vm3758, %v3503, 0.0
        %v3763 = vadd.f32 %v3761, %v3762
        %v3764 = vsel %vm3758, %v3504, 0.0
        %v3765 = vadd.f32 %v3763, %v3764
        %v3766 = vsel %vm3758, %v3505, 0.0
        %v3767 = vadd.f32 %v3765, %v3766
        %v3768 = vsel %vm3758, %v3506, 0.0
        %v3769 = vadd.f32 %v3767, %v3768
        %v3770 = vsel %vm3758, %v3507, 0.0
        %v3771 = vadd.f32 %v3769, %v3770
        %v3772 = vsel %vm3758, %v3508, 0.0
        %v3773 = vadd.f32 %v3771, %v3772
        %v3774 = vsel %vm3758, %v3509, 0.0
        %v3775 = vadd.f32 %v3773, %v3774
        %v3776 = vsel %vm3758, %v3510, 0.0
        %v3777 = vadd.f32 %v3775, %v3776
        %v3778 = vsel %vm3758, %v3511, 0.0
        %v3779 = vadd.f32 %v3777, %v3778
        %v3780 = vsel %vm3758, %v3512, 0.0
        %v3781 = vadd.f32 %v3779, %v3780
        %v3782 = vsel %vm3758, %v3513, 0.0
        %v3783 = vadd.f32 %v3781, %v3782
        %v3784 = vsel %vm3758, %v3514, 0.0
        %v3785 = vadd.f32 %v3783, %v3784
        %v3786 = vsel %vm3758, %v3515, 0.0
        %v3787 = vadd.f32 %v3785, %v3786
        %v3788 = vsel %vm3758, %v3516, 0.0
        %v3789 = vadd.f32 %v3787, %v3788
        %v3790 = vsel %vm3758, %v3517, 0.0
        %v3791 = vadd.f32 %v3789, %v3790
        %v3792 = vsel %vm3758, %v3518, 0.0
        %v3793 = vadd.f32 %v3791, %v3792
        %v3794 = vsel %vm3758, %v3519, 0.0
        %v3795 = vadd.f32 %v3793, %v3794
        %v3796 = vsel %vm3758, %v3520, 0.0
        %v3797 = vadd.f32 %v3795, %v3796
        %v3798 = vsel %vm3758, %v3521, 0.0
        %v3799 = vadd.f32 %v3797, %v3798
        %v3800 = vsel %vm3758, %v3522, 0.0
        %v3801 = vadd.f32 %v3799, %v3800
        %v3802 = vsel %vm3758, %v3523, 0.0
        %v3803 = vadd.f32 %v3801, %v3802
        %v3804 = vsel %vm3758, %v3524, 0.0
        %v3805 = vadd.f32 %v3803, %v3804
        %v3806 = vsel %vm3758, %v3525, 0.0
        %v3807 = vadd.f32 %v3805, %v3806
        %v3808 = vsel %vm3758, %v3526, 0.0
        %v3809 = vadd.f32 %v3807, %v3808
        %v3810 = vsel %vm3758, %v3527, 0.0
        %v3811 = vadd.f32 %v3809, %v3810
        %v3812 = vsel %vm3758, %v3528, 0.0
        %v3813 = vadd.f32 %v3811, %v3812
        %v3814 = vsel %vm3758, %v3529, 0.0
        %v3815 = vadd.f32 %v3813, %v3814
        %v3816 = vsel %vm3758, %v3530, 0.0
        %v3817 = vadd.f32 %v3815, %v3816
        %v3818 = vsel %vm3758, %v3531, 0.0
        %v3819 = vadd.f32 %v3817, %v3818
        %v3820 = vsel %vm3758, %v3532, 0.0
        %v3821 = vadd.f32 %v3819, %v3820
        %v3822 = vsel %vm3758, %v3533, 0.0
        %v3823 = vadd.f32 %v3821, %v3822
        %v3824 = vsel %vm3758, %v3534, 0.0
        %v3825 = vadd.f32 %v3823, %v3824
        %v3826 = vsel %vm3758, %v3535, 0.0
        %v3827 = vadd.f32 %v3825, %v3826
        %v3828 = vsel %vm3758, %v3536, 0.0
        %v3829 = vadd.f32 %v3827, %v3828
        %v3830 = vsel %vm3758, %v3537, 0.0
        %v3831 = vadd.f32 %v3829, %v3830
        %v3832 = vsel %vm3758, %v3538, 0.0
        %v3833 = vadd.f32 %v3831, %v3832
        %v3834 = vsel %vm3758, %v3539, 0.0
        %v3835 = vadd.f32 %v3833, %v3834
        %v3836 = vsel %vm3758, %v3540, 0.0
        %v3837 = vadd.f32 %v3835, %v3836
        %v3838 = vsel %vm3758, %v3541, 0.0
        %v3839 = vadd.f32 %v3837, %v3838
        %v3840 = vsel %vm3758, %v3542, 0.0
        %v3841 = vadd.f32 %v3839, %v3840
        %v3842 = vsel %vm3758, %v3543, 0.0
        %v3843 = vadd.f32 %v3841, %v3842
        %v3844 = vsel %vm3758, %v3544, 0.0
        %v3845 = vadd.f32 %v3843, %v3844
        %v3846 = vsel %vm3758, %v3545, 0.0
        %v3847 = vadd.f32 %v3845, %v3846
        %v3848 = vsel %vm3758, %v3546, 0.0
        %v3849 = vadd.f32 %v3847, %v3848
        %v3850 = vsel %vm3758, %v3547, 0.0
        %v3851 = vadd.f32 %v3849, %v3850
        %v3852 = vsel %vm3758, %v3548, 0.0
        %v3853 = vadd.f32 %v3851, %v3852
        %v3854 = vsel %vm3758, %v3549, 0.0
        %v3855 = vadd.f32 %v3853, %v3854
        %v3856 = vsel %vm3758, %v3550, 0.0
        %v3857 = vadd.f32 %v3855, %v3856
        %v3858 = vsel %vm3758, %v3551, 0.0
        %v3859 = vadd.f32 %v3857, %v3858
        %v3860 = vsel %vm3758, %v3552, 0.0
        %v3861 = vadd.f32 %v3859, %v3860
        %v3862 = vsel %vm3758, %v3553, 0.0
        %v3863 = vadd.f32 %v3861, %v3862
        %v3864 = vsel %vm3758, %v3554, 0.0
        %v3865 = vadd.f32 %v3863, %v3864
        %v3866 = vsel %vm3758, %v3555, 0.0
        %v3867 = vadd.f32 %v3865, %v3866
        %v3868 = vsel %vm3758, %v3556, 0.0
        %v3869 = vadd.f32 %v3867, %v3868
        %v3870 = vsel %vm3758, %v3557, 0.0
        %v3871 = vadd.f32 %v3869, %v3870
        %v3872 = vsel %vm3758, %v3558, 0.0
        %v3873 = vadd.f32 %v3871, %v3872
        %v3874 = vsel %vm3758, %v3559, 0.0
        %v3875 = vadd.f32 %v3873, %v3874
        %v3876 = vsel %vm3758, %v3560, 0.0
        %v3877 = vadd.f32 %v3875, %v3876
        %v3878 = vsel %vm3758, %v3561, 0.0
        %v3879 = vadd.f32 %v3877, %v3878
        %v3880 = vsel %vm3758, %v3562, 0.0
        %v3881 = vadd.f32 %v3879, %v3880
        %v3882 = vsel %vm3758, %v3563, 0.0
        %v3883 = vadd.f32 %v3881, %v3882
        %v3884 = vsel %vm3758, %v3564, 0.0
        %v3885 = vadd.f32 %v3883, %v3884
        %v3886 = vsel %vm3758, %v3565, 0.0
        %v3887 = vadd.f32 %v3885, %v3886
        %v3888 = vsel %vm3758, %v3566, 0.0
        %v3889 = vadd.f32 %v3887, %v3888
        %v3890 = vsel %vm3758, %v3567, 0.0
        %v3891 = vadd.f32 %v3889, %v3890
        %v3892 = vsel %vm3758, %v3568, 0.0
        %v3893 = vadd.f32 %v3891, %v3892
        %v3894 = vsel %vm3758, %v3569, 0.0
        %v3895 = vadd.f32 %v3893, %v3894
        %v3896 = vsel %vm3758, %v3570, 0.0
        %v3897 = vadd.f32 %v3895, %v3896
        %v3898 = vsel %vm3758, %v3571, 0.0
        %v3899 = vadd.f32 %v3897, %v3898
        %v3900 = vsel %vm3758, %v3572, 0.0
        %v3901 = vadd.f32 %v3899, %v3900
        %v3902 = vsel %vm3758, %v3573, 0.0
        %v3903 = vadd.f32 %v3901, %v3902
        %v3904 = vsel %vm3758, %v3574, 0.0
        %v3905 = vadd.f32 %v3903, %v3904
        %v3906 = vsel %vm3758, %v3575, 0.0
        %v3907 = vadd.f32 %v3905, %v3906
        %v3908 = vsel %vm3758, %v3576, 0.0
        %v3909 = vadd.f32 %v3907, %v3908
        %v3910 = vsel %vm3758, %v3577, 0.0
        %v3911 = vadd.f32 %v3909, %v3910
        %v3912 = vsel %vm3758, %v3578, 0.0
        %v3913 = vadd.f32 %v3911, %v3912
        %v3914 = vsel %vm3758, %v3579, 0.0
        %v3915 = vadd.f32 %v3913, %v3914
        %v3916 = vsel %vm3758, %v3580, 0.0
        %v3917 = vadd.f32 %v3915, %v3916
        %v3918 = vsel %vm3758, %v3581, 0.0
        %v3919 = vadd.f32 %v3917, %v3918
        %v3920 = vsel %vm3758, %v3582, 0.0
        %v3921 = vadd.f32 %v3919, %v3920
        %v3922 = vsel %vm3758, %v3583, 0.0
        %v3923 = vadd.f32 %v3921, %v3922
        %v3924 = vsel %vm3758, %v3584, 0.0
        %v3925 = vadd.f32 %v3923, %v3924
        %v3926 = vsel %vm3758, %v3585, 0.0
        %v3927 = vadd.f32 %v3925, %v3926
        %v3928 = vsel %vm3758, %v3586, 0.0
        %v3929 = vadd.f32 %v3927, %v3928
        %v3930 = vsel %vm3758, %v3587, 0.0
        %v3931 = vadd.f32 %v3929, %v3930
        %v3932 = vsel %vm3758, %v3588, 0.0
        %v3933 = vadd.f32 %v3931, %v3932
        %v3934 = vsel %vm3758, %v3589, 0.0
        %v3935 = vadd.f32 %v3933, %v3934
        %v3936 = vsel %vm3758, %v3590, 0.0
        %v3937 = vadd.f32 %v3935, %v3936
        %v3938 = vsel %vm3758, %v3591, 0.0
        %v3939 = vadd.f32 %v3937, %v3938
        %v3940 = vsel %vm3758, %v3592, 0.0
        %v3941 = vadd.f32 %v3939, %v3940
        %v3942 = vsel %vm3758, %v3593, 0.0
        %v3943 = vadd.f32 %v3941, %v3942
        %v3944 = vsel %vm3758, %v3594, 0.0
        %v3945 = vadd.f32 %v3943, %v3944
        %v3946 = vsel %vm3758, %v3595, 0.0
        %v3947 = vadd.f32 %v3945, %v3946
        %v3948 = vsel %vm3758, %v3596, 0.0
        %v3949 = vadd.f32 %v3947, %v3948
        %v3950 = vsel %vm3758, %v3597, 0.0
        %v3951 = vadd.f32 %v3949, %v3950
        %v3952 = vsel %vm3758, %v3598, 0.0
        %v3953 = vadd.f32 %v3951, %v3952
        %v3954 = vsel %vm3758, %v3599, 0.0
        %v3955 = vadd.f32 %v3953, %v3954
        %v3956 = vsel %vm3758, %v3600, 0.0
        %v3957 = vadd.f32 %v3955, %v3956
        %v3958 = vsel %vm3758, %v3601, 0.0
        %v3959 = vadd.f32 %v3957, %v3958
        %v3960 = vsel %vm3758, %v3602, 0.0
        %v3961 = vadd.f32 %v3959, %v3960
        %v3962 = vsel %vm3758, %v3603, 0.0
        %v3963 = vadd.f32 %v3961, %v3962
        %v3964 = vsel %vm3758, %v3604, 0.0
        %v3965 = vadd.f32 %v3963, %v3964
        %v3966 = vsel %vm3758, %v3605, 0.0
        %v3967 = vadd.f32 %v3965, %v3966
        %v3968 = vsel %vm3758, %v3606, 0.0
        %v3969 = vadd.f32 %v3967, %v3968
        %v3970 = vsel %vm3758, %v3607, 0.0
        %v3971 = vadd.f32 %v3969, %v3970
        %v3972 = vsel %vm3758, %v3608, 0.0
        %v3973 = vadd.f32 %v3971, %v3972
        %v3974 = vsel %vm3758, %v3609, 0.0
        %v3975 = vadd.f32 %v3973, %v3974
        %v3976 = vsel %vm3758, %v3610, 0.0
        %v3977 = vadd.f32 %v3975, %v3976
        %v3978 = vsel %vm3758, %v3611, 0.0
        %v3979 = vadd.f32 %v3977, %v3978
        %v3980 = vsel %vm3758, %v3612, 0.0
        %v3981 = vadd.f32 %v3979, %v3980
        %v3982 = vsel %vm3758, %v3613, 0.0
        %v3983 = vadd.f32 %v3981, %v3982
        %v3984 = vsel %vm3758, %v3614, 0.0
        %v3985 = vadd.f32 %v3983, %v3984
        %v3986 = vsel %vm3758, %v3615, 0.0
        %v3987 = vadd.f32 %v3985, %v3986
        %v3988 = vsel %vm3758, %v3616, 0.0
        %v3989 = vadd.f32 %v3987, %v3988
        %v3990 = vsel %vm3758, %v3617, 0.0
        %v3991 = vadd.f32 %v3989, %v3990
        %v3992 = vsel %vm3758, %v3618, 0.0
        %v3993 = vadd.f32 %v3991, %v3992
        %v3994 = vsel %vm3758, %v3619, 0.0
        %v3995 = vadd.f32 %v3993, %v3994
        %v3996 = vsel %vm3758, %v3620, 0.0
        %v3997 = vadd.f32 %v3995, %v3996
        %v3998 = vsel %vm3758, %v3621, 0.0
        %v3999 = vadd.f32 %v3997, %v3998
        %v4000 = vsel %vm3758, %v3622, 0.0
        %v4001 = vadd.f32 %v3999, %v4000
        %v4002 = vsel %vm3758, %v3623, 0.0
        %v4003 = vadd.f32 %v4001, %v4002
        %v4004 = vsel %vm3758, %v3624, 0.0
        %v4005 = vadd.f32 %v4003, %v4004
        %v4006 = vsel %vm3758, %v3625, 0.0
        %v4007 = vadd.f32 %v4005, %v4006
        %v4008 = vsel %vm3758, %v3626, 0.0
        %v4009 = vadd.f32 %v4007, %v4008
        %v4010 = vsel %vm3758, %v3627, 0.0
        %v4011 = vadd.f32 %v4009, %v4010
        %v4012 = vsel %vm3758, %v3628, 0.0
        %v4013 = vadd.f32 %v4011, %v4012
        %4014 = vadd.xlane.f32.xlu0 %v4013
        %v4015 = vpop.xlane.xlu0 %4014
        %v4016 = vld [vmem:[%s281] sm:$0xff]
        %v4017 = vmul.f32 %v3757, %v1067
        %v4018 = vmul.f32 %v4015, %v1068
        %vm4019 = vcmask 7168
        %v4020 = vsel %vm4019, %v4017, 0.0
        %vm4021 = vcmask 5120
        %v4022 = vsel %vm4021, %v4018, 0.0
        %v4023 = vadd.f32 %v4020, %v4022
        %4024 = vadd.xlane.f32.xlu0 %v4023
        %v4025 = vpop.xlane.xlu0 %4024
        %v4026 = vrot.slane %v4025, 4
        %v4027 = vadd.f32 %v4025, %v4026
        %v4028 = vrot.slane %v4027, 2
        %v4029 = vadd.f32 %v4027, %v4028
        %v4030 = vrot.slane %v4029, 1
        %v4031 = vadd.f32 %v4029, %v4030
        %s4032 = vtos %v4031
        %v4033 = vstv %s4032
        %v4034 = vadd.f32 %v4016, %v4033
        %4035 = vst [vmem:[%s281] sm:$0xff] %v4034
        %s4036 = sand.u32 %s138, 1
        %s4037 = scalar_lea.sflag [#allocation4], %s4036
        %s4038 = sand.u32 %s138, 1
        %s4039 = smul.addr %s4038, 8
        %s4040 = scalar_lea.vmem [#allocation7], %s4039
        // Predicated region
        $region45: #{tpu_custom_call.1} parent=31 // pred_check
          %p4041 = pneg %p148
        $region46: #{tpu_custom_call.1} parent=31 // pred_check_branch
          %4043 = sbr.rel (%p4041) target = $region48
        $region47: #{tpu_custom_call.1} parent=31 // pred_region
          %s4045 = ssub.s32 128, 128
          %4046 = vsyncadd %s4037, %s4045
          %s4047 = smul.addr %s28, 2
          %s4048 = sadd.s32 %s29, %s4047
          %s4049 = smul.addr %s4048, 128
          %s4050 = scalar_lea.hbm %s3, %s4049
          %s4052 = sshll.u32 %s4040, 4
          %s4053 = int_to_ptr.vmem [resolvable:$true] %s4052
          %4055 = dma.vmem_to_hbm [thread:$0]  %s4053, 128, %s4050, %s4037
        $region48: #{tpu_custom_call.1} parent=31 // pred_fallthru
          _
      $region32: #{tpu_custom_call.1} parent=5 // pred_fallthru
        _
      %p4056 = scmp.le.s32.totalorder 2, %s18
      // Predicated region
      $region49: #{tpu_custom_call.1} parent=5 // pred_check
        %p4057 = pneg %p4056
      $region50: #{tpu_custom_call.1} parent=5 // pred_check_branch
        %4059 = sbr.rel (%p4057) target = $region52
      $region51: #{tpu_custom_call.1} parent=5 // pred_region
        %s4060 = ssub.s32 %s18, 2
        // Predicated region
        $region53: #{tpu_custom_call.1} parent=51 // pred_check
          %p4061 = pneg %p154
        $region54: #{tpu_custom_call.1} parent=51 // pred_check_branch
          %4063 = sbr.rel (%p4061) target = $region56
        $region55: #{tpu_custom_call.1} parent=51 // pred_region
          %s4064 = sand.u32 %s139, 1
          %s4065 = scalar_lea.sflag [#allocation4], %s4064
          %s4066 = sand.u32 %s139, 1
          %s4067 = smul.addr %s4066, 8
          %s4068 = scalar_lea.vmem [#allocation7], %s4067
          %4069 = dma.done %s4065, 128
        $region56: #{tpu_custom_call.1} parent=51 // pred_fallthru
          _
      $region52: #{tpu_custom_call.1} parent=5 // pred_fallthru
        _
    $region6: #{tpu_custom_call.1} parent=1 // loop_footer
      %s22 = sadd.s32 1, %s18
    $region7: #{tpu_custom_call.1} parent=1 // loop_footer_branch
      %17 = sbr.rel target = $region3
    $region8: #{tpu_custom_call.1} parent=1 // loop_exit
      _
    %4070 = vsyncpa [#allocation3], 1
    %s4071 = scalar_lea.sflag [#allocation3], 1
    %4072 = vsyncpa %s4071, 1
    %4073 = vsyncpa [#allocation6], 1
    %s4074 = scalar_lea.sflag [#allocation6], 1
    %4075 = vsyncpa %s4074, 1
    %4076 = vsyncpa [#allocation4], 1
    %s4077 = scalar_lea.sflag [#allocation4], 1
    %4078 = vsyncpa %s4077, 1

</llo_original>
